<compile_context>
chip_gen: v5e
topology: v5e:2x2
jax: 0.10.0
libtpu: 0.0.40
codegen_flags: <defaults>
</compile_context>

<pallas_src>
import math

import jax
import jax.numpy as jnp
from jax.experimental import pallas as pl
from jax.experimental.pallas import tpu as pltpu


def _make_dft_mats(H, W):
    """Real/imag parts of the (H,H) DFT and (W, W//2+1) rDFT matrices."""
    Wh = W // 2 + 1
    kh = jnp.arange(H, dtype=jnp.float32)
    th_h = -2.0 * math.pi * jnp.outer(kh, kh) / H            # (H, H), symmetric
    fh_re = jnp.cos(th_h)
    fh_im = jnp.sin(th_h)
    nw = jnp.arange(W, dtype=jnp.float32)
    kw = jnp.arange(Wh, dtype=jnp.float32)
    th_w = -2.0 * math.pi * jnp.outer(nw, kw) / W            # (W, Wh)
    fw_re = jnp.cos(th_w)
    fw_im = jnp.sin(th_w)
    return fh_re, fh_im, fw_re, fw_im


def _pha_loss_kernel(z_ref, fhr_ref, fhi_ref, fwr_ref, fwi_ref, o_ref):
    # z_ref: (2, TN, H, W) — x images in [0], y images in [1].
    two, TN, H, W = z_ref.shape
    Wh = fwr_ref.shape[1]
    M = two * TN                                   # fused x+y image count

    # ---- Stage 1: right-multiply by F_W (one flat matmul, contraction W) ---
    # The reshapes are layout-trivial when H % 8 == 0 (sublane tiles line up);
    # Mosaic inserts copies otherwise.
    # TODO(synk): for H % 8 != 0 a per-image fallback path would avoid relayout.
    z2 = z_ref[...].reshape(M * H, W)
    u1 = jnp.dot(z2, fwr_ref[...], preferred_element_type=jnp.float32)
    u2 = jnp.dot(z2, fwi_ref[...], preferred_element_type=jnp.float32)
    u1 = u1.reshape(M, H, Wh)
    u2 = u2.reshape(M, H, Wh)

    # ---- Stage 2: left-multiply by F_H (batched matmul over the M images) --
    fhr = jnp.broadcast_to(fhr_ref[...], (M, H, H))
    fhi = jnp.broadcast_to(fhi_ref[...], (M, H, H))
    re = (jnp.einsum('nhk,nkw->nhw', fhr, u1, preferred_element_type=jnp.float32)
          - jnp.einsum('nhk,nkw->nhw', fhi, u2, preferred_element_type=jnp.float32))
    im = (jnp.einsum('nhk,nkw->nhw', fhr, u2, preferred_element_type=jnp.float32)
          + jnp.einsum('nhk,nkw->nhw', fhi, u1, preferred_element_type=jnp.float32))

    ang = jnp.arctan2(im, re)                      # (M, H, Wh) phase spectrum
    d = jnp.abs(ang[:TN] - ang[TN:])               # |angle(x) - angle(y)|
    partial = jnp.sum(d)                           # scalar partial L1 sum

    # Lane-dense (8, 128) output block: partial at [0, 0], zeros elsewhere.
    row = jax.lax.broadcasted_iota(jnp.int32, (8, 128), 0)
    col = jax.lax.broadcasted_iota(jnp.int32, (8, 128), 1)
    o_ref[0] = jnp.where((row == 0) & (col == 0), partial, 0.0)


def pha_loss(x, y, *, tile_n=None):
    """x, y: (B, C, H, W) float32.  Returns scalar float32 loss."""
    B, C, H, W = x.shape
    assert y.shape == x.shape
    Wh = W // 2 + 1
    N = B * C

    xf = x.reshape(N, H, W).astype(jnp.float32)
    yf = y.reshape(N, H, W).astype(jnp.float32)

    # Images per grid step: big enough to fill the MXU and amortize per-step
    # overhead, small enough that the broadcast F_H (2*TN, H, H) stays well
    # inside VMEM for large H.
    if tile_n is None:
        budget = 6 * 1024 * 1024                       # bytes for broadcast F_H
        tile_n = max(1, min(32, N, budget // max(1, 2 * H * H * 4)))
    num_tiles = -(-N // tile_n)                        # cdiv
    n_pad = num_tiles * tile_n
    if n_pad != N:
        # Zero-padded images contribute exactly 0 to the phase-L1 sum
        # (arctan2(0, 0) == 0 for both x and y); the mean below uses true N.
        pad = ((0, n_pad - N), (0, 0), (0, 0))
        xf = jnp.pad(xf, pad)
        yf = jnp.pad(yf, pad)

    zf = jnp.stack([xf, yf], axis=0)                   # (2, n_pad, H, W)
    fhr, fhi, fwr, fwi = _make_dft_mats(H, W)

    partials = pl.pallas_call(
        _pha_loss_kernel,
        out_shape=jax.ShapeDtypeStruct((num_tiles, 8, 128), jnp.float32),
        grid_spec=pltpu.PrefetchScalarGridSpec(
            num_scalar_prefetch=0,
            grid=(num_tiles,),
            in_specs=[
                pl.BlockSpec((2, tile_n, H, W), lambda i: (0, i, 0, 0)),  # x|y tile
                pl.BlockSpec((H, H), lambda i: (0, 0)),                   # F_H real
                pl.BlockSpec((H, H), lambda i: (0, 0)),                   # F_H imag
                pl.BlockSpec((W, Wh), lambda i: (0, 0)),                  # F_W real
                pl.BlockSpec((W, Wh), lambda i: (0, 0)),                  # F_W imag
            ],
            out_specs=pl.BlockSpec((1, 8, 128), lambda i: (i, 0, 0)),     # partials
        ),
        compiler_params=pltpu.CompilerParams(
            dimension_semantics=("parallel",)),        # independent per-tile blocks
    )(zf, fhr, fhi, fwr, fwi)

    # torch L1Loss 'mean' over the (B, C, H, Wh) angle tensors.
    inv_count = 1.0 / float(N * H * Wh)
    return jnp.sum(partials) * inv_count


if __name__ == "__main__":
    key = jax.random.PRNGKey(0)
    kx, ky = jax.random.split(key)
    B, C, H, W = 2, 4, 16, 16
    x = jax.random.normal(kx, (B, C, H, W), dtype=jnp.float32)
    y = jax.random.normal(ky, (B, C, H, W), dtype=jnp.float32)

    loss = pha_loss(x, y)
    jax.block_until_ready(loss)
    print("KERNEL_OK")
</pallas_src>

<mosaic_0001>
module attributes {stable_mosaic.version = 11 : i64} {
  func.func @_pha_loss_kernel(%arg0: i32, %arg1: memref<2x8x16x16xf32, #tpu.memory_space<vmem>>, %arg2: memref<16x16xf32, #tpu.memory_space<vmem>>, %arg3: memref<16x16xf32, #tpu.memory_space<vmem>>, %arg4: memref<16x9xf32, #tpu.memory_space<vmem>>, %arg5: memref<16x9xf32, #tpu.memory_space<vmem>>, %arg6: memref<1x8x128xf32, #tpu.memory_space<vmem>>) attributes {dimension_semantics = [#tpu.dimension_semantics<parallel>], iteration_bounds = array<i64: 1>, scalar_prefetch = 0 : i64, scratch_operands = 0 : i64, tpu.core_type = #tpu.core_type<tc>, window_params = [{transform_indices = @transform_0, window_bounds = array<i64: 2, 8, 16, 16>}, {pipeline_mode = #tpu.pipeline_mode<synchronous>, transform_indices = @transform_1, window_bounds = array<i64: 16, 16>}, {pipeline_mode = #tpu.pipeline_mode<synchronous>, transform_indices = @transform_2, window_bounds = array<i64: 16, 16>}, {pipeline_mode = #tpu.pipeline_mode<synchronous>, transform_indices = @transform_3, window_bounds = array<i64: 16, 9>}, {pipeline_mode = #tpu.pipeline_mode<synchronous>, transform_indices = @transform_4, window_bounds = array<i64: 16, 9>}, {transform_indices = @transform_5, window_bounds = array<i64: 1, 8, 128>}]} {
    %c0 = arith.constant 0 : index
    %c0_0 = arith.constant 0 : index
    %c0_1 = arith.constant 0 : index
    %c0_2 = arith.constant 0 : index
    %0 = vector.load %arg1[%c0, %c0_0, %c0_1, %c0_2] : memref<2x8x16x16xf32, #tpu.memory_space<vmem>>, vector<2x8x16x16xf32>
    %1 = vector.shape_cast %0 : vector<2x8x16x16xf32> to vector<256x16xf32>
    %c0_3 = arith.constant 0 : index
    %c0_4 = arith.constant 0 : index
    %2 = vector.load %arg4[%c0_3, %c0_4] : memref<16x9xf32, #tpu.memory_space<vmem>>, vector<16x9xf32>
    %cst = arith.constant dense<0.000000e+00> : vector<256x9xf32>
    %3 = tpu.matmul %1, %2, %cst {dimension_numbers = #tpu.dot_dimension_numbers<[1], [0], [0], [1], [0, 0, 1, 1], [], []>} : vector<256x16xf32>, vector<16x9xf32>, vector<256x9xf32> -> vector<256x9xf32>
    %c0_5 = arith.constant 0 : index
    %c0_6 = arith.constant 0 : index
    %4 = vector.load %arg5[%c0_5, %c0_6] : memref<16x9xf32, #tpu.memory_space<vmem>>, vector<16x9xf32>
    %cst_7 = arith.constant dense<0.000000e+00> : vector<256x9xf32>
    %5 = tpu.matmul %1, %4, %cst_7 {dimension_numbers = #tpu.dot_dimension_numbers<[1], [0], [0], [1], [0, 0, 1, 1], [], []>} : vector<256x16xf32>, vector<16x9xf32>, vector<256x9xf32> -> vector<256x9xf32>
    %6 = vector.shape_cast %3 : vector<256x9xf32> to vector<16x16x9xf32>
    %7 = vector.shape_cast %5 : vector<256x9xf32> to vector<16x16x9xf32>
    %c0_8 = arith.constant 0 : index
    %c0_9 = arith.constant 0 : index
    %8 = vector.load %arg2[%c0_8, %c0_9] : memref<16x16xf32, #tpu.memory_space<vmem>>, vector<16x16xf32>
    %9 = vector.shape_cast %8 : vector<16x16xf32> to vector<1x16x16xf32>
    %10 = vector.broadcast %9 : vector<1x16x16xf32> to vector<16x16x16xf32>
    %c0_10 = arith.constant 0 : index
    %c0_11 = arith.constant 0 : index
    %11 = vector.load %arg3[%c0_10, %c0_11] : memref<16x16xf32, #tpu.memory_space<vmem>>, vector<16x16xf32>
    %12 = vector.shape_cast %11 : vector<16x16xf32> to vector<1x16x16xf32>
    %13 = vector.broadcast %12 : vector<1x16x16xf32> to vector<16x16x16xf32>
    "tpu.trace_start"() <{level = 10 : i32, message = "nhk,nkw->nhw"}> : () -> ()
    %cst_12 = arith.constant dense<0.000000e+00> : vector<16x16x9xf32>
    %14 = tpu.matmul %10, %6, %cst_12 {dimension_numbers = #tpu.dot_dimension_numbers<[2], [1], [1], [2], [0, 0, 0, 1, 1, 2], [0], [0]>} : vector<16x16x16xf32>, vector<16x16x9xf32>, vector<16x16x9xf32> -> vector<16x16x9xf32>
    %cst_13 = arith.constant dense<0.000000e+00> : vector<16x16x9xf32>
    %15 = tpu.matmul %13, %7, %cst_13 {dimension_numbers = #tpu.dot_dimension_numbers<[2], [1], [1], [2], [0, 0, 0, 1, 1, 2], [0], [0]>} : vector<16x16x16xf32>, vector<16x16x9xf32>, vector<16x16x9xf32> -> vector<16x16x9xf32>
    "tpu.trace_stop"() : () -> ()
    %16 = arith.subf %14, %15 : vector<16x16x9xf32>
    "tpu.trace_start"() <{level = 10 : i32, message = "nhk,nkw->nhw"}> : () -> ()
    %cst_14 = arith.constant dense<0.000000e+00> : vector<16x16x9xf32>
    %17 = tpu.matmul %10, %7, %cst_14 {dimension_numbers = #tpu.dot_dimension_numbers<[2], [1], [1], [2], [0, 0, 0, 1, 1, 2], [0], [0]>} : vector<16x16x16xf32>, vector<16x16x9xf32>, vector<16x16x9xf32> -> vector<16x16x9xf32>
    %cst_15 = arith.constant dense<0.000000e+00> : vector<16x16x9xf32>
    %18 = tpu.matmul %13, %6, %cst_15 {dimension_numbers = #tpu.dot_dimension_numbers<[2], [1], [1], [2], [0, 0, 0, 1, 1, 2], [0], [0]>} : vector<16x16x16xf32>, vector<16x16x9xf32>, vector<16x16x9xf32> -> vector<16x16x9xf32>
    "tpu.trace_stop"() : () -> ()
    %19 = arith.addf %17, %18 : vector<16x16x9xf32>
    %20 = math.atan2 %19, %16 : vector<16x16x9xf32>
    %21 = vector.extract_strided_slice %20 {offsets = [0, 0, 0], sizes = [8, 16, 9], strides = [1, 1, 1]} : vector<16x16x9xf32> to vector<8x16x9xf32>
    %22 = vector.extract_strided_slice %20 {offsets = [8, 0, 0], sizes = [8, 16, 9], strides = [1, 1, 1]} : vector<16x16x9xf32> to vector<8x16x9xf32>
    %23 = arith.subf %21, %22 : vector<8x16x9xf32>
    %24 = math.absf %23 : vector<8x16x9xf32>
    %25 = vector.shape_cast %24 : vector<8x16x9xf32> to vector<1x8x16x9xf32>
    %cst_16 = arith.constant dense<0.000000e+00> : vector<1xf32>
    %26 = vector.multi_reduction <add>, %25, %cst_16 [1, 2, 3] : vector<1x8x16x9xf32> to vector<1xf32>
    %27 = vector.shape_cast %26 : vector<1xf32> to vector<1x1x1x1xf32>
    %28 = vector.extract %27[0, 0, 0, 0] : f32 from vector<1x1x1x1xf32>
    %29 = tpu.iota {dimensions = array<i32: 0>} : vector<8x128xi32>
    %30 = tpu.iota {dimensions = array<i32: 1>} : vector<8x128xi32>
    %c0_i32 = arith.constant 0 : i32
    %31 = vector.broadcast %c0_i32 : i32 to vector<8x128xi32>
    %32 = arith.cmpi eq, %29, %31 : vector<8x128xi32>
    %c0_i32_17 = arith.constant 0 : i32
    %33 = vector.broadcast %c0_i32_17 : i32 to vector<8x128xi32>
    %34 = arith.cmpi eq, %30, %33 : vector<8x128xi32>
    %35 = arith.andi %32, %34 : vector<8x128xi1>
    %cst_18 = arith.constant 0.000000e+00 : f32
    %36 = vector.broadcast %28 : f32 to vector<8x128xf32>
    %37 = vector.broadcast %cst_18 : f32 to vector<8x128xf32>
    %38 = arith.select %35, %36, %37 : vector<8x128xi1>, vector<8x128xf32>
    %c0_19 = arith.constant 0 : index
    %c0_20 = arith.constant 0 : index
    %c0_21 = arith.constant 0 : index
    %39 = vector.load %arg6[%c0_19, %c0_20, %c0_21] : memref<1x8x128xf32, #tpu.memory_space<vmem>>, vector<1x8x128xf32>
    %40 = vector.shape_cast %39 : vector<1x8x128xf32> to vector<8x128xf32>
    %41 = vector.shape_cast %38 : vector<8x128xf32> to vector<1x8x128xf32>
    tpu.vector_store %arg6[%c0_19, %c0_20, %c0_21], %41 {strides = array<i32>} : memref<1x8x128xf32, #tpu.memory_space<vmem>>, vector<1x8x128xf32>,
    return
  }
  func.func @transform_0(%arg0: i32) -> (i32, i32, i32, i32) {
    %c0_i32 = arith.constant 0 : i32
    %c0_i32_0 = arith.constant 0 : i32
    %c0_i32_1 = arith.constant 0 : i32
    %c0_i32_2 = arith.constant 0 : i32
    return %c0_i32, %arg0, %c0_i32_0, %c0_i32_1 : i32, i32, i32, i32
  }
  func.func @transform_1(%arg0: i32) -> (i32, i32) {
    %c0_i32 = arith.constant 0 : i32
    %c0_i32_0 = arith.constant 0 : i32
    %c0_i32_1 = arith.constant 0 : i32
    return %c0_i32, %c0_i32_0 : i32, i32
  }
  func.func @transform_2(%arg0: i32) -> (i32, i32) {
    %c0_i32 = arith.constant 0 : i32
    %c0_i32_0 = arith.constant 0 : i32
    %c0_i32_1 = arith.constant 0 : i32
    return %c0_i32, %c0_i32_0 : i32, i32
  }
  func.func @transform_3(%arg0: i32) -> (i32, i32) {
    %c0_i32 = arith.constant 0 : i32
    %c0_i32_0 = arith.constant 0 : i32
    %c0_i32_1 = arith.constant 0 : i32
    return %c0_i32, %c0_i32_0 : i32, i32
  }
  func.func @transform_4(%arg0: i32) -> (i32, i32) {
    %c0_i32 = arith.constant 0 : i32
    %c0_i32_0 = arith.constant 0 : i32
    %c0_i32_1 = arith.constant 0 : i32
    return %c0_i32, %c0_i32_0 : i32, i32
  }
  func.func @transform_5(%arg0: i32) -> (i32, i32, i32) {
    %c0_i32 = arith.constant 0 : i32
    %c0_i32_0 = arith.constant 0 : i32
    %c0_i32_1 = arith.constant 0 : i32
    return %arg0, %c0_i32, %c0_i32_0 : i32, i32, i32
  }
}

</mosaic_0001>

<llo_original>
// kernel: tpu_custom_call.1
$region0: #{tpu_custom_call.1}
  #allocation0 [shape = 'u32[]', space=smem, size = 0x4, offset = 0x4, fixed_abs, tag = 'smem constant byte address 0x4 - core index']
  #allocation1 [shape = 'u32[72,128]{1,0:T(1,128)}', space=vmem, size = 0x9000, scoped, tag = 'internal scratch']
  %s0 = inlined_call_operand.hbm [shape: f32[2,8,16,16], index: 0, kind: input, shape index: {}]
  %s1 = inlined_call_operand.hbm [shape: f32[16,16], index: 1, kind: input, shape index: {}]
  %s2 = inlined_call_operand.hbm [shape: f32[16,16], index: 2, kind: input, shape index: {}]
  %s3 = inlined_call_operand.hbm [shape: f32[16,9], index: 3, kind: input, shape index: {}]
  %s4 = inlined_call_operand.hbm [shape: f32[16,9], index: 4, kind: input, shape index: {}]
  %s5 = inlined_call_operand.hbm [shape: f32[1,8,128], index: 5, kind: output, shape index: {}]
  %s6 = sld [smem:[#allocation0]]
  $region50: #{tpu_custom_call.1} parent=0
    _
  %s8 = ssub.s32 1, %s6
  %s9 = scalar_select 0, %s8, %s6
  $region1: #{tpu_custom_call.1} parent=0
    #allocation2 [shape = 'u8[131072]{0}', space=vmem, size = 0x20000, scoped, tag = 'input window, operand 0, single buffered']
    #allocation3 [shape = 's32[1]{0}', space=sflag, size = 0x4, scoped, tag = 'scoped memory for tpu_custom_call.1']
    #allocation4 [shape = 's32[1]{0}', space=sflag, size = 0x4, scoped, tag = 'scoped memory for tpu_custom_call.1']
    #allocation5 [shape = 'u8[8192]{0}', space=vmem, size = 0x2000, scoped, tag = 'input window, operand 1, single buffered']
    #allocation6 [shape = 's32[1]{0}', space=sflag, size = 0x4, scoped, tag = 'scoped memory for tpu_custom_call.1']
    #allocation7 [shape = 'u8[8192]{0}', space=vmem, size = 0x2000, scoped, tag = 'input window, operand 2, single buffered']
    #allocation8 [shape = 'u8[8192]{0}', space=vmem, size = 0x2000, scoped, tag = 'input window, operand 3, single buffered']
    #allocation9 [shape = 's32[1]{0}', space=sflag, size = 0x4, scoped, tag = 'scoped memory for tpu_custom_call.1']
    #allocation10 [shape = 'u8[8192]{0}', space=vmem, size = 0x2000, scoped, tag = 'input window, operand 4, single buffered']
    #allocation11 [shape = 'u8[4096]{0}', space=vmem, size = 0x1000, scoped, tag = 'output window, operand 0, single buffered']
    %10 = vsyncpa [#allocation3], 0
    %11 = vsyncpa [#allocation6], 0
    %12 = vsyncpa [#allocation9], 0
    %13 = vsyncpa [#allocation4], 0
    // Predicated region
    $region2: #{tpu_custom_call.1} parent=1 // pred_check
      _
    $region3: #{tpu_custom_call.1} parent=1 // pred_check_branch
      %15 = sbr.rel (0) target = $region5
    $region4: #{tpu_custom_call.1} parent=1 // pred_region
      %17 = vsyncadd [#allocation3], 0
      %s18 = sshll.u32 %s0, 4
      %s19 = int_to_ptr.hbm [resolvable:$true] %s18
      %s20 = sshll.u32 [#allocation2], 4
      %s21 = int_to_ptr.vmem [resolvable:$true] %s20
      %26 = dma.hbm_to_vmem [thread:$0]  %s19, 4096, %s21, [#allocation3], 128, 128, 8
    $region5: #{tpu_custom_call.1} parent=1 // pred_fallthru
      _
    // Predicated region
    $region6: #{tpu_custom_call.1} parent=1 // pred_check
      _
    $region7: #{tpu_custom_call.1} parent=1 // pred_check_branch
      %28 = sbr.rel (0) target = $region9
    $region8: #{tpu_custom_call.1} parent=1 // pred_region
      %30 = vsyncadd [#allocation6], 0
      %s31 = sshll.u32 %s1, 4
      %s32 = int_to_ptr.hbm [resolvable:$true] %s31
      %s33 = sshll.u32 [#allocation5], 4
      %s34 = int_to_ptr.vmem [resolvable:$true] %s33
      %39 = dma.hbm_to_vmem [thread:$0]  %s32, 256, %s34, [#allocation6], 128, 128, 8
    $region9: #{tpu_custom_call.1} parent=1 // pred_fallthru
      _
    // Predicated region
    $region10: #{tpu_custom_call.1} parent=1 // pred_check
      _
    $region11: #{tpu_custom_call.1} parent=1 // pred_check_branch
      %41 = sbr.rel (0) target = $region13
    $region12: #{tpu_custom_call.1} parent=1 // pred_region
      %43 = vsyncadd [#allocation6], 0
      %s44 = sshll.u32 %s2, 4
      %s45 = int_to_ptr.hbm [resolvable:$true] %s44
      %s46 = sshll.u32 [#allocation7], 4
      %s47 = int_to_ptr.vmem [resolvable:$true] %s46
      %52 = dma.hbm_to_vmem [thread:$0]  %s45, 256, %s47, [#allocation6], 128, 128, 8
    $region13: #{tpu_custom_call.1} parent=1 // pred_fallthru
      _
    // Predicated region
    $region14: #{tpu_custom_call.1} parent=1 // pred_check
      _
    $region15: #{tpu_custom_call.1} parent=1 // pred_check_branch
      %54 = sbr.rel (0) target = $region17
    $region16: #{tpu_custom_call.1} parent=1 // pred_region
      %56 = vsyncadd [#allocation9], 0
      %s57 = sshll.u32 %s3, 4
      %s58 = int_to_ptr.hbm [resolvable:$true] %s57
      %s59 = sshll.u32 [#allocation8], 4
      %s60 = int_to_ptr.vmem [resolvable:$true] %s59
      %65 = dma.hbm_to_vmem [thread:$0]  %s58, 256, %s60, [#allocation9], 128, 128, 8
    $region17: #{tpu_custom_call.1} parent=1 // pred_fallthru
      _
    // Predicated region
    $region18: #{tpu_custom_call.1} parent=1 // pred_check
      _
    $region19: #{tpu_custom_call.1} parent=1 // pred_check_branch
      %67 = sbr.rel (0) target = $region21
    $region20: #{tpu_custom_call.1} parent=1 // pred_region
      %69 = vsyncadd [#allocation9], 0
      %s70 = sshll.u32 %s4, 4
      %s71 = int_to_ptr.hbm [resolvable:$true] %s70
      %s72 = sshll.u32 [#allocation10], 4
      %s73 = int_to_ptr.vmem [resolvable:$true] %s72
      %78 = dma.hbm_to_vmem [thread:$0]  %s71, 256, %s73, [#allocation9], 128, 128, 8
    $region21: #{tpu_custom_call.1} parent=1 // pred_fallthru
      _
    // Predicated region
    $region22: #{tpu_custom_call.1} parent=1 // pred_check
      _
    $region23: #{tpu_custom_call.1} parent=1 // pred_check_branch
      %80 = sbr.rel (0) target = $region25
    $region24: #{tpu_custom_call.1} parent=1 // pred_region
      %82 = dma.done [#allocation3], 4096
    $region25: #{tpu_custom_call.1} parent=1 // pred_fallthru
      _
    // Predicated region
    $region26: #{tpu_custom_call.1} parent=1 // pred_check
      _
    $region27: #{tpu_custom_call.1} parent=1 // pred_check_branch
      %84 = sbr.rel (0) target = $region29
    $region28: #{tpu_custom_call.1} parent=1 // pred_region
      %86 = dma.done [#allocation6], 256
    $region29: #{tpu_custom_call.1} parent=1 // pred_fallthru
      _
    // Predicated region
    $region30: #{tpu_custom_call.1} parent=1 // pred_check
      _
    $region31: #{tpu_custom_call.1} parent=1 // pred_check_branch
      %88 = sbr.rel (0) target = $region33
    $region32: #{tpu_custom_call.1} parent=1 // pred_region
      %90 = dma.done [#allocation6], 256
    $region33: #{tpu_custom_call.1} parent=1 // pred_fallthru
      _
    // Predicated region
    $region34: #{tpu_custom_call.1} parent=1 // pred_check
      _
    $region35: #{tpu_custom_call.1} parent=1 // pred_check_branch
      %92 = sbr.rel (0) target = $region37
    $region36: #{tpu_custom_call.1} parent=1 // pred_region
      %94 = dma.done [#allocation9], 256
    $region37: #{tpu_custom_call.1} parent=1 // pred_fallthru
      _
    // Predicated region
    $region38: #{tpu_custom_call.1} parent=1 // pred_check
      _
    $region39: #{tpu_custom_call.1} parent=1 // pred_check_branch
      %96 = sbr.rel (0) target = $region41
    $region40: #{tpu_custom_call.1} parent=1 // pred_region
      %98 = dma.done [#allocation9], 256
    $region41: #{tpu_custom_call.1} parent=1 // pred_fallthru
      _
    %v99 = vld [vmem:[#allocation2] sm:$0xff]
    %v100 = vld [vmem:[#allocation2 + $0x8] sm:$0xff]
    %v101 = vld [vmem:[#allocation2 + $0x10] sm:$0xff]
    %v102 = vld [vmem:[#allocation2 + $0x18] sm:$0xff]
    %v103 = vld [vmem:[#allocation2 + $0x20] sm:$0xff]
    %v104 = vld [vmem:[#allocation2 + $0x28] sm:$0xff]
    %v105 = vld [vmem:[#allocation2 + $0x30] sm:$0xff]
    %v106 = vld [vmem:[#allocation2 + $0x38] sm:$0xff]
    %v107 = vld [vmem:[#allocation2 + $0x40] sm:$0xff]
    %v108 = vld [vmem:[#allocation2 + $0x48] sm:$0xff]
    %v109 = vld [vmem:[#allocation2 + $0x50] sm:$0xff]
    %v110 = vld [vmem:[#allocation2 + $0x58] sm:$0xff]
    %v111 = vld [vmem:[#allocation2 + $0x60] sm:$0xff]
    %v112 = vld [vmem:[#allocation2 + $0x68] sm:$0xff]
    %v113 = vld [vmem:[#allocation2 + $0x70] sm:$0xff]
    %v114 = vld [vmem:[#allocation2 + $0x78] sm:$0xff]
    %v115 = vld [vmem:[#allocation2 + $0x80] sm:$0xff]
    %v116 = vld [vmem:[#allocation2 + $0x88] sm:$0xff]
    %v117 = vld [vmem:[#allocation2 + $0x90] sm:$0xff]
    %v118 = vld [vmem:[#allocation2 + $0x98] sm:$0xff]
    %v119 = vld [vmem:[#allocation2 + $0xa0] sm:$0xff]
    %v120 = vld [vmem:[#allocation2 + $0xa8] sm:$0xff]
    %v121 = vld [vmem:[#allocation2 + $0xb0] sm:$0xff]
    %v122 = vld [vmem:[#allocation2 + $0xb8] sm:$0xff]
    %v123 = vld [vmem:[#allocation2 + $0xc0] sm:$0xff]
    %v124 = vld [vmem:[#allocation2 + $0xc8] sm:$0xff]
    %v125 = vld [vmem:[#allocation2 + $0xd0] sm:$0xff]
    %v126 = vld [vmem:[#allocation2 + $0xd8] sm:$0xff]
    %v127 = vld [vmem:[#allocation2 + $0xe0] sm:$0xff]
    %v128 = vld [vmem:[#allocation2 + $0xe8] sm:$0xff]
    %v129 = vld [vmem:[#allocation2 + $0xf0] sm:$0xff]
    %v130 = vld [vmem:[#allocation2 + $0xf8] sm:$0xff]
    %v131 = vld [vmem:[#allocation8] sm:$0xff]
    %v132 = vld [vmem:[#allocation8 + $0x8] sm:$0xff]
    %vm133 = vcmask 130048
    %v135 = vsel %vm133, %v99, 0
    %v138 = vsel %vm133, %v100, 0
    %v141 = vsel %vm133, %v101, 0
    %v144 = vsel %vm133, %v102, 0
    %v147 = vsel %vm133, %v103, 0
    %v150 = vsel %vm133, %v104, 0
    %v153 = vsel %vm133, %v105, 0
    %v156 = vsel %vm133, %v106, 0
    %v159 = vsel %vm133, %v107, 0
    %v162 = vsel %vm133, %v108, 0
    %v165 = vsel %vm133, %v109, 0
    %v168 = vsel %vm133, %v110, 0
    %v171 = vsel %vm133, %v111, 0
    %v174 = vsel %vm133, %v112, 0
    %v177 = vsel %vm133, %v113, 0
    %v180 = vsel %vm133, %v114, 0
    %v183 = vsel %vm133, %v115, 0
    %v186 = vsel %vm133, %v116, 0
    %v189 = vsel %vm133, %v117, 0
    %v192 = vsel %vm133, %v118, 0
    %v195 = vsel %vm133, %v119, 0
    %v198 = vsel %vm133, %v120, 0
    %v201 = vsel %vm133, %v121, 0
    %v204 = vsel %vm133, %v122, 0
    %v207 = vsel %vm133, %v123, 0
    %v210 = vsel %vm133, %v124, 0
    %v213 = vsel %vm133, %v125, 0
    %v216 = vsel %vm133, %v126, 0
    %v219 = vsel %vm133, %v127, 0
    %v222 = vsel %vm133, %v128, 0
    %v225 = vsel %vm133, %v129, 0
    %v228 = vsel %vm133, %v130, 0
    %230 = vmatpush.msra.mxu0 0.0
    %231 = vmatpush.msra.mxu0 0.0
    %232 = vmatpush.msra.mxu0 0.0
    %233 = vmatpush.msra.mxu0 0.0
    %234 = vmatpush.msra.mxu0 0.0
    %235 = vmatpush.msra.mxu0 0.0
    %236 = vmatpush.msra.mxu0 0.0
    %237 = vmatpush.msra.mxu0 0.0
    %238 = vmatpush.msra.mxu0 0.0
    %239 = vmatpush.msra.mxu0 0.0
    %240 = vmatpush.msra.mxu0 0.0
    %241 = vmatpush.msra.mxu0 0.0
    %242 = vmatpush.msra.mxu0 0.0
    %243 = vmatpush.msra.mxu0 0.0
    %244 = vmatpush.msra.mxu0 %v132
    %245 = vmatpush.msra.mxu0 %v131
    %246 = vmatmul.f32.gmra.mxu0 %v135
    %v247 = vpop.f32.mrf.mxu0
    %v248 = vadd.f32 0.0, %v247
    %249 = vmatmul.f32.gmra.mxu0 %v138
    %v250 = vpop.f32.mrf.mxu0
    %v251 = vadd.f32 0.0, %v250
    %252 = vmatmul.f32.gmra.mxu0 %v141
    %v253 = vpop.f32.mrf.mxu0
    %v254 = vadd.f32 0.0, %v253
    %255 = vmatmul.f32.gmra.mxu0 %v144
    %v256 = vpop.f32.mrf.mxu0
    %v257 = vadd.f32 0.0, %v256
    %258 = vmatmul.f32.gmra.mxu0 %v147
    %v259 = vpop.f32.mrf.mxu0
    %v260 = vadd.f32 0.0, %v259
    %261 = vmatmul.f32.gmra.mxu0 %v150
    %v262 = vpop.f32.mrf.mxu0
    %v263 = vadd.f32 0.0, %v262
    %264 = vmatmul.f32.gmra.mxu0 %v153
    %v265 = vpop.f32.mrf.mxu0
    %v266 = vadd.f32 0.0, %v265
    %267 = vmatmul.f32.gmra.mxu0 %v156
    %v268 = vpop.f32.mrf.mxu0
    %v269 = vadd.f32 0.0, %v268
    %270 = vmatmul.f32.gmra.mxu0 %v159
    %v271 = vpop.f32.mrf.mxu0
    %v272 = vadd.f32 0.0, %v271
    %273 = vmatmul.f32.gmra.mxu0 %v162
    %v274 = vpop.f32.mrf.mxu0
    %v275 = vadd.f32 0.0, %v274
    %276 = vmatmul.f32.gmra.mxu0 %v165
    %v277 = vpop.f32.mrf.mxu0
    %v278 = vadd.f32 0.0, %v277
    %279 = vmatmul.f32.gmra.mxu0 %v168
    %v280 = vpop.f32.mrf.mxu0
    %v281 = vadd.f32 0.0, %v280
    %282 = vmatmul.f32.gmra.mxu0 %v171
    %v283 = vpop.f32.mrf.mxu0
    %v284 = vadd.f32 0.0, %v283
    %285 = vmatmul.f32.gmra.mxu0 %v174
    %v286 = vpop.f32.mrf.mxu0
    %v287 = vadd.f32 0.0, %v286
    %288 = vmatmul.f32.gmra.mxu0 %v177
    %v289 = vpop.f32.mrf.mxu0
    %v290 = vadd.f32 0.0, %v289
    %291 = vmatmul.f32.gmra.mxu0 %v180
    %v292 = vpop.f32.mrf.mxu0
    %v293 = vadd.f32 0.0, %v292
    %294 = vmatmul.f32.gmra.mxu0 %v183
    %v295 = vpop.f32.mrf.mxu0
    %v296 = vadd.f32 0.0, %v295
    %297 = vmatmul.f32.gmra.mxu0 %v186
    %v298 = vpop.f32.mrf.mxu0
    %v299 = vadd.f32 0.0, %v298
    %300 = vmatmul.f32.gmra.mxu0 %v189
    %v301 = vpop.f32.mrf.mxu0
    %v302 = vadd.f32 0.0, %v301
    %303 = vmatmul.f32.gmra.mxu0 %v192
    %v304 = vpop.f32.mrf.mxu0
    %v305 = vadd.f32 0.0, %v304
    %306 = vmatmul.f32.gmra.mxu0 %v195
    %v307 = vpop.f32.mrf.mxu0
    %v308 = vadd.f32 0.0, %v307
    %309 = vmatmul.f32.gmra.mxu0 %v198
    %v310 = vpop.f32.mrf.mxu0
    %v311 = vadd.f32 0.0, %v310
    %312 = vmatmul.f32.gmra.mxu0 %v201
    %v313 = vpop.f32.mrf.mxu0
    %v314 = vadd.f32 0.0, %v313
    %315 = vmatmul.f32.gmra.mxu0 %v204
    %v316 = vpop.f32.mrf.mxu0
    %v317 = vadd.f32 0.0, %v316
    %318 = vmatmul.f32.gmra.mxu0 %v207
    %v319 = vpop.f32.mrf.mxu0
    %v320 = vadd.f32 0.0, %v319
    %321 = vmatmul.f32.gmra.mxu0 %v210
    %v322 = vpop.f32.mrf.mxu0
    %v323 = vadd.f32 0.0, %v322
    %324 = vmatmul.f32.gmra.mxu0 %v213
    %v325 = vpop.f32.mrf.mxu0
    %v326 = vadd.f32 0.0, %v325
    %327 = vmatmul.f32.gmra.mxu0 %v216
    %v328 = vpop.f32.mrf.mxu0
    %v329 = vadd.f32 0.0, %v328
    %330 = vmatmul.f32.gmra.mxu0 %v219
    %v331 = vpop.f32.mrf.mxu0
    %v332 = vadd.f32 0.0, %v331
    %333 = vmatmul.f32.gmra.mxu0 %v222
    %v334 = vpop.f32.mrf.mxu0
    %v335 = vadd.f32 0.0, %v334
    %336 = vmatmul.f32.gmra.mxu0 %v225
    %v337 = vpop.f32.mrf.mxu0
    %v338 = vadd.f32 0.0, %v337
    %339 = vmatmul.f32.gmra.mxu0 %v228
    %v340 = vpop.f32.mrf.mxu0
    %v341 = vadd.f32 0.0, %v340
    %342 = vdwg.mxu0
    %v343 = vld [vmem:[#allocation10] sm:$0xff]
    %v344 = vld [vmem:[#allocation10 + $0x8] sm:$0xff]
    %345 = vmatpush.msra.mxu0 0.0
    %346 = vmatpush.msra.mxu0 0.0
    %347 = vmatpush.msra.mxu0 0.0
    %348 = vmatpush.msra.mxu0 0.0
    %349 = vmatpush.msra.mxu0 0.0
    %350 = vmatpush.msra.mxu0 0.0
    %351 = vmatpush.msra.mxu0 0.0
    %352 = vmatpush.msra.mxu0 0.0
    %353 = vmatpush.msra.mxu0 0.0
    %354 = vmatpush.msra.mxu0 0.0
    %355 = vmatpush.msra.mxu0 0.0
    %356 = vmatpush.msra.mxu0 0.0
    %357 = vmatpush.msra.mxu0 0.0
    %358 = vmatpush.msra.mxu0 0.0
    %359 = vmatpush.msra.mxu0 %v344
    %360 = vmatpush.msra.mxu0 %v343
    %361 = vmatmul.f32.gmra.mxu0 %v135
    %v362 = vpop.f32.mrf.mxu0
    %v363 = vadd.f32 0.0, %v362
    %364 = vmatmul.f32.gmra.mxu0 %v138
    %v365 = vpop.f32.mrf.mxu0
    %v366 = vadd.f32 0.0, %v365
    %367 = vmatmul.f32.gmra.mxu0 %v141
    %v368 = vpop.f32.mrf.mxu0
    %v369 = vadd.f32 0.0, %v368
    %370 = vmatmul.f32.gmra.mxu0 %v144
    %v371 = vpop.f32.mrf.mxu0
    %v372 = vadd.f32 0.0, %v371
    %373 = vmatmul.f32.gmra.mxu0 %v147
    %v374 = vpop.f32.mrf.mxu0
    %v375 = vadd.f32 0.0, %v374
    %376 = vmatmul.f32.gmra.mxu0 %v150
    %v377 = vpop.f32.mrf.mxu0
    %v378 = vadd.f32 0.0, %v377
    %379 = vmatmul.f32.gmra.mxu0 %v153
    %v380 = vpop.f32.mrf.mxu0
    %v381 = vadd.f32 0.0, %v380
    %382 = vmatmul.f32.gmra.mxu0 %v156
    %v383 = vpop.f32.mrf.mxu0
    %v384 = vadd.f32 0.0, %v383
    %385 = vmatmul.f32.gmra.mxu0 %v159
    %v386 = vpop.f32.mrf.mxu0
    %v387 = vadd.f32 0.0, %v386
    %388 = vmatmul.f32.gmra.mxu0 %v162
    %v389 = vpop.f32.mrf.mxu0
    %v390 = vadd.f32 0.0, %v389
    %391 = vmatmul.f32.gmra.mxu0 %v165
    %v392 = vpop.f32.mrf.mxu0
    %v393 = vadd.f32 0.0, %v392
    %394 = vmatmul.f32.gmra.mxu0 %v168
    %v395 = vpop.f32.mrf.mxu0
    %v396 = vadd.f32 0.0, %v395
    %397 = vmatmul.f32.gmra.mxu0 %v171
    %v398 = vpop.f32.mrf.mxu0
    %v399 = vadd.f32 0.0, %v398
    %400 = vmatmul.f32.gmra.mxu0 %v174
    %v401 = vpop.f32.mrf.mxu0
    %v402 = vadd.f32 0.0, %v401
    %403 = vmatmul.f32.gmra.mxu0 %v177
    %v404 = vpop.f32.mrf.mxu0
    %v405 = vadd.f32 0.0, %v404
    %406 = vmatmul.f32.gmra.mxu0 %v180
    %v407 = vpop.f32.mrf.mxu0
    %v408 = vadd.f32 0.0, %v407
    %409 = vmatmul.f32.gmra.mxu0 %v183
    %v410 = vpop.f32.mrf.mxu0
    %v411 = vadd.f32 0.0, %v410
    %412 = vmatmul.f32.gmra.mxu0 %v186
    %v413 = vpop.f32.mrf.mxu0
    %v414 = vadd.f32 0.0, %v413
    %415 = vmatmul.f32.gmra.mxu0 %v189
    %v416 = vpop.f32.mrf.mxu0
    %v417 = vadd.f32 0.0, %v416
    %418 = vmatmul.f32.gmra.mxu0 %v192
    %v419 = vpop.f32.mrf.mxu0
    %v420 = vadd.f32 0.0, %v419
    %421 = vmatmul.f32.gmra.mxu0 %v195
    %v422 = vpop.f32.mrf.mxu0
    %v423 = vadd.f32 0.0, %v422
    %424 = vmatmul.f32.gmra.mxu0 %v198
    %v425 = vpop.f32.mrf.mxu0
    %v426 = vadd.f32 0.0, %v425
    %427 = vmatmul.f32.gmra.mxu0 %v201
    %v428 = vpop.f32.mrf.mxu0
    %v429 = vadd.f32 0.0, %v428
    %430 = vmatmul.f32.gmra.mxu0 %v204
    %v431 = vpop.f32.mrf.mxu0
    %v432 = vadd.f32 0.0, %v431
    %433 = vmatmul.f32.gmra.mxu0 %v207
    %v434 = vpop.f32.mrf.mxu0
    %v435 = vadd.f32 0.0, %v434
    %436 = vmatmul.f32.gmra.mxu0 %v210
    %v437 = vpop.f32.mrf.mxu0
    %v438 = vadd.f32 0.0, %v437
    %439 = vmatmul.f32.gmra.mxu0 %v213
    %v440 = vpop.f32.mrf.mxu0
    %v441 = vadd.f32 0.0, %v440
    %442 = vmatmul.f32.gmra.mxu0 %v216
    %v443 = vpop.f32.mrf.mxu0
    %v444 = vadd.f32 0.0, %v443
    %445 = vmatmul.f32.gmra.mxu0 %v219
    %v446 = vpop.f32.mrf.mxu0
    %v447 = vadd.f32 0.0, %v446
    %448 = vmatmul.f32.gmra.mxu0 %v222
    %v449 = vpop.f32.mrf.mxu0
    %v450 = vadd.f32 0.0, %v449
    %451 = vmatmul.f32.gmra.mxu0 %v225
    %v452 = vpop.f32.mrf.mxu0
    %v453 = vadd.f32 0.0, %v452
    %454 = vmatmul.f32.gmra.mxu0 %v228
    %v455 = vpop.f32.mrf.mxu0
    %v456 = vadd.f32 0.0, %v455
    %457 = vdwg.mxu0
    %v458 = vld [vmem:[#allocation5] sm:$0xff]
    %v459 = vld [vmem:[#allocation5 + $0x8] sm:$0xff]
    %v460 = vld [vmem:[#allocation7] sm:$0xff]
    %v461 = vld [vmem:[#allocation7 + $0x8] sm:$0xff]
    %v463 = vsel %vm133, %v458, 0
    %v466 = vsel %vm133, %v459, 0
    %468 = vmatpush.msra.mxu0 0.0
    %469 = vmatpush.msra.mxu0 0.0
    %470 = vmatpush.msra.mxu0 0.0
    %471 = vmatpush.msra.mxu0 0.0
    %472 = vmatpush.msra.mxu0 0.0
    %473 = vmatpush.msra.mxu0 0.0
    %474 = vmatpush.msra.mxu0 0.0
    %475 = vmatpush.msra.mxu0 0.0
    %476 = vmatpush.msra.mxu0 0.0
    %477 = vmatpush.msra.mxu0 0.0
    %478 = vmatpush.msra.mxu0 0.0
    %479 = vmatpush.msra.mxu0 0.0
    %480 = vmatpush.msra.mxu0 0.0
    %481 = vmatpush.msra.mxu0 0.0
    %482 = vmatpush.msra.mxu0 %v251
    %483 = vmatpush.msra.mxu0 %v248
    %484 = vmatmul.f32.gmra.mxu0 %v463
    %v485 = vpop.f32.mrf.mxu0
    %v486 = vadd.f32 0.0, %v485
    %487 = vmatmul.f32.gmra.mxu0 %v466
    %v488 = vpop.f32.mrf.mxu0
    %v489 = vadd.f32 0.0, %v488
    %490 = vdwg.mxu0
    %491 = vmatpush.msra.mxu0 0.0
    %492 = vmatpush.msra.mxu0 0.0
    %493 = vmatpush.msra.mxu0 0.0
    %494 = vmatpush.msra.mxu0 0.0
    %495 = vmatpush.msra.mxu0 0.0
    %496 = vmatpush.msra.mxu0 0.0
    %497 = vmatpush.msra.mxu0 0.0
    %498 = vmatpush.msra.mxu0 0.0
    %499 = vmatpush.msra.mxu0 0.0
    %500 = vmatpush.msra.mxu0 0.0
    %501 = vmatpush.msra.mxu0 0.0
    %502 = vmatpush.msra.mxu0 0.0
    %503 = vmatpush.msra.mxu0 0.0
    %504 = vmatpush.msra.mxu0 0.0
    %505 = vmatpush.msra.mxu0 %v257
    %506 = vmatpush.msra.mxu0 %v254
    %507 = vmatmul.f32.gmra.mxu0 %v463
    %v508 = vpop.f32.mrf.mxu0
    %v509 = vadd.f32 0.0, %v508
    %510 = vmatmul.f32.gmra.mxu0 %v466
    %v511 = vpop.f32.mrf.mxu0
    %v512 = vadd.f32 0.0, %v511
    %513 = vdwg.mxu0
    %514 = vmatpush.msra.mxu0 0.0
    %515 = vmatpush.msra.mxu0 0.0
    %516 = vmatpush.msra.mxu0 0.0
    %517 = vmatpush.msra.mxu0 0.0
    %518 = vmatpush.msra.mxu0 0.0
    %519 = vmatpush.msra.mxu0 0.0
    %520 = vmatpush.msra.mxu0 0.0
    %521 = vmatpush.msra.mxu0 0.0
    %522 = vmatpush.msra.mxu0 0.0
    %523 = vmatpush.msra.mxu0 0.0
    %524 = vmatpush.msra.mxu0 0.0
    %525 = vmatpush.msra.mxu0 0.0
    %526 = vmatpush.msra.mxu0 0.0
    %527 = vmatpush.msra.mxu0 0.0
    %528 = vmatpush.msra.mxu0 %v263
    %529 = vmatpush.msra.mxu0 %v260
    %530 = vmatmul.f32.gmra.mxu0 %v463
    %v531 = vpop.f32.mrf.mxu0
    %v532 = vadd.f32 0.0, %v531
    %533 = vmatmul.f32.gmra.mxu0 %v466
    %v534 = vpop.f32.mrf.mxu0
    %v535 = vadd.f32 0.0, %v534
    %536 = vdwg.mxu0
    %537 = vmatpush.msra.mxu0 0.0
    %538 = vmatpush.msra.mxu0 0.0
    %539 = vmatpush.msra.mxu0 0.0
    %540 = vmatpush.msra.mxu0 0.0
    %541 = vmatpush.msra.mxu0 0.0
    %542 = vmatpush.msra.mxu0 0.0
    %543 = vmatpush.msra.mxu0 0.0
    %544 = vmatpush.msra.mxu0 0.0
    %545 = vmatpush.msra.mxu0 0.0
    %546 = vmatpush.msra.mxu0 0.0
    %547 = vmatpush.msra.mxu0 0.0
    %548 = vmatpush.msra.mxu0 0.0
    %549 = vmatpush.msra.mxu0 0.0
    %550 = vmatpush.msra.mxu0 0.0
    %551 = vmatpush.msra.mxu0 %v269
    %552 = vmatpush.msra.mxu0 %v266
    %553 = vmatmul.f32.gmra.mxu0 %v463
    %v554 = vpop.f32.mrf.mxu0
    %v555 = vadd.f32 0.0, %v554
    %556 = vmatmul.f32.gmra.mxu0 %v466
    %v557 = vpop.f32.mrf.mxu0
    %v558 = vadd.f32 0.0, %v557
    %559 = vdwg.mxu0
    %560 = vmatpush.msra.mxu0 0.0
    %561 = vmatpush.msra.mxu0 0.0
    %562 = vmatpush.msra.mxu0 0.0
    %563 = vmatpush.msra.mxu0 0.0
    %564 = vmatpush.msra.mxu0 0.0
    %565 = vmatpush.msra.mxu0 0.0
    %566 = vmatpush.msra.mxu0 0.0
    %567 = vmatpush.msra.mxu0 0.0
    %568 = vmatpush.msra.mxu0 0.0
    %569 = vmatpush.msra.mxu0 0.0
    %570 = vmatpush.msra.mxu0 0.0
    %571 = vmatpush.msra.mxu0 0.0
    %572 = vmatpush.msra.mxu0 0.0
    %573 = vmatpush.msra.mxu0 0.0
    %574 = vmatpush.msra.mxu0 %v275
    %575 = vmatpush.msra.mxu0 %v272
    %576 = vmatmul.f32.gmra.mxu0 %v463
    %v577 = vpop.f32.mrf.mxu0
    %v578 = vadd.f32 0.0, %v577
    %579 = vmatmul.f32.gmra.mxu0 %v466
    %v580 = vpop.f32.mrf.mxu0
    %v581 = vadd.f32 0.0, %v580
    %582 = vdwg.mxu0
    %583 = vmatpush.msra.mxu0 0.0
    %584 = vmatpush.msra.mxu0 0.0
    %585 = vmatpush.msra.mxu0 0.0
    %586 = vmatpush.msra.mxu0 0.0
    %587 = vmatpush.msra.mxu0 0.0
    %588 = vmatpush.msra.mxu0 0.0
    %589 = vmatpush.msra.mxu0 0.0
    %590 = vmatpush.msra.mxu0 0.0
    %591 = vmatpush.msra.mxu0 0.0
    %592 = vmatpush.msra.mxu0 0.0
    %593 = vmatpush.msra.mxu0 0.0
    %594 = vmatpush.msra.mxu0 0.0
    %595 = vmatpush.msra.mxu0 0.0
    %596 = vmatpush.msra.mxu0 0.0
    %597 = vmatpush.msra.mxu0 %v281
    %598 = vmatpush.msra.mxu0 %v278
    %599 = vmatmul.f32.gmra.mxu0 %v463
    %v600 = vpop.f32.mrf.mxu0
    %v601 = vadd.f32 0.0, %v600
    %602 = vmatmul.f32.gmra.mxu0 %v466
    %v603 = vpop.f32.mrf.mxu0
    %v604 = vadd.f32 0.0, %v603
    %605 = vdwg.mxu0
    %606 = vmatpush.msra.mxu0 0.0
    %607 = vmatpush.msra.mxu0 0.0
    %608 = vmatpush.msra.mxu0 0.0
    %609 = vmatpush.msra.mxu0 0.0
    %610 = vmatpush.msra.mxu0 0.0
    %611 = vmatpush.msra.mxu0 0.0
    %612 = vmatpush.msra.mxu0 0.0
    %613 = vmatpush.msra.mxu0 0.0
    %614 = vmatpush.msra.mxu0 0.0
    %615 = vmatpush.msra.mxu0 0.0
    %616 = vmatpush.msra.mxu0 0.0
    %617 = vmatpush.msra.mxu0 0.0
    %618 = vmatpush.msra.mxu0 0.0
    %619 = vmatpush.msra.mxu0 0.0
    %620 = vmatpush.msra.mxu0 %v287
    %621 = vmatpush.msra.mxu0 %v284
    %622 = vmatmul.f32.gmra.mxu0 %v463
    %v623 = vpop.f32.mrf.mxu0
    %v624 = vadd.f32 0.0, %v623
    %625 = vmatmul.f32.gmra.mxu0 %v466
    %v626 = vpop.f32.mrf.mxu0
    %v627 = vadd.f32 0.0, %v626
    %628 = vdwg.mxu0
    %629 = vmatpush.msra.mxu0 0.0
    %630 = vmatpush.msra.mxu0 0.0
    %631 = vmatpush.msra.mxu0 0.0
    %632 = vmatpush.msra.mxu0 0.0
    %633 = vmatpush.msra.mxu0 0.0
    %634 = vmatpush.msra.mxu0 0.0
    %635 = vmatpush.msra.mxu0 0.0
    %636 = vmatpush.msra.mxu0 0.0
    %637 = vmatpush.msra.mxu0 0.0
    %638 = vmatpush.msra.mxu0 0.0
    %639 = vmatpush.msra.mxu0 0.0
    %640 = vmatpush.msra.mxu0 0.0
    %641 = vmatpush.msra.mxu0 0.0
    %642 = vmatpush.msra.mxu0 0.0
    %643 = vmatpush.msra.mxu0 %v293
    %644 = vmatpush.msra.mxu0 %v290
    %645 = vmatmul.f32.gmra.mxu0 %v463
    %v646 = vpop.f32.mrf.mxu0
    %v647 = vadd.f32 0.0, %v646
    %648 = vmatmul.f32.gmra.mxu0 %v466
    %v649 = vpop.f32.mrf.mxu0
    %v650 = vadd.f32 0.0, %v649
    %651 = vdwg.mxu0
    %652 = vmatpush.msra.mxu0 0.0
    %653 = vmatpush.msra.mxu0 0.0
    %654 = vmatpush.msra.mxu0 0.0
    %655 = vmatpush.msra.mxu0 0.0
    %656 = vmatpush.msra.mxu0 0.0
    %657 = vmatpush.msra.mxu0 0.0
    %658 = vmatpush.msra.mxu0 0.0
    %659 = vmatpush.msra.mxu0 0.0
    %660 = vmatpush.msra.mxu0 0.0
    %661 = vmatpush.msra.mxu0 0.0
    %662 = vmatpush.msra.mxu0 0.0
    %663 = vmatpush.msra.mxu0 0.0
    %664 = vmatpush.msra.mxu0 0.0
    %665 = vmatpush.msra.mxu0 0.0
    %666 = vmatpush.msra.mxu0 %v299
    %667 = vmatpush.msra.mxu0 %v296
    %668 = vmatmul.f32.gmra.mxu0 %v463
    %v669 = vpop.f32.mrf.mxu0
    %v670 = vadd.f32 0.0, %v669
    %671 = vmatmul.f32.gmra.mxu0 %v466
    %v672 = vpop.f32.mrf.mxu0
    %v673 = vadd.f32 0.0, %v672
    %674 = vdwg.mxu0
    %675 = vmatpush.msra.mxu0 0.0
    %676 = vmatpush.msra.mxu0 0.0
    %677 = vmatpush.msra.mxu0 0.0
    %678 = vmatpush.msra.mxu0 0.0
    %679 = vmatpush.msra.mxu0 0.0
    %680 = vmatpush.msra.mxu0 0.0
    %681 = vmatpush.msra.mxu0 0.0
    %682 = vmatpush.msra.mxu0 0.0
    %683 = vmatpush.msra.mxu0 0.0
    %684 = vmatpush.msra.mxu0 0.0
    %685 = vmatpush.msra.mxu0 0.0
    %686 = vmatpush.msra.mxu0 0.0
    %687 = vmatpush.msra.mxu0 0.0
    %688 = vmatpush.msra.mxu0 0.0
    %689 = vmatpush.msra.mxu0 %v305
    %690 = vmatpush.msra.mxu0 %v302
    %691 = vmatmul.f32.gmra.mxu0 %v463
    %v692 = vpop.f32.mrf.mxu0
    %v693 = vadd.f32 0.0, %v692
    %694 = vmatmul.f32.gmra.mxu0 %v466
    %v695 = vpop.f32.mrf.mxu0
    %v696 = vadd.f32 0.0, %v695
    %697 = vdwg.mxu0
    %698 = vmatpush.msra.mxu0 0.0
    %699 = vmatpush.msra.mxu0 0.0
    %700 = vmatpush.msra.mxu0 0.0
    %701 = vmatpush.msra.mxu0 0.0
    %702 = vmatpush.msra.mxu0 0.0
    %703 = vmatpush.msra.mxu0 0.0
    %704 = vmatpush.msra.mxu0 0.0
    %705 = vmatpush.msra.mxu0 0.0
    %706 = vmatpush.msra.mxu0 0.0
    %707 = vmatpush.msra.mxu0 0.0
    %708 = vmatpush.msra.mxu0 0.0
    %709 = vmatpush.msra.mxu0 0.0
    %710 = vmatpush.msra.mxu0 0.0
    %711 = vmatpush.msra.mxu0 0.0
    %712 = vmatpush.msra.mxu0 %v311
    %713 = vmatpush.msra.mxu0 %v308
    %714 = vmatmul.f32.gmra.mxu0 %v463
    %v715 = vpop.f32.mrf.mxu0
    %v716 = vadd.f32 0.0, %v715
    %717 = vmatmul.f32.gmra.mxu0 %v466
    %v718 = vpop.f32.mrf.mxu0
    %v719 = vadd.f32 0.0, %v718
    %720 = vdwg.mxu0
    %721 = vmatpush.msra.mxu0 0.0
    %722 = vmatpush.msra.mxu0 0.0
    %723 = vmatpush.msra.mxu0 0.0
    %724 = vmatpush.msra.mxu0 0.0
    %725 = vmatpush.msra.mxu0 0.0
    %726 = vmatpush.msra.mxu0 0.0
    %727 = vmatpush.msra.mxu0 0.0
    %728 = vmatpush.msra.mxu0 0.0
    %729 = vmatpush.msra.mxu0 0.0
    %730 = vmatpush.msra.mxu0 0.0
    %731 = vmatpush.msra.mxu0 0.0
    %732 = vmatpush.msra.mxu0 0.0
    %733 = vmatpush.msra.mxu0 0.0
    %734 = vmatpush.msra.mxu0 0.0
    %735 = vmatpush.msra.mxu0 %v317
    %736 = vmatpush.msra.mxu0 %v314
    %737 = vmatmul.f32.gmra.mxu0 %v463
    %v738 = vpop.f32.mrf.mxu0
    %v739 = vadd.f32 0.0, %v738
    %740 = vmatmul.f32.gmra.mxu0 %v466
    %v741 = vpop.f32.mrf.mxu0
    %v742 = vadd.f32 0.0, %v741
    %743 = vdwg.mxu0
    %744 = vmatpush.msra.mxu0 0.0
    %745 = vmatpush.msra.mxu0 0.0
    %746 = vmatpush.msra.mxu0 0.0
    %747 = vmatpush.msra.mxu0 0.0
    %748 = vmatpush.msra.mxu0 0.0
    %749 = vmatpush.msra.mxu0 0.0
    %750 = vmatpush.msra.mxu0 0.0
    %751 = vmatpush.msra.mxu0 0.0
    %752 = vmatpush.msra.mxu0 0.0
    %753 = vmatpush.msra.mxu0 0.0
    %754 = vmatpush.msra.mxu0 0.0
    %755 = vmatpush.msra.mxu0 0.0
    %756 = vmatpush.msra.mxu0 0.0
    %757 = vmatpush.msra.mxu0 0.0
    %758 = vmatpush.msra.mxu0 %v323
    %759 = vmatpush.msra.mxu0 %v320
    %760 = vmatmul.f32.gmra.mxu0 %v463
    %v761 = vpop.f32.mrf.mxu0
    %v762 = vadd.f32 0.0, %v761
    %763 = vmatmul.f32.gmra.mxu0 %v466
    %v764 = vpop.f32.mrf.mxu0
    %v765 = vadd.f32 0.0, %v764
    %766 = vdwg.mxu0
    %767 = vmatpush.msra.mxu0 0.0
    %768 = vmatpush.msra.mxu0 0.0
    %769 = vmatpush.msra.mxu0 0.0
    %770 = vmatpush.msra.mxu0 0.0
    %771 = vmatpush.msra.mxu0 0.0
    %772 = vmatpush.msra.mxu0 0.0
    %773 = vmatpush.msra.mxu0 0.0
    %774 = vmatpush.msra.mxu0 0.0
    %775 = vmatpush.msra.mxu0 0.0
    %776 = vmatpush.msra.mxu0 0.0
    %777 = vmatpush.msra.mxu0 0.0
    %778 = vmatpush.msra.mxu0 0.0
    %779 = vmatpush.msra.mxu0 0.0
    %780 = vmatpush.msra.mxu0 0.0
    %781 = vmatpush.msra.mxu0 %v329
    %782 = vmatpush.msra.mxu0 %v326
    %783 = vmatmul.f32.gmra.mxu0 %v463
    %v784 = vpop.f32.mrf.mxu0
    %v785 = vadd.f32 0.0, %v784
    %786 = vmatmul.f32.gmra.mxu0 %v466
    %v787 = vpop.f32.mrf.mxu0
    %v788 = vadd.f32 0.0, %v787
    %789 = vdwg.mxu0
    %790 = vmatpush.msra.mxu0 0.0
    %791 = vmatpush.msra.mxu0 0.0
    %792 = vmatpush.msra.mxu0 0.0
    %793 = vmatpush.msra.mxu0 0.0
    %794 = vmatpush.msra.mxu0 0.0
    %795 = vmatpush.msra.mxu0 0.0
    %796 = vmatpush.msra.mxu0 0.0
    %797 = vmatpush.msra.mxu0 0.0
    %798 = vmatpush.msra.mxu0 0.0
    %799 = vmatpush.msra.mxu0 0.0
    %800 = vmatpush.msra.mxu0 0.0
    %801 = vmatpush.msra.mxu0 0.0
    %802 = vmatpush.msra.mxu0 0.0
    %803 = vmatpush.msra.mxu0 0.0
    %804 = vmatpush.msra.mxu0 %v335
    %805 = vmatpush.msra.mxu0 %v332
    %806 = vmatmul.f32.gmra.mxu0 %v463
    %v807 = vpop.f32.mrf.mxu0
    %v808 = vadd.f32 0.0, %v807
    %809 = vmatmul.f32.gmra.mxu0 %v466
    %v810 = vpop.f32.mrf.mxu0
    %v811 = vadd.f32 0.0, %v810
    %812 = vdwg.mxu0
    %813 = vmatpush.msra.mxu0 0.0
    %814 = vmatpush.msra.mxu0 0.0
    %815 = vmatpush.msra.mxu0 0.0
    %816 = vmatpush.msra.mxu0 0.0
    %817 = vmatpush.msra.mxu0 0.0
    %818 = vmatpush.msra.mxu0 0.0
    %819 = vmatpush.msra.mxu0 0.0
    %820 = vmatpush.msra.mxu0 0.0
    %821 = vmatpush.msra.mxu0 0.0
    %822 = vmatpush.msra.mxu0 0.0
    %823 = vmatpush.msra.mxu0 0.0
    %824 = vmatpush.msra.mxu0 0.0
    %825 = vmatpush.msra.mxu0 0.0
    %826 = vmatpush.msra.mxu0 0.0
    %827 = vmatpush.msra.mxu0 %v341
    %828 = vmatpush.msra.mxu0 %v338
    %829 = vmatmul.f32.gmra.mxu0 %v463
    %v830 = vpop.f32.mrf.mxu0
    %v831 = vadd.f32 0.0, %v830
    %832 = vmatmul.f32.gmra.mxu0 %v466
    %v833 = vpop.f32.mrf.mxu0
    %v834 = vadd.f32 0.0, %v833
    %835 = vdwg.mxu0
    %v837 = vsel %vm133, %v460, 0
    %v840 = vsel %vm133, %v461, 0
    %842 = vmatpush.msra.mxu0 0.0
    %843 = vmatpush.msra.mxu0 0.0
    %844 = vmatpush.msra.mxu0 0.0
    %845 = vmatpush.msra.mxu0 0.0
    %846 = vmatpush.msra.mxu0 0.0
    %847 = vmatpush.msra.mxu0 0.0
    %848 = vmatpush.msra.mxu0 0.0
    %849 = vmatpush.msra.mxu0 0.0
    %850 = vmatpush.msra.mxu0 0.0
    %851 = vmatpush.msra.mxu0 0.0
    %852 = vmatpush.msra.mxu0 0.0
    %853 = vmatpush.msra.mxu0 0.0
    %854 = vmatpush.msra.mxu0 0.0
    %855 = vmatpush.msra.mxu0 0.0
    %856 = vmatpush.msra.mxu0 %v366
    %857 = vmatpush.msra.mxu0 %v363
    %858 = vmatmul.f32.gmra.mxu0 %v837
    %v859 = vpop.f32.mrf.mxu0
    %v860 = vadd.f32 0.0, %v859
    %861 = vmatmul.f32.gmra.mxu0 %v840
    %v862 = vpop.f32.mrf.mxu0
    %v863 = vadd.f32 0.0, %v862
    %864 = vdwg.mxu0
    %865 = vmatpush.msra.mxu0 0.0
    %866 = vmatpush.msra.mxu0 0.0
    %867 = vmatpush.msra.mxu0 0.0
    %868 = vmatpush.msra.mxu0 0.0
    %869 = vmatpush.msra.mxu0 0.0
    %870 = vmatpush.msra.mxu0 0.0
    %871 = vmatpush.msra.mxu0 0.0
    %872 = vmatpush.msra.mxu0 0.0
    %873 = vmatpush.msra.mxu0 0.0
    %874 = vmatpush.msra.mxu0 0.0
    %875 = vmatpush.msra.mxu0 0.0
    %876 = vmatpush.msra.mxu0 0.0
    %877 = vmatpush.msra.mxu0 0.0
    %878 = vmatpush.msra.mxu0 0.0
    %879 = vmatpush.msra.mxu0 %v372
    %880 = vmatpush.msra.mxu0 %v369
    %881 = vmatmul.f32.gmra.mxu0 %v837
    %v882 = vpop.f32.mrf.mxu0
    %v883 = vadd.f32 0.0, %v882
    %884 = vmatmul.f32.gmra.mxu0 %v840
    %v885 = vpop.f32.mrf.mxu0
    %v886 = vadd.f32 0.0, %v885
    %887 = vdwg.mxu0
    %888 = vmatpush.msra.mxu0 0.0
    %889 = vmatpush.msra.mxu0 0.0
    %890 = vmatpush.msra.mxu0 0.0
    %891 = vmatpush.msra.mxu0 0.0
    %892 = vmatpush.msra.mxu0 0.0
    %893 = vmatpush.msra.mxu0 0.0
    %894 = vmatpush.msra.mxu0 0.0
    %895 = vmatpush.msra.mxu0 0.0
    %896 = vmatpush.msra.mxu0 0.0
    %897 = vmatpush.msra.mxu0 0.0
    %898 = vmatpush.msra.mxu0 0.0
    %899 = vmatpush.msra.mxu0 0.0
    %900 = vmatpush.msra.mxu0 0.0
    %901 = vmatpush.msra.mxu0 0.0
    %902 = vmatpush.msra.mxu0 %v378
    %903 = vmatpush.msra.mxu0 %v375
    %904 = vmatmul.f32.gmra.mxu0 %v837
    %v905 = vpop.f32.mrf.mxu0
    %v906 = vadd.f32 0.0, %v905
    %907 = vmatmul.f32.gmra.mxu0 %v840
    %v908 = vpop.f32.mrf.mxu0
    %v909 = vadd.f32 0.0, %v908
    %910 = vdwg.mxu0
    %911 = vmatpush.msra.mxu0 0.0
    %912 = vmatpush.msra.mxu0 0.0
    %913 = vmatpush.msra.mxu0 0.0
    %914 = vmatpush.msra.mxu0 0.0
    %915 = vmatpush.msra.mxu0 0.0
    %916 = vmatpush.msra.mxu0 0.0
    %917 = vmatpush.msra.mxu0 0.0
    %918 = vmatpush.msra.mxu0 0.0
    %919 = vmatpush.msra.mxu0 0.0
    %920 = vmatpush.msra.mxu0 0.0
    %921 = vmatpush.msra.mxu0 0.0
    %922 = vmatpush.msra.mxu0 0.0
    %923 = vmatpush.msra.mxu0 0.0
    %924 = vmatpush.msra.mxu0 0.0
    %925 = vmatpush.msra.mxu0 %v384
    %926 = vmatpush.msra.mxu0 %v381
    %927 = vmatmul.f32.gmra.mxu0 %v837
    %v928 = vpop.f32.mrf.mxu0
    %v929 = vadd.f32 0.0, %v928
    %930 = vmatmul.f32.gmra.mxu0 %v840
    %v931 = vpop.f32.mrf.mxu0
    %v932 = vadd.f32 0.0, %v931
    %933 = vdwg.mxu0
    %934 = vmatpush.msra.mxu0 0.0
    %935 = vmatpush.msra.mxu0 0.0
    %936 = vmatpush.msra.mxu0 0.0
    %937 = vmatpush.msra.mxu0 0.0
    %938 = vmatpush.msra.mxu0 0.0
    %939 = vmatpush.msra.mxu0 0.0
    %940 = vmatpush.msra.mxu0 0.0
    %941 = vmatpush.msra.mxu0 0.0
    %942 = vmatpush.msra.mxu0 0.0
    %943 = vmatpush.msra.mxu0 0.0
    %944 = vmatpush.msra.mxu0 0.0
    %945 = vmatpush.msra.mxu0 0.0
    %946 = vmatpush.msra.mxu0 0.0
    %947 = vmatpush.msra.mxu0 0.0
    %948 = vmatpush.msra.mxu0 %v390
    %949 = vmatpush.msra.mxu0 %v387
    %950 = vmatmul.f32.gmra.mxu0 %v837
    %v951 = vpop.f32.mrf.mxu0
    %v952 = vadd.f32 0.0, %v951
    %953 = vmatmul.f32.gmra.mxu0 %v840
    %v954 = vpop.f32.mrf.mxu0
    %v955 = vadd.f32 0.0, %v954
    %956 = vdwg.mxu0
    %957 = vmatpush.msra.mxu0 0.0
    %958 = vmatpush.msra.mxu0 0.0
    %959 = vmatpush.msra.mxu0 0.0
    %960 = vmatpush.msra.mxu0 0.0
    %961 = vmatpush.msra.mxu0 0.0
    %962 = vmatpush.msra.mxu0 0.0
    %963 = vmatpush.msra.mxu0 0.0
    %964 = vmatpush.msra.mxu0 0.0
    %965 = vmatpush.msra.mxu0 0.0
    %966 = vmatpush.msra.mxu0 0.0
    %967 = vmatpush.msra.mxu0 0.0
    %968 = vmatpush.msra.mxu0 0.0
    %969 = vmatpush.msra.mxu0 0.0
    %970 = vmatpush.msra.mxu0 0.0
    %971 = vmatpush.msra.mxu0 %v396
    %972 = vmatpush.msra.mxu0 %v393
    %973 = vmatmul.f32.gmra.mxu0 %v837
    %v974 = vpop.f32.mrf.mxu0
    %v975 = vadd.f32 0.0, %v974
    %976 = vmatmul.f32.gmra.mxu0 %v840
    %v977 = vpop.f32.mrf.mxu0
    %v978 = vadd.f32 0.0, %v977
    %979 = vdwg.mxu0
    %980 = vmatpush.msra.mxu0 0.0
    %981 = vmatpush.msra.mxu0 0.0
    %982 = vmatpush.msra.mxu0 0.0
    %983 = vmatpush.msra.mxu0 0.0
    %984 = vmatpush.msra.mxu0 0.0
    %985 = vmatpush.msra.mxu0 0.0
    %986 = vmatpush.msra.mxu0 0.0
    %987 = vmatpush.msra.mxu0 0.0
    %988 = vmatpush.msra.mxu0 0.0
    %989 = vmatpush.msra.mxu0 0.0
    %990 = vmatpush.msra.mxu0 0.0
    %991 = vmatpush.msra.mxu0 0.0
    %992 = vmatpush.msra.mxu0 0.0
    %993 = vmatpush.msra.mxu0 0.0
    %994 = vmatpush.msra.mxu0 %v402
    %995 = vmatpush.msra.mxu0 %v399
    %996 = vmatmul.f32.gmra.mxu0 %v837
    %v997 = vpop.f32.mrf.mxu0
    %v998 = vadd.f32 0.0, %v997
    %999 = vmatmul.f32.gmra.mxu0 %v840
    %v1000 = vpop.f32.mrf.mxu0
    %v1001 = vadd.f32 0.0, %v1000
    %1002 = vdwg.mxu0
    %1003 = vmatpush.msra.mxu0 0.0
    %1004 = vmatpush.msra.mxu0 0.0
    %1005 = vmatpush.msra.mxu0 0.0
    %1006 = vmatpush.msra.mxu0 0.0
    %1007 = vmatpush.msra.mxu0 0.0
    %1008 = vmatpush.msra.mxu0 0.0
    %1009 = vmatpush.msra.mxu0 0.0
    %1010 = vmatpush.msra.mxu0 0.0
    %1011 = vmatpush.msra.mxu0 0.0
    %1012 = vmatpush.msra.mxu0 0.0
    %1013 = vmatpush.msra.mxu0 0.0
    %1014 = vmatpush.msra.mxu0 0.0
    %1015 = vmatpush.msra.mxu0 0.0
    %1016 = vmatpush.msra.mxu0 0.0
    %1017 = vmatpush.msra.mxu0 %v408
    %1018 = vmatpush.msra.mxu0 %v405
    %1019 = vmatmul.f32.gmra.mxu0 %v837
    %v1020 = vpop.f32.mrf.mxu0
    %v1021 = vadd.f32 0.0, %v1020
    %1022 = vmatmul.f32.gmra.mxu0 %v840
    %v1023 = vpop.f32.mrf.mxu0
    %v1024 = vadd.f32 0.0, %v1023
    %1025 = vdwg.mxu0
    %1026 = vmatpush.msra.mxu0 0.0
    %1027 = vmatpush.msra.mxu0 0.0
    %1028 = vmatpush.msra.mxu0 0.0
    %1029 = vmatpush.msra.mxu0 0.0
    %1030 = vmatpush.msra.mxu0 0.0
    %1031 = vmatpush.msra.mxu0 0.0
    %1032 = vmatpush.msra.mxu0 0.0
    %1033 = vmatpush.msra.mxu0 0.0
    %1034 = vmatpush.msra.mxu0 0.0
    %1035 = vmatpush.msra.mxu0 0.0
    %1036 = vmatpush.msra.mxu0 0.0
    %1037 = vmatpush.msra.mxu0 0.0
    %1038 = vmatpush.msra.mxu0 0.0
    %1039 = vmatpush.msra.mxu0 0.0
    %1040 = vmatpush.msra.mxu0 %v414
    %1041 = vmatpush.msra.mxu0 %v411
    %1042 = vmatmul.f32.gmra.mxu0 %v837
    %v1043 = vpop.f32.mrf.mxu0
    %v1044 = vadd.f32 0.0, %v1043
    %1045 = vmatmul.f32.gmra.mxu0 %v840
    %v1046 = vpop.f32.mrf.mxu0
    %v1047 = vadd.f32 0.0, %v1046
    %1048 = vdwg.mxu0
    %1049 = vmatpush.msra.mxu0 0.0
    %1050 = vmatpush.msra.mxu0 0.0
    %1051 = vmatpush.msra.mxu0 0.0
    %1052 = vmatpush.msra.mxu0 0.0
    %1053 = vmatpush.msra.mxu0 0.0
    %1054 = vmatpush.msra.mxu0 0.0
    %1055 = vmatpush.msra.mxu0 0.0
    %1056 = vmatpush.msra.mxu0 0.0
    %1057 = vmatpush.msra.mxu0 0.0
    %1058 = vmatpush.msra.mxu0 0.0
    %1059 = vmatpush.msra.mxu0 0.0
    %1060 = vmatpush.msra.mxu0 0.0
    %1061 = vmatpush.msra.mxu0 0.0
    %1062 = vmatpush.msra.mxu0 0.0
    %1063 = vmatpush.msra.mxu0 %v420
    %1064 = vmatpush.msra.mxu0 %v417
    %1065 = vmatmul.f32.gmra.mxu0 %v837
    %v1066 = vpop.f32.mrf.mxu0
    %v1067 = vadd.f32 0.0, %v1066
    %1068 = vmatmul.f32.gmra.mxu0 %v840
    %v1069 = vpop.f32.mrf.mxu0
    %v1070 = vadd.f32 0.0, %v1069
    %1071 = vdwg.mxu0
    %1072 = vmatpush.msra.mxu0 0.0
    %1073 = vmatpush.msra.mxu0 0.0
    %1074 = vmatpush.msra.mxu0 0.0
    %1075 = vmatpush.msra.mxu0 0.0
    %1076 = vmatpush.msra.mxu0 0.0
    %1077 = vmatpush.msra.mxu0 0.0
    %1078 = vmatpush.msra.mxu0 0.0
    %1079 = vmatpush.msra.mxu0 0.0
    %1080 = vmatpush.msra.mxu0 0.0
    %1081 = vmatpush.msra.mxu0 0.0
    %1082 = vmatpush.msra.mxu0 0.0
    %1083 = vmatpush.msra.mxu0 0.0
    %1084 = vmatpush.msra.mxu0 0.0
    %1085 = vmatpush.msra.mxu0 0.0
    %1086 = vmatpush.msra.mxu0 %v426
    %1087 = vmatpush.msra.mxu0 %v423
    %1088 = vmatmul.f32.gmra.mxu0 %v837
    %v1089 = vpop.f32.mrf.mxu0
    %v1090 = vadd.f32 0.0, %v1089
    %1091 = vmatmul.f32.gmra.mxu0 %v840
    %v1092 = vpop.f32.mrf.mxu0
    %v1093 = vadd.f32 0.0, %v1092
    %1094 = vdwg.mxu0
    %1095 = vmatpush.msra.mxu0 0.0
    %1096 = vmatpush.msra.mxu0 0.0
    %1097 = vmatpush.msra.mxu0 0.0
    %1098 = vmatpush.msra.mxu0 0.0
    %1099 = vmatpush.msra.mxu0 0.0
    %1100 = vmatpush.msra.mxu0 0.0
    %1101 = vmatpush.msra.mxu0 0.0
    %1102 = vmatpush.msra.mxu0 0.0
    %1103 = vmatpush.msra.mxu0 0.0
    %1104 = vmatpush.msra.mxu0 0.0
    %1105 = vmatpush.msra.mxu0 0.0
    %1106 = vmatpush.msra.mxu0 0.0
    %1107 = vmatpush.msra.mxu0 0.0
    %1108 = vmatpush.msra.mxu0 0.0
    %1109 = vmatpush.msra.mxu0 %v432
    %1110 = vmatpush.msra.mxu0 %v429
    %1111 = vmatmul.f32.gmra.mxu0 %v837
    %v1112 = vpop.f32.mrf.mxu0
    %v1113 = vadd.f32 0.0, %v1112
    %1114 = vmatmul.f32.gmra.mxu0 %v840
    %v1115 = vpop.f32.mrf.mxu0
    %v1116 = vadd.f32 0.0, %v1115
    %1117 = vdwg.mxu0
    %1118 = vmatpush.msra.mxu0 0.0
    %1119 = vmatpush.msra.mxu0 0.0
    %1120 = vmatpush.msra.mxu0 0.0
    %1121 = vmatpush.msra.mxu0 0.0
    %1122 = vmatpush.msra.mxu0 0.0
    %1123 = vmatpush.msra.mxu0 0.0
    %1124 = vmatpush.msra.mxu0 0.0
    %1125 = vmatpush.msra.mxu0 0.0
    %1126 = vmatpush.msra.mxu0 0.0
    %1127 = vmatpush.msra.mxu0 0.0
    %1128 = vmatpush.msra.mxu0 0.0
    %1129 = vmatpush.msra.mxu0 0.0
    %1130 = vmatpush.msra.mxu0 0.0
    %1131 = vmatpush.msra.mxu0 0.0
    %1132 = vmatpush.msra.mxu0 %v438
    %1133 = vmatpush.msra.mxu0 %v435
    %1134 = vmatmul.f32.gmra.mxu0 %v837
    %v1135 = vpop.f32.mrf.mxu0
    %v1136 = vadd.f32 0.0, %v1135
    %1137 = vmatmul.f32.gmra.mxu0 %v840
    %v1138 = vpop.f32.mrf.mxu0
    %v1139 = vadd.f32 0.0, %v1138
    %1140 = vdwg.mxu0
    %1141 = vmatpush.msra.mxu0 0.0
    %1142 = vmatpush.msra.mxu0 0.0
    %1143 = vmatpush.msra.mxu0 0.0
    %1144 = vmatpush.msra.mxu0 0.0
    %1145 = vmatpush.msra.mxu0 0.0
    %1146 = vmatpush.msra.mxu0 0.0
    %1147 = vmatpush.msra.mxu0 0.0
    %1148 = vmatpush.msra.mxu0 0.0
    %1149 = vmatpush.msra.mxu0 0.0
    %1150 = vmatpush.msra.mxu0 0.0
    %1151 = vmatpush.msra.mxu0 0.0
    %1152 = vmatpush.msra.mxu0 0.0
    %1153 = vmatpush.msra.mxu0 0.0
    %1154 = vmatpush.msra.mxu0 0.0
    %1155 = vmatpush.msra.mxu0 %v444
    %1156 = vmatpush.msra.mxu0 %v441
    %1157 = vmatmul.f32.gmra.mxu0 %v837
    %v1158 = vpop.f32.mrf.mxu0
    %v1159 = vadd.f32 0.0, %v1158
    %1160 = vmatmul.f32.gmra.mxu0 %v840
    %v1161 = vpop.f32.mrf.mxu0
    %v1162 = vadd.f32 0.0, %v1161
    %1163 = vdwg.mxu0
    %1164 = vmatpush.msra.mxu0 0.0
    %1165 = vmatpush.msra.mxu0 0.0
    %1166 = vmatpush.msra.mxu0 0.0
    %1167 = vmatpush.msra.mxu0 0.0
    %1168 = vmatpush.msra.mxu0 0.0
    %1169 = vmatpush.msra.mxu0 0.0
    %1170 = vmatpush.msra.mxu0 0.0
    %1171 = vmatpush.msra.mxu0 0.0
    %1172 = vmatpush.msra.mxu0 0.0
    %1173 = vmatpush.msra.mxu0 0.0
    %1174 = vmatpush.msra.mxu0 0.0
    %1175 = vmatpush.msra.mxu0 0.0
    %1176 = vmatpush.msra.mxu0 0.0
    %1177 = vmatpush.msra.mxu0 0.0
    %1178 = vmatpush.msra.mxu0 %v450
    %1179 = vmatpush.msra.mxu0 %v447
    %1180 = vmatmul.f32.gmra.mxu0 %v837
    %v1181 = vpop.f32.mrf.mxu0
    %v1182 = vadd.f32 0.0, %v1181
    %1183 = vmatmul.f32.gmra.mxu0 %v840
    %v1184 = vpop.f32.mrf.mxu0
    %v1185 = vadd.f32 0.0, %v1184
    %1186 = vdwg.mxu0
    %1187 = vmatpush.msra.mxu0 0.0
    %1188 = vmatpush.msra.mxu0 0.0
    %1189 = vmatpush.msra.mxu0 0.0
    %1190 = vmatpush.msra.mxu0 0.0
    %1191 = vmatpush.msra.mxu0 0.0
    %1192 = vmatpush.msra.mxu0 0.0
    %1193 = vmatpush.msra.mxu0 0.0
    %1194 = vmatpush.msra.mxu0 0.0
    %1195 = vmatpush.msra.mxu0 0.0
    %1196 = vmatpush.msra.mxu0 0.0
    %1197 = vmatpush.msra.mxu0 0.0
    %1198 = vmatpush.msra.mxu0 0.0
    %1199 = vmatpush.msra.mxu0 0.0
    %1200 = vmatpush.msra.mxu0 0.0
    %1201 = vmatpush.msra.mxu0 %v456
    %1202 = vmatpush.msra.mxu0 %v453
    %1203 = vmatmul.f32.gmra.mxu0 %v837
    %v1204 = vpop.f32.mrf.mxu0
    %v1205 = vadd.f32 0.0, %v1204
    %1206 = vmatmul.f32.gmra.mxu0 %v840
    %v1207 = vpop.f32.mrf.mxu0
    %v1208 = vadd.f32 0.0, %v1207
    %1209 = vdwg.mxu0
    %v1210 = vsub.f32 %v486, %v860
    %v1211 = vsub.f32 %v489, %v863
    %v1212 = vsub.f32 %v509, %v883
    %v1213 = vsub.f32 %v512, %v886
    %v1214 = vsub.f32 %v532, %v906
    %v1215 = vsub.f32 %v535, %v909
    %v1216 = vsub.f32 %v555, %v929
    %v1217 = vsub.f32 %v558, %v932
    %v1218 = vsub.f32 %v578, %v952
    %v1219 = vsub.f32 %v581, %v955
    %v1220 = vsub.f32 %v601, %v975
    %v1221 = vsub.f32 %v604, %v978
    %v1222 = vsub.f32 %v624, %v998
    %v1223 = vsub.f32 %v627, %v1001
    %v1224 = vsub.f32 %v647, %v1021
    %v1225 = vsub.f32 %v650, %v1024
    %v1226 = vsub.f32 %v670, %v1044
    %v1227 = vsub.f32 %v673, %v1047
    %v1228 = vsub.f32 %v693, %v1067
    %v1229 = vsub.f32 %v696, %v1070
    %v1230 = vsub.f32 %v716, %v1090
    %v1231 = vsub.f32 %v719, %v1093
    %v1232 = vsub.f32 %v739, %v1113
    %v1233 = vsub.f32 %v742, %v1116
    %v1234 = vsub.f32 %v762, %v1136
    %v1235 = vsub.f32 %v765, %v1139
    %v1236 = vsub.f32 %v785, %v1159
    %v1237 = vsub.f32 %v788, %v1162
    %v1238 = vsub.f32 %v808, %v1182
    %v1239 = vsub.f32 %v811, %v1185
    %v1240 = vsub.f32 %v831, %v1205
    %v1241 = vsub.f32 %v834, %v1208
    %1242 = vmatpush.msra.mxu0 0.0
    %1243 = vmatpush.msra.mxu0 0.0
    %1244 = vmatpush.msra.mxu0 0.0
    %1245 = vmatpush.msra.mxu0 0.0
    %1246 = vmatpush.msra.mxu0 0.0
    %1247 = vmatpush.msra.mxu0 0.0
    %1248 = vmatpush.msra.mxu0 0.0
    %1249 = vmatpush.msra.mxu0 0.0
    %1250 = vmatpush.msra.mxu0 0.0
    %1251 = vmatpush.msra.mxu0 0.0
    %1252 = vmatpush.msra.mxu0 0.0
    %1253 = vmatpush.msra.mxu0 0.0
    %1254 = vmatpush.msra.mxu0 0.0
    %1255 = vmatpush.msra.mxu0 0.0
    %1256 = vmatpush.msra.mxu0 %v251
    %1257 = vmatpush.msra.mxu0 %v248
    %1258 = vmatmul.f32.gmra.mxu0 %v837
    %v1259 = vpop.f32.mrf.mxu0
    %v1260 = vadd.f32 0.0, %v1259
    %1261 = vmatmul.f32.gmra.mxu0 %v840
    %v1262 = vpop.f32.mrf.mxu0
    %v1263 = vadd.f32 0.0, %v1262
    %1264 = vdwg.mxu0
    %1265 = vmatpush.msra.mxu0 0.0
    %1266 = vmatpush.msra.mxu0 0.0
    %1267 = vmatpush.msra.mxu0 0.0
    %1268 = vmatpush.msra.mxu0 0.0
    %1269 = vmatpush.msra.mxu0 0.0
    %1270 = vmatpush.msra.mxu0 0.0
    %1271 = vmatpush.msra.mxu0 0.0
    %1272 = vmatpush.msra.mxu0 0.0
    %1273 = vmatpush.msra.mxu0 0.0
    %1274 = vmatpush.msra.mxu0 0.0
    %1275 = vmatpush.msra.mxu0 0.0
    %1276 = vmatpush.msra.mxu0 0.0
    %1277 = vmatpush.msra.mxu0 0.0
    %1278 = vmatpush.msra.mxu0 0.0
    %1279 = vmatpush.msra.mxu0 %v257
    %1280 = vmatpush.msra.mxu0 %v254
    %1281 = vmatmul.f32.gmra.mxu0 %v837
    %v1282 = vpop.f32.mrf.mxu0
    %v1283 = vadd.f32 0.0, %v1282
    %1284 = vmatmul.f32.gmra.mxu0 %v840
    %v1285 = vpop.f32.mrf.mxu0
    %v1286 = vadd.f32 0.0, %v1285
    %1287 = vdwg.mxu0
    %1288 = vmatpush.msra.mxu0 0.0
    %1289 = vmatpush.msra.mxu0 0.0
    %1290 = vmatpush.msra.mxu0 0.0
    %1291 = vmatpush.msra.mxu0 0.0
    %1292 = vmatpush.msra.mxu0 0.0
    %1293 = vmatpush.msra.mxu0 0.0
    %1294 = vmatpush.msra.mxu0 0.0
    %1295 = vmatpush.msra.mxu0 0.0
    %1296 = vmatpush.msra.mxu0 0.0
    %1297 = vmatpush.msra.mxu0 0.0
    %1298 = vmatpush.msra.mxu0 0.0
    %1299 = vmatpush.msra.mxu0 0.0
    %1300 = vmatpush.msra.mxu0 0.0
    %1301 = vmatpush.msra.mxu0 0.0
    %1302 = vmatpush.msra.mxu0 %v263
    %1303 = vmatpush.msra.mxu0 %v260
    %1304 = vmatmul.f32.gmra.mxu0 %v837
    %v1305 = vpop.f32.mrf.mxu0
    %v1306 = vadd.f32 0.0, %v1305
    %1307 = vmatmul.f32.gmra.mxu0 %v840
    %v1308 = vpop.f32.mrf.mxu0
    %v1309 = vadd.f32 0.0, %v1308
    %1310 = vdwg.mxu0
    %1311 = vmatpush.msra.mxu0 0.0
    %1312 = vmatpush.msra.mxu0 0.0
    %1313 = vmatpush.msra.mxu0 0.0
    %1314 = vmatpush.msra.mxu0 0.0
    %1315 = vmatpush.msra.mxu0 0.0
    %1316 = vmatpush.msra.mxu0 0.0
    %1317 = vmatpush.msra.mxu0 0.0
    %1318 = vmatpush.msra.mxu0 0.0
    %1319 = vmatpush.msra.mxu0 0.0
    %1320 = vmatpush.msra.mxu0 0.0
    %1321 = vmatpush.msra.mxu0 0.0
    %1322 = vmatpush.msra.mxu0 0.0
    %1323 = vmatpush.msra.mxu0 0.0
    %1324 = vmatpush.msra.mxu0 0.0
    %1325 = vmatpush.msra.mxu0 %v269
    %1326 = vmatpush.msra.mxu0 %v266
    %1327 = vmatmul.f32.gmra.mxu0 %v837
    %v1328 = vpop.f32.mrf.mxu0
    %v1329 = vadd.f32 0.0, %v1328
    %1330 = vmatmul.f32.gmra.mxu0 %v840
    %v1331 = vpop.f32.mrf.mxu0
    %v1332 = vadd.f32 0.0, %v1331
    %1333 = vdwg.mxu0
    %1334 = vmatpush.msra.mxu0 0.0
    %1335 = vmatpush.msra.mxu0 0.0
    %1336 = vmatpush.msra.mxu0 0.0
    %1337 = vmatpush.msra.mxu0 0.0
    %1338 = vmatpush.msra.mxu0 0.0
    %1339 = vmatpush.msra.mxu0 0.0
    %1340 = vmatpush.msra.mxu0 0.0
    %1341 = vmatpush.msra.mxu0 0.0
    %1342 = vmatpush.msra.mxu0 0.0
    %1343 = vmatpush.msra.mxu0 0.0
    %1344 = vmatpush.msra.mxu0 0.0
    %1345 = vmatpush.msra.mxu0 0.0
    %1346 = vmatpush.msra.mxu0 0.0
    %1347 = vmatpush.msra.mxu0 0.0
    %1348 = vmatpush.msra.mxu0 %v275
    %1349 = vmatpush.msra.mxu0 %v272
    %1350 = vmatmul.f32.gmra.mxu0 %v837
    %v1351 = vpop.f32.mrf.mxu0
    %v1352 = vadd.f32 0.0, %v1351
    %1353 = vmatmul.f32.gmra.mxu0 %v840
    %v1354 = vpop.f32.mrf.mxu0
    %v1355 = vadd.f32 0.0, %v1354
    %1356 = vdwg.mxu0
    %1357 = vmatpush.msra.mxu0 0.0
    %1358 = vmatpush.msra.mxu0 0.0
    %1359 = vmatpush.msra.mxu0 0.0
    %1360 = vmatpush.msra.mxu0 0.0
    %1361 = vmatpush.msra.mxu0 0.0
    %1362 = vmatpush.msra.mxu0 0.0
    %1363 = vmatpush.msra.mxu0 0.0
    %1364 = vmatpush.msra.mxu0 0.0
    %1365 = vmatpush.msra.mxu0 0.0
    %1366 = vmatpush.msra.mxu0 0.0
    %1367 = vmatpush.msra.mxu0 0.0
    %1368 = vmatpush.msra.mxu0 0.0
    %1369 = vmatpush.msra.mxu0 0.0
    %1370 = vmatpush.msra.mxu0 0.0
    %1371 = vmatpush.msra.mxu0 %v281
    %1372 = vmatpush.msra.mxu0 %v278
    %1373 = vmatmul.f32.gmra.mxu0 %v837
    %v1374 = vpop.f32.mrf.mxu0
    %v1375 = vadd.f32 0.0, %v1374
    %1376 = vmatmul.f32.gmra.mxu0 %v840
    %v1377 = vpop.f32.mrf.mxu0
    %v1378 = vadd.f32 0.0, %v1377
    %1379 = vdwg.mxu0
    %1380 = vmatpush.msra.mxu0 0.0
    %1381 = vmatpush.msra.mxu0 0.0
    %1382 = vmatpush.msra.mxu0 0.0
    %1383 = vmatpush.msra.mxu0 0.0
    %1384 = vmatpush.msra.mxu0 0.0
    %1385 = vmatpush.msra.mxu0 0.0
    %1386 = vmatpush.msra.mxu0 0.0
    %1387 = vmatpush.msra.mxu0 0.0
    %1388 = vmatpush.msra.mxu0 0.0
    %1389 = vmatpush.msra.mxu0 0.0
    %1390 = vmatpush.msra.mxu0 0.0
    %1391 = vmatpush.msra.mxu0 0.0
    %1392 = vmatpush.msra.mxu0 0.0
    %1393 = vmatpush.msra.mxu0 0.0
    %1394 = vmatpush.msra.mxu0 %v287
    %1395 = vmatpush.msra.mxu0 %v284
    %1396 = vmatmul.f32.gmra.mxu0 %v837
    %v1397 = vpop.f32.mrf.mxu0
    %v1398 = vadd.f32 0.0, %v1397
    %1399 = vmatmul.f32.gmra.mxu0 %v840
    %v1400 = vpop.f32.mrf.mxu0
    %v1401 = vadd.f32 0.0, %v1400
    %1402 = vdwg.mxu0
    %1403 = vmatpush.msra.mxu0 0.0
    %1404 = vmatpush.msra.mxu0 0.0
    %1405 = vmatpush.msra.mxu0 0.0
    %1406 = vmatpush.msra.mxu0 0.0
    %1407 = vmatpush.msra.mxu0 0.0
    %1408 = vmatpush.msra.mxu0 0.0
    %1409 = vmatpush.msra.mxu0 0.0
    %1410 = vmatpush.msra.mxu0 0.0
    %1411 = vmatpush.msra.mxu0 0.0
    %1412 = vmatpush.msra.mxu0 0.0
    %1413 = vmatpush.msra.mxu0 0.0
    %1414 = vmatpush.msra.mxu0 0.0
    %1415 = vmatpush.msra.mxu0 0.0
    %1416 = vmatpush.msra.mxu0 0.0
    %1417 = vmatpush.msra.mxu0 %v293
    %1418 = vmatpush.msra.mxu0 %v290
    %1419 = vmatmul.f32.gmra.mxu0 %v837
    %v1420 = vpop.f32.mrf.mxu0
    %v1421 = vadd.f32 0.0, %v1420
    %1422 = vmatmul.f32.gmra.mxu0 %v840
    %v1423 = vpop.f32.mrf.mxu0
    %v1424 = vadd.f32 0.0, %v1423
    %1425 = vdwg.mxu0
    %1426 = vmatpush.msra.mxu0 0.0
    %1427 = vmatpush.msra.mxu0 0.0
    %1428 = vmatpush.msra.mxu0 0.0
    %1429 = vmatpush.msra.mxu0 0.0
    %1430 = vmatpush.msra.mxu0 0.0
    %1431 = vmatpush.msra.mxu0 0.0
    %1432 = vmatpush.msra.mxu0 0.0
    %1433 = vmatpush.msra.mxu0 0.0
    %1434 = vmatpush.msra.mxu0 0.0
    %1435 = vmatpush.msra.mxu0 0.0
    %1436 = vmatpush.msra.mxu0 0.0
    %1437 = vmatpush.msra.mxu0 0.0
    %1438 = vmatpush.msra.mxu0 0.0
    %1439 = vmatpush.msra.mxu0 0.0
    %1440 = vmatpush.msra.mxu0 %v299
    %1441 = vmatpush.msra.mxu0 %v296
    %1442 = vmatmul.f32.gmra.mxu0 %v837
    %v1443 = vpop.f32.mrf.mxu0
    %v1444 = vadd.f32 0.0, %v1443
    %1445 = vmatmul.f32.gmra.mxu0 %v840
    %v1446 = vpop.f32.mrf.mxu0
    %v1447 = vadd.f32 0.0, %v1446
    %1448 = vdwg.mxu0
    %1449 = vmatpush.msra.mxu0 0.0
    %1450 = vmatpush.msra.mxu0 0.0
    %1451 = vmatpush.msra.mxu0 0.0
    %1452 = vmatpush.msra.mxu0 0.0
    %1453 = vmatpush.msra.mxu0 0.0
    %1454 = vmatpush.msra.mxu0 0.0
    %1455 = vmatpush.msra.mxu0 0.0
    %1456 = vmatpush.msra.mxu0 0.0
    %1457 = vmatpush.msra.mxu0 0.0
    %1458 = vmatpush.msra.mxu0 0.0
    %1459 = vmatpush.msra.mxu0 0.0
    %1460 = vmatpush.msra.mxu0 0.0
    %1461 = vmatpush.msra.mxu0 0.0
    %1462 = vmatpush.msra.mxu0 0.0
    %1463 = vmatpush.msra.mxu0 %v305
    %1464 = vmatpush.msra.mxu0 %v302
    %1465 = vmatmul.f32.gmra.mxu0 %v837
    %v1466 = vpop.f32.mrf.mxu0
    %v1467 = vadd.f32 0.0, %v1466
    %1468 = vmatmul.f32.gmra.mxu0 %v840
    %v1469 = vpop.f32.mrf.mxu0
    %v1470 = vadd.f32 0.0, %v1469
    %1471 = vdwg.mxu0
    %1472 = vmatpush.msra.mxu0 0.0
    %1473 = vmatpush.msra.mxu0 0.0
    %1474 = vmatpush.msra.mxu0 0.0
    %1475 = vmatpush.msra.mxu0 0.0
    %1476 = vmatpush.msra.mxu0 0.0
    %1477 = vmatpush.msra.mxu0 0.0
    %1478 = vmatpush.msra.mxu0 0.0
    %1479 = vmatpush.msra.mxu0 0.0
    %1480 = vmatpush.msra.mxu0 0.0
    %1481 = vmatpush.msra.mxu0 0.0
    %1482 = vmatpush.msra.mxu0 0.0
    %1483 = vmatpush.msra.mxu0 0.0
    %1484 = vmatpush.msra.mxu0 0.0
    %1485 = vmatpush.msra.mxu0 0.0
    %1486 = vmatpush.msra.mxu0 %v311
    %1487 = vmatpush.msra.mxu0 %v308
    %1488 = vmatmul.f32.gmra.mxu0 %v837
    %v1489 = vpop.f32.mrf.mxu0
    %v1490 = vadd.f32 0.0, %v1489
    %1491 = vmatmul.f32.gmra.mxu0 %v840
    %v1492 = vpop.f32.mrf.mxu0
    %v1493 = vadd.f32 0.0, %v1492
    %1494 = vdwg.mxu0
    %1495 = vmatpush.msra.mxu0 0.0
    %1496 = vmatpush.msra.mxu0 0.0
    %1497 = vmatpush.msra.mxu0 0.0
    %1498 = vmatpush.msra.mxu0 0.0
    %1499 = vmatpush.msra.mxu0 0.0
    %1500 = vmatpush.msra.mxu0 0.0
    %1501 = vmatpush.msra.mxu0 0.0
    %1502 = vmatpush.msra.mxu0 0.0
    %1503 = vmatpush.msra.mxu0 0.0
    %1504 = vmatpush.msra.mxu0 0.0
    %1505 = vmatpush.msra.mxu0 0.0
    %1506 = vmatpush.msra.mxu0 0.0
    %1507 = vmatpush.msra.mxu0 0.0
    %1508 = vmatpush.msra.mxu0 0.0
    %1509 = vmatpush.msra.mxu0 %v317
    %1510 = vmatpush.msra.mxu0 %v314
    %1511 = vmatmul.f32.gmra.mxu0 %v837
    %v1512 = vpop.f32.mrf.mxu0
    %v1513 = vadd.f32 0.0, %v1512
    %1514 = vmatmul.f32.gmra.mxu0 %v840
    %v1515 = vpop.f32.mrf.mxu0
    %v1516 = vadd.f32 0.0, %v1515
    %1517 = vdwg.mxu0
    %1518 = vmatpush.msra.mxu0 0.0
    %1519 = vmatpush.msra.mxu0 0.0
    %1520 = vmatpush.msra.mxu0 0.0
    %1521 = vmatpush.msra.mxu0 0.0
    %1522 = vmatpush.msra.mxu0 0.0
    %1523 = vmatpush.msra.mxu0 0.0
    %1524 = vmatpush.msra.mxu0 0.0
    %1525 = vmatpush.msra.mxu0 0.0
    %1526 = vmatpush.msra.mxu0 0.0
    %1527 = vmatpush.msra.mxu0 0.0
    %1528 = vmatpush.msra.mxu0 0.0
    %1529 = vmatpush.msra.mxu0 0.0
    %1530 = vmatpush.msra.mxu0 0.0
    %1531 = vmatpush.msra.mxu0 0.0
    %1532 = vmatpush.msra.mxu0 %v323
    %1533 = vmatpush.msra.mxu0 %v320
    %1534 = vmatmul.f32.gmra.mxu0 %v837
    %v1535 = vpop.f32.mrf.mxu0
    %v1536 = vadd.f32 0.0, %v1535
    %1537 = vmatmul.f32.gmra.mxu0 %v840
    %v1538 = vpop.f32.mrf.mxu0
    %v1539 = vadd.f32 0.0, %v1538
    %1540 = vdwg.mxu0
    %1541 = vmatpush.msra.mxu0 0.0
    %1542 = vmatpush.msra.mxu0 0.0
    %1543 = vmatpush.msra.mxu0 0.0
    %1544 = vmatpush.msra.mxu0 0.0
    %1545 = vmatpush.msra.mxu0 0.0
    %1546 = vmatpush.msra.mxu0 0.0
    %1547 = vmatpush.msra.mxu0 0.0
    %1548 = vmatpush.msra.mxu0 0.0
    %1549 = vmatpush.msra.mxu0 0.0
    %1550 = vmatpush.msra.mxu0 0.0
    %1551 = vmatpush.msra.mxu0 0.0
    %1552 = vmatpush.msra.mxu0 0.0
    %1553 = vmatpush.msra.mxu0 0.0
    %1554 = vmatpush.msra.mxu0 0.0
    %1555 = vmatpush.msra.mxu0 %v329
    %1556 = vmatpush.msra.mxu0 %v326
    %1557 = vmatmul.f32.gmra.mxu0 %v837
    %v1558 = vpop.f32.mrf.mxu0
    %v1559 = vadd.f32 0.0, %v1558
    %1560 = vmatmul.f32.gmra.mxu0 %v840
    %v1561 = vpop.f32.mrf.mxu0
    %v1562 = vadd.f32 0.0, %v1561
    %1563 = vdwg.mxu0
    %1564 = vmatpush.msra.mxu0 0.0
    %1565 = vmatpush.msra.mxu0 0.0
    %1566 = vmatpush.msra.mxu0 0.0
    %1567 = vmatpush.msra.mxu0 0.0
    %1568 = vmatpush.msra.mxu0 0.0
    %1569 = vmatpush.msra.mxu0 0.0
    %1570 = vmatpush.msra.mxu0 0.0
    %1571 = vmatpush.msra.mxu0 0.0
    %1572 = vmatpush.msra.mxu0 0.0
    %1573 = vmatpush.msra.mxu0 0.0
    %1574 = vmatpush.msra.mxu0 0.0
    %1575 = vmatpush.msra.mxu0 0.0
    %1576 = vmatpush.msra.mxu0 0.0
    %1577 = vmatpush.msra.mxu0 0.0
    %1578 = vmatpush.msra.mxu0 %v335
    %1579 = vmatpush.msra.mxu0 %v332
    %1580 = vmatmul.f32.gmra.mxu0 %v837
    %v1581 = vpop.f32.mrf.mxu0
    %v1582 = vadd.f32 0.0, %v1581
    %1583 = vmatmul.f32.gmra.mxu0 %v840
    %v1584 = vpop.f32.mrf.mxu0
    %v1585 = vadd.f32 0.0, %v1584
    %1586 = vdwg.mxu0
    %1587 = vmatpush.msra.mxu0 0.0
    %1588 = vmatpush.msra.mxu0 0.0
    %1589 = vmatpush.msra.mxu0 0.0
    %1590 = vmatpush.msra.mxu0 0.0
    %1591 = vmatpush.msra.mxu0 0.0
    %1592 = vmatpush.msra.mxu0 0.0
    %1593 = vmatpush.msra.mxu0 0.0
    %1594 = vmatpush.msra.mxu0 0.0
    %1595 = vmatpush.msra.mxu0 0.0
    %1596 = vmatpush.msra.mxu0 0.0
    %1597 = vmatpush.msra.mxu0 0.0
    %1598 = vmatpush.msra.mxu0 0.0
    %1599 = vmatpush.msra.mxu0 0.0
    %1600 = vmatpush.msra.mxu0 0.0
    %1601 = vmatpush.msra.mxu0 %v341
    %1602 = vmatpush.msra.mxu0 %v338
    %1603 = vmatmul.f32.gmra.mxu0 %v837
    %v1604 = vpop.f32.mrf.mxu0
    %v1605 = vadd.f32 0.0, %v1604
    %1606 = vmatmul.f32.gmra.mxu0 %v840
    %v1607 = vpop.f32.mrf.mxu0
    %v1608 = vadd.f32 0.0, %v1607
    %1609 = vdwg.mxu0
    %1610 = vmatpush.msra.mxu0 0.0
    %1611 = vmatpush.msra.mxu0 0.0
    %1612 = vmatpush.msra.mxu0 0.0
    %1613 = vmatpush.msra.mxu0 0.0
    %1614 = vmatpush.msra.mxu0 0.0
    %1615 = vmatpush.msra.mxu0 0.0
    %1616 = vmatpush.msra.mxu0 0.0
    %1617 = vmatpush.msra.mxu0 0.0
    %1618 = vmatpush.msra.mxu0 0.0
    %1619 = vmatpush.msra.mxu0 0.0
    %1620 = vmatpush.msra.mxu0 0.0
    %1621 = vmatpush.msra.mxu0 0.0
    %1622 = vmatpush.msra.mxu0 0.0
    %1623 = vmatpush.msra.mxu0 0.0
    %1624 = vmatpush.msra.mxu0 %v366
    %1625 = vmatpush.msra.mxu0 %v363
    %1626 = vmatmul.f32.gmra.mxu0 %v463
    %v1627 = vpop.f32.mrf.mxu0
    %v1628 = vadd.f32 %v1260, %v1627
    %1629 = vmatmul.f32.gmra.mxu0 %v466
    %v1630 = vpop.f32.mrf.mxu0
    %v1631 = vadd.f32 %v1263, %v1630
    %1632 = vdwg.mxu0
    %1633 = vmatpush.msra.mxu0 0.0
    %1634 = vmatpush.msra.mxu0 0.0
    %1635 = vmatpush.msra.mxu0 0.0
    %1636 = vmatpush.msra.mxu0 0.0
    %1637 = vmatpush.msra.mxu0 0.0
    %1638 = vmatpush.msra.mxu0 0.0
    %1639 = vmatpush.msra.mxu0 0.0
    %1640 = vmatpush.msra.mxu0 0.0
    %1641 = vmatpush.msra.mxu0 0.0
    %1642 = vmatpush.msra.mxu0 0.0
    %1643 = vmatpush.msra.mxu0 0.0
    %1644 = vmatpush.msra.mxu0 0.0
    %1645 = vmatpush.msra.mxu0 0.0
    %1646 = vmatpush.msra.mxu0 0.0
    %1647 = vmatpush.msra.mxu0 %v372
    %1648 = vmatpush.msra.mxu0 %v369
    %1649 = vmatmul.f32.gmra.mxu0 %v463
    %v1650 = vpop.f32.mrf.mxu0
    %v1651 = vadd.f32 %v1283, %v1650
    %1652 = vmatmul.f32.gmra.mxu0 %v466
    %v1653 = vpop.f32.mrf.mxu0
    %v1654 = vadd.f32 %v1286, %v1653
    %1655 = vdwg.mxu0
    %1656 = vmatpush.msra.mxu0 0.0
    %1657 = vmatpush.msra.mxu0 0.0
    %1658 = vmatpush.msra.mxu0 0.0
    %1659 = vmatpush.msra.mxu0 0.0
    %1660 = vmatpush.msra.mxu0 0.0
    %1661 = vmatpush.msra.mxu0 0.0
    %1662 = vmatpush.msra.mxu0 0.0
    %1663 = vmatpush.msra.mxu0 0.0
    %1664 = vmatpush.msra.mxu0 0.0
    %1665 = vmatpush.msra.mxu0 0.0
    %1666 = vmatpush.msra.mxu0 0.0
    %1667 = vmatpush.msra.mxu0 0.0
    %1668 = vmatpush.msra.mxu0 0.0
    %1669 = vmatpush.msra.mxu0 0.0
    %1670 = vmatpush.msra.mxu0 %v378
    %1671 = vmatpush.msra.mxu0 %v375
    %1672 = vmatmul.f32.gmra.mxu0 %v463
    %v1673 = vpop.f32.mrf.mxu0
    %v1674 = vadd.f32 %v1306, %v1673
    %1675 = vmatmul.f32.gmra.mxu0 %v466
    %v1676 = vpop.f32.mrf.mxu0
    %v1677 = vadd.f32 %v1309, %v1676
    %1678 = vdwg.mxu0
    %1679 = vmatpush.msra.mxu0 0.0
    %1680 = vmatpush.msra.mxu0 0.0
    %1681 = vmatpush.msra.mxu0 0.0
    %1682 = vmatpush.msra.mxu0 0.0
    %1683 = vmatpush.msra.mxu0 0.0
    %1684 = vmatpush.msra.mxu0 0.0
    %1685 = vmatpush.msra.mxu0 0.0
    %1686 = vmatpush.msra.mxu0 0.0
    %1687 = vmatpush.msra.mxu0 0.0
    %1688 = vmatpush.msra.mxu0 0.0
    %1689 = vmatpush.msra.mxu0 0.0
    %1690 = vmatpush.msra.mxu0 0.0
    %1691 = vmatpush.msra.mxu0 0.0
    %1692 = vmatpush.msra.mxu0 0.0
    %1693 = vmatpush.msra.mxu0 %v384
    %1694 = vmatpush.msra.mxu0 %v381
    %1695 = vmatmul.f32.gmra.mxu0 %v463
    %v1696 = vpop.f32.mrf.mxu0
    %v1697 = vadd.f32 %v1329, %v1696
    %1698 = vmatmul.f32.gmra.mxu0 %v466
    %v1699 = vpop.f32.mrf.mxu0
    %v1700 = vadd.f32 %v1332, %v1699
    %1701 = vdwg.mxu0
    %1702 = vmatpush.msra.mxu0 0.0
    %1703 = vmatpush.msra.mxu0 0.0
    %1704 = vmatpush.msra.mxu0 0.0
    %1705 = vmatpush.msra.mxu0 0.0
    %1706 = vmatpush.msra.mxu0 0.0
    %1707 = vmatpush.msra.mxu0 0.0
    %1708 = vmatpush.msra.mxu0 0.0
    %1709 = vmatpush.msra.mxu0 0.0
    %1710 = vmatpush.msra.mxu0 0.0
    %1711 = vmatpush.msra.mxu0 0.0
    %1712 = vmatpush.msra.mxu0 0.0
    %1713 = vmatpush.msra.mxu0 0.0
    %1714 = vmatpush.msra.mxu0 0.0
    %1715 = vmatpush.msra.mxu0 0.0
    %1716 = vmatpush.msra.mxu0 %v390
    %1717 = vmatpush.msra.mxu0 %v387
    %1718 = vmatmul.f32.gmra.mxu0 %v463
    %v1719 = vpop.f32.mrf.mxu0
    %v1720 = vadd.f32 %v1352, %v1719
    %1721 = vmatmul.f32.gmra.mxu0 %v466
    %v1722 = vpop.f32.mrf.mxu0
    %v1723 = vadd.f32 %v1355, %v1722
    %1724 = vdwg.mxu0
    %1725 = vmatpush.msra.mxu0 0.0
    %1726 = vmatpush.msra.mxu0 0.0
    %1727 = vmatpush.msra.mxu0 0.0
    %1728 = vmatpush.msra.mxu0 0.0
    %1729 = vmatpush.msra.mxu0 0.0
    %1730 = vmatpush.msra.mxu0 0.0
    %1731 = vmatpush.msra.mxu0 0.0
    %1732 = vmatpush.msra.mxu0 0.0
    %1733 = vmatpush.msra.mxu0 0.0
    %1734 = vmatpush.msra.mxu0 0.0
    %1735 = vmatpush.msra.mxu0 0.0
    %1736 = vmatpush.msra.mxu0 0.0
    %1737 = vmatpush.msra.mxu0 0.0
    %1738 = vmatpush.msra.mxu0 0.0
    %1739 = vmatpush.msra.mxu0 %v396
    %1740 = vmatpush.msra.mxu0 %v393
    %1741 = vmatmul.f32.gmra.mxu0 %v463
    %v1742 = vpop.f32.mrf.mxu0
    %v1743 = vadd.f32 %v1375, %v1742
    %1744 = vmatmul.f32.gmra.mxu0 %v466
    %v1745 = vpop.f32.mrf.mxu0
    %v1746 = vadd.f32 %v1378, %v1745
    %1747 = vdwg.mxu0
    %1748 = vmatpush.msra.mxu0 0.0
    %1749 = vmatpush.msra.mxu0 0.0
    %1750 = vmatpush.msra.mxu0 0.0
    %1751 = vmatpush.msra.mxu0 0.0
    %1752 = vmatpush.msra.mxu0 0.0
    %1753 = vmatpush.msra.mxu0 0.0
    %1754 = vmatpush.msra.mxu0 0.0
    %1755 = vmatpush.msra.mxu0 0.0
    %1756 = vmatpush.msra.mxu0 0.0
    %1757 = vmatpush.msra.mxu0 0.0
    %1758 = vmatpush.msra.mxu0 0.0
    %1759 = vmatpush.msra.mxu0 0.0
    %1760 = vmatpush.msra.mxu0 0.0
    %1761 = vmatpush.msra.mxu0 0.0
    %1762 = vmatpush.msra.mxu0 %v402
    %1763 = vmatpush.msra.mxu0 %v399
    %1764 = vmatmul.f32.gmra.mxu0 %v463
    %v1765 = vpop.f32.mrf.mxu0
    %v1766 = vadd.f32 %v1398, %v1765
    %1767 = vmatmul.f32.gmra.mxu0 %v466
    %v1768 = vpop.f32.mrf.mxu0
    %v1769 = vadd.f32 %v1401, %v1768
    %1770 = vdwg.mxu0
    %1771 = vmatpush.msra.mxu0 0.0
    %1772 = vmatpush.msra.mxu0 0.0
    %1773 = vmatpush.msra.mxu0 0.0
    %1774 = vmatpush.msra.mxu0 0.0
    %1775 = vmatpush.msra.mxu0 0.0
    %1776 = vmatpush.msra.mxu0 0.0
    %1777 = vmatpush.msra.mxu0 0.0
    %1778 = vmatpush.msra.mxu0 0.0
    %1779 = vmatpush.msra.mxu0 0.0
    %1780 = vmatpush.msra.mxu0 0.0
    %1781 = vmatpush.msra.mxu0 0.0
    %1782 = vmatpush.msra.mxu0 0.0
    %1783 = vmatpush.msra.mxu0 0.0
    %1784 = vmatpush.msra.mxu0 0.0
    %1785 = vmatpush.msra.mxu0 %v408
    %1786 = vmatpush.msra.mxu0 %v405
    %1787 = vmatmul.f32.gmra.mxu0 %v463
    %v1788 = vpop.f32.mrf.mxu0
    %v1789 = vadd.f32 %v1421, %v1788
    %1790 = vmatmul.f32.gmra.mxu0 %v466
    %v1791 = vpop.f32.mrf.mxu0
    %v1792 = vadd.f32 %v1424, %v1791
    %1793 = vdwg.mxu0
    %1794 = vmatpush.msra.mxu0 0.0
    %1795 = vmatpush.msra.mxu0 0.0
    %1796 = vmatpush.msra.mxu0 0.0
    %1797 = vmatpush.msra.mxu0 0.0
    %1798 = vmatpush.msra.mxu0 0.0
    %1799 = vmatpush.msra.mxu0 0.0
    %1800 = vmatpush.msra.mxu0 0.0
    %1801 = vmatpush.msra.mxu0 0.0
    %1802 = vmatpush.msra.mxu0 0.0
    %1803 = vmatpush.msra.mxu0 0.0
    %1804 = vmatpush.msra.mxu0 0.0
    %1805 = vmatpush.msra.mxu0 0.0
    %1806 = vmatpush.msra.mxu0 0.0
    %1807 = vmatpush.msra.mxu0 0.0
    %1808 = vmatpush.msra.mxu0 %v414
    %1809 = vmatpush.msra.mxu0 %v411
    %1810 = vmatmul.f32.gmra.mxu0 %v463
    %v1811 = vpop.f32.mrf.mxu0
    %v1812 = vadd.f32 %v1444, %v1811
    %1813 = vmatmul.f32.gmra.mxu0 %v466
    %v1814 = vpop.f32.mrf.mxu0
    %v1815 = vadd.f32 %v1447, %v1814
    %1816 = vdwg.mxu0
    %1817 = vmatpush.msra.mxu0 0.0
    %1818 = vmatpush.msra.mxu0 0.0
    %1819 = vmatpush.msra.mxu0 0.0
    %1820 = vmatpush.msra.mxu0 0.0
    %1821 = vmatpush.msra.mxu0 0.0
    %1822 = vmatpush.msra.mxu0 0.0
    %1823 = vmatpush.msra.mxu0 0.0
    %1824 = vmatpush.msra.mxu0 0.0
    %1825 = vmatpush.msra.mxu0 0.0
    %1826 = vmatpush.msra.mxu0 0.0
    %1827 = vmatpush.msra.mxu0 0.0
    %1828 = vmatpush.msra.mxu0 0.0
    %1829 = vmatpush.msra.mxu0 0.0
    %1830 = vmatpush.msra.mxu0 0.0
    %1831 = vmatpush.msra.mxu0 %v420
    %1832 = vmatpush.msra.mxu0 %v417
    %1833 = vmatmul.f32.gmra.mxu0 %v463
    %v1834 = vpop.f32.mrf.mxu0
    %v1835 = vadd.f32 %v1467, %v1834
    %1836 = vmatmul.f32.gmra.mxu0 %v466
    %v1837 = vpop.f32.mrf.mxu0
    %v1838 = vadd.f32 %v1470, %v1837
    %1839 = vdwg.mxu0
    %1840 = vmatpush.msra.mxu0 0.0
    %1841 = vmatpush.msra.mxu0 0.0
    %1842 = vmatpush.msra.mxu0 0.0
    %1843 = vmatpush.msra.mxu0 0.0
    %1844 = vmatpush.msra.mxu0 0.0
    %1845 = vmatpush.msra.mxu0 0.0
    %1846 = vmatpush.msra.mxu0 0.0
    %1847 = vmatpush.msra.mxu0 0.0
    %1848 = vmatpush.msra.mxu0 0.0
    %1849 = vmatpush.msra.mxu0 0.0
    %1850 = vmatpush.msra.mxu0 0.0
    %1851 = vmatpush.msra.mxu0 0.0
    %1852 = vmatpush.msra.mxu0 0.0
    %1853 = vmatpush.msra.mxu0 0.0
    %1854 = vmatpush.msra.mxu0 %v426
    %1855 = vmatpush.msra.mxu0 %v423
    %1856 = vmatmul.f32.gmra.mxu0 %v463
    %v1857 = vpop.f32.mrf.mxu0
    %v1858 = vadd.f32 %v1490, %v1857
    %1859 = vmatmul.f32.gmra.mxu0 %v466
    %v1860 = vpop.f32.mrf.mxu0
    %v1861 = vadd.f32 %v1493, %v1860
    %1862 = vdwg.mxu0
    %1863 = vmatpush.msra.mxu0 0.0
    %1864 = vmatpush.msra.mxu0 0.0
    %1865 = vmatpush.msra.mxu0 0.0
    %1866 = vmatpush.msra.mxu0 0.0
    %1867 = vmatpush.msra.mxu0 0.0
    %1868 = vmatpush.msra.mxu0 0.0
    %1869 = vmatpush.msra.mxu0 0.0
    %1870 = vmatpush.msra.mxu0 0.0
    %1871 = vmatpush.msra.mxu0 0.0
    %1872 = vmatpush.msra.mxu0 0.0
    %1873 = vmatpush.msra.mxu0 0.0
    %1874 = vmatpush.msra.mxu0 0.0
    %1875 = vmatpush.msra.mxu0 0.0
    %1876 = vmatpush.msra.mxu0 0.0
    %1877 = vmatpush.msra.mxu0 %v432
    %1878 = vmatpush.msra.mxu0 %v429
    %1879 = vmatmul.f32.gmra.mxu0 %v463
    %v1880 = vpop.f32.mrf.mxu0
    %v1881 = vadd.f32 %v1513, %v1880
    %1882 = vmatmul.f32.gmra.mxu0 %v466
    %v1883 = vpop.f32.mrf.mxu0
    %v1884 = vadd.f32 %v1516, %v1883
    %1885 = vdwg.mxu0
    %1886 = vmatpush.msra.mxu0 0.0
    %1887 = vmatpush.msra.mxu0 0.0
    %1888 = vmatpush.msra.mxu0 0.0
    %1889 = vmatpush.msra.mxu0 0.0
    %1890 = vmatpush.msra.mxu0 0.0
    %1891 = vmatpush.msra.mxu0 0.0
    %1892 = vmatpush.msra.mxu0 0.0
    %1893 = vmatpush.msra.mxu0 0.0
    %1894 = vmatpush.msra.mxu0 0.0
    %1895 = vmatpush.msra.mxu0 0.0
    %1896 = vmatpush.msra.mxu0 0.0
    %1897 = vmatpush.msra.mxu0 0.0
    %1898 = vmatpush.msra.mxu0 0.0
    %1899 = vmatpush.msra.mxu0 0.0
    %1900 = vmatpush.msra.mxu0 %v438
    %1901 = vmatpush.msra.mxu0 %v435
    %1902 = vmatmul.f32.gmra.mxu0 %v463
    %v1903 = vpop.f32.mrf.mxu0
    %v1904 = vadd.f32 %v1536, %v1903
    %1905 = vmatmul.f32.gmra.mxu0 %v466
    %v1906 = vpop.f32.mrf.mxu0
    %v1907 = vadd.f32 %v1539, %v1906
    %1908 = vdwg.mxu0
    %1909 = vmatpush.msra.mxu0 0.0
    %1910 = vmatpush.msra.mxu0 0.0
    %1911 = vmatpush.msra.mxu0 0.0
    %1912 = vmatpush.msra.mxu0 0.0
    %1913 = vmatpush.msra.mxu0 0.0
    %1914 = vmatpush.msra.mxu0 0.0
    %1915 = vmatpush.msra.mxu0 0.0
    %1916 = vmatpush.msra.mxu0 0.0
    %1917 = vmatpush.msra.mxu0 0.0
    %1918 = vmatpush.msra.mxu0 0.0
    %1919 = vmatpush.msra.mxu0 0.0
    %1920 = vmatpush.msra.mxu0 0.0
    %1921 = vmatpush.msra.mxu0 0.0
    %1922 = vmatpush.msra.mxu0 0.0
    %1923 = vmatpush.msra.mxu0 %v444
    %1924 = vmatpush.msra.mxu0 %v441
    %1925 = vmatmul.f32.gmra.mxu0 %v463
    %v1926 = vpop.f32.mrf.mxu0
    %v1927 = vadd.f32 %v1559, %v1926
    %1928 = vmatmul.f32.gmra.mxu0 %v466
    %v1929 = vpop.f32.mrf.mxu0
    %v1930 = vadd.f32 %v1562, %v1929
    %1931 = vdwg.mxu0
    %1932 = vmatpush.msra.mxu0 0.0
    %1933 = vmatpush.msra.mxu0 0.0
    %1934 = vmatpush.msra.mxu0 0.0
    %1935 = vmatpush.msra.mxu0 0.0
    %1936 = vmatpush.msra.mxu0 0.0
    %1937 = vmatpush.msra.mxu0 0.0
    %1938 = vmatpush.msra.mxu0 0.0
    %1939 = vmatpush.msra.mxu0 0.0
    %1940 = vmatpush.msra.mxu0 0.0
    %1941 = vmatpush.msra.mxu0 0.0
    %1942 = vmatpush.msra.mxu0 0.0
    %1943 = vmatpush.msra.mxu0 0.0
    %1944 = vmatpush.msra.mxu0 0.0
    %1945 = vmatpush.msra.mxu0 0.0
    %1946 = vmatpush.msra.mxu0 %v450
    %1947 = vmatpush.msra.mxu0 %v447
    %1948 = vmatmul.f32.gmra.mxu0 %v463
    %v1949 = vpop.f32.mrf.mxu0
    %v1950 = vadd.f32 %v1582, %v1949
    %1951 = vmatmul.f32.gmra.mxu0 %v466
    %v1952 = vpop.f32.mrf.mxu0
    %v1953 = vadd.f32 %v1585, %v1952
    %1954 = vdwg.mxu0
    %1955 = vmatpush.msra.mxu0 0.0
    %1956 = vmatpush.msra.mxu0 0.0
    %1957 = vmatpush.msra.mxu0 0.0
    %1958 = vmatpush.msra.mxu0 0.0
    %1959 = vmatpush.msra.mxu0 0.0
    %1960 = vmatpush.msra.mxu0 0.0
    %1961 = vmatpush.msra.mxu0 0.0
    %1962 = vmatpush.msra.mxu0 0.0
    %1963 = vmatpush.msra.mxu0 0.0
    %1964 = vmatpush.msra.mxu0 0.0
    %1965 = vmatpush.msra.mxu0 0.0
    %1966 = vmatpush.msra.mxu0 0.0
    %1967 = vmatpush.msra.mxu0 0.0
    %1968 = vmatpush.msra.mxu0 0.0
    %1969 = vmatpush.msra.mxu0 %v456
    %1970 = vmatpush.msra.mxu0 %v453
    %1971 = vmatmul.f32.gmra.mxu0 %v463
    %v1972 = vpop.f32.mrf.mxu0
    %v1973 = vadd.f32 %v1605, %v1972
    %1974 = vmatmul.f32.gmra.mxu0 %v466
    %v1975 = vpop.f32.mrf.mxu0
    %v1976 = vadd.f32 %v1608, %v1975
    %1977 = vdwg.mxu0
    %v1978 = vand.u32 2147483647, %v1210
    %v1979 = vand.u32 2147483647, %v1628
    %v1980 = vmin.f32 %v1978, %v1979
    %v1981 = vmax.f32 %v1978, %v1979
    %v1982 = vrcp.pop %v1981
    %v1983 = vmul.f32 %v1981, %v1982
    %v1984 = vsub.f32 1.0, %v1983
    %v1985 = vmul.f32 %v1982, %v1984
    %v1986 = vadd.f32 %v1982, %v1985
    %vm1987 = vweird.f32 %v1981
    %vm1988 = vweird.f32 %v1982
    %vm1989 = vmor %vm1987, %vm1988
    %v1990 = vsel %vm1989, %v1982, %v1986
    %v1991 = vand.u32 2147483647, %v1981
    %vm1992 = vcmp.eq.f32.partialorder %v1991, 8.507059e+37
    %v1993 = vand.u32 %v1981, 2147483648
    %v1994 = vor.u32 1.1754944e-38, %v1993
    %v1995 = vsel %vm1992, %v1994, %v1990
    %v1996 = vmul.f32 %v1980, %v1995
    %v1997 = vmul.f32 %v1996, %v1996
    %v1998 = vmul.f32 0.002785687, %v1997
    %v1999 = vadd.f32 %v1998, -0.015866
    %v2000 = vmul.f32 %v1999, %v1997
    %v2001 = vadd.f32 %v2000, 0.04247222
    %v2002 = vmul.f32 %v2001, %v1997
    %v2003 = vadd.f32 %v2002, -0.074975304
    %v2004 = vmul.f32 %v2003, %v1997
    %v2005 = vadd.f32 %v2004, 0.1064488
    %v2006 = vmul.f32 %v2005, %v1997
    %v2007 = vadd.f32 %v2006, -0.14207031
    %v2008 = vmul.f32 %v2007, %v1997
    %v2009 = vadd.f32 %v2008, 0.19993454
    %v2010 = vmul.f32 %v2009, %v1997
    %v2011 = vadd.f32 %v2010, -0.33333147
    %v2012 = vmul.f32 %v2011, %v1997
    %v2013 = vmul.f32 %v2012, %v1996
    %v2014 = vadd.f32 %v2013, %v1996
    %vm2015 = vcmp.gt.f32.partialorder %v1979, %v1978
    %v2016 = vsub.f32 1.5707964, %v2014
    %v2017 = vsel %vm2015, %v2016, %v2014
    %vm2018 = vcmp.lt.f32.partialorder %v1210, 0.0
    %v2019 = vsub.f32 3.1415927, %v2017
    %v2020 = vsel %vm2018, %v2019, %v2017
    %vm2021 = vcmp.lt.s32.totalorder %v1210, 0
    %v2022 = vsel %vm2021, 3.1415927, 0.0
    %vm2023 = vcmp.eq.f32.partialorder %v1628, 0.0
    %v2024 = vsel %vm2023, %v2022, %v2020
    %vm2025 = vcmp.ne.f32.partialorder %v1210, %v1210
    %vm2026 = vcmp.ne.f32.partialorder %v1628, %v1628
    %vm2027 = vmor %vm2025, %vm2026
    %v2028 = vsel %vm2027, nan, %v2024
    %vm2029 = vcmp.lt.f32.partialorder %v1210, 0.0
    %v2030 = vsel %vm2029, 2.3561945, 0.7853982
    %vm2031 = vcmp.eq.s32.totalorder %v1978, inf
    %vm2032 = vcmp.eq.s32.totalorder %v1979, inf
    %vm2033 = vmand %vm2031, %vm2032
    %v2034 = vsel %vm2033, %v2030, %v2028
    %v2035 = vand.u32 2147483647, %v2034
    %v2036 = vand.u32 %v1628, 2147483648
    %v2037 = vor.u32 %v2035, %v2036
    %v2038 = vand.u32 2147483647, %v1211
    %v2039 = vand.u32 2147483647, %v1631
    %v2040 = vmin.f32 %v2038, %v2039
    %v2041 = vmax.f32 %v2038, %v2039
    %v2042 = vrcp.pop %v2041
    %v2043 = vmul.f32 %v2041, %v2042
    %v2044 = vsub.f32 1.0, %v2043
    %v2045 = vmul.f32 %v2042, %v2044
    %v2046 = vadd.f32 %v2042, %v2045
    %vm2047 = vweird.f32 %v2041
    %vm2048 = vweird.f32 %v2042
    %vm2049 = vmor %vm2047, %vm2048
    %v2050 = vsel %vm2049, %v2042, %v2046
    %v2051 = vand.u32 2147483647, %v2041
    %vm2052 = vcmp.eq.f32.partialorder %v2051, 8.507059e+37
    %v2053 = vand.u32 %v2041, 2147483648
    %v2054 = vor.u32 1.1754944e-38, %v2053
    %v2055 = vsel %vm2052, %v2054, %v2050
    %v2056 = vmul.f32 %v2040, %v2055
    %v2057 = vmul.f32 %v2056, %v2056
    %v2058 = vmul.f32 0.002785687, %v2057
    %v2059 = vadd.f32 %v2058, -0.015866
    %v2060 = vmul.f32 %v2059, %v2057
    %v2061 = vadd.f32 %v2060, 0.04247222
    %v2062 = vmul.f32 %v2061, %v2057
    %v2063 = vadd.f32 %v2062, -0.074975304
    %v2064 = vmul.f32 %v2063, %v2057
    %v2065 = vadd.f32 %v2064, 0.1064488
    %v2066 = vmul.f32 %v2065, %v2057
    %v2067 = vadd.f32 %v2066, -0.14207031
    %v2068 = vmul.f32 %v2067, %v2057
    %v2069 = vadd.f32 %v2068, 0.19993454
    %v2070 = vmul.f32 %v2069, %v2057
    %v2071 = vadd.f32 %v2070, -0.33333147
    %v2072 = vmul.f32 %v2071, %v2057
    %v2073 = vmul.f32 %v2072, %v2056
    %v2074 = vadd.f32 %v2073, %v2056
    %vm2075 = vcmp.gt.f32.partialorder %v2039, %v2038
    %v2076 = vsub.f32 1.5707964, %v2074
    %v2077 = vsel %vm2075, %v2076, %v2074
    %vm2078 = vcmp.lt.f32.partialorder %v1211, 0.0
    %v2079 = vsub.f32 3.1415927, %v2077
    %v2080 = vsel %vm2078, %v2079, %v2077
    %vm2081 = vcmp.lt.s32.totalorder %v1211, 0
    %v2082 = vsel %vm2081, 3.1415927, 0.0
    %vm2083 = vcmp.eq.f32.partialorder %v1631, 0.0
    %v2084 = vsel %vm2083, %v2082, %v2080
    %vm2085 = vcmp.ne.f32.partialorder %v1211, %v1211
    %vm2086 = vcmp.ne.f32.partialorder %v1631, %v1631
    %vm2087 = vmor %vm2085, %vm2086
    %v2088 = vsel %vm2087, nan, %v2084
    %vm2089 = vcmp.lt.f32.partialorder %v1211, 0.0
    %v2090 = vsel %vm2089, 2.3561945, 0.7853982
    %vm2091 = vcmp.eq.s32.totalorder %v2038, inf
    %vm2092 = vcmp.eq.s32.totalorder %v2039, inf
    %vm2093 = vmand %vm2091, %vm2092
    %v2094 = vsel %vm2093, %v2090, %v2088
    %v2095 = vand.u32 2147483647, %v2094
    %v2096 = vand.u32 %v1631, 2147483648
    %v2097 = vor.u32 %v2095, %v2096
    %v2098 = vand.u32 2147483647, %v1212
    %v2099 = vand.u32 2147483647, %v1651
    %v2100 = vmin.f32 %v2098, %v2099
    %v2101 = vmax.f32 %v2098, %v2099
    %v2102 = vrcp.pop %v2101
    %v2103 = vmul.f32 %v2101, %v2102
    %v2104 = vsub.f32 1.0, %v2103
    %v2105 = vmul.f32 %v2102, %v2104
    %v2106 = vadd.f32 %v2102, %v2105
    %vm2107 = vweird.f32 %v2101
    %vm2108 = vweird.f32 %v2102
    %vm2109 = vmor %vm2107, %vm2108
    %v2110 = vsel %vm2109, %v2102, %v2106
    %v2111 = vand.u32 2147483647, %v2101
    %vm2112 = vcmp.eq.f32.partialorder %v2111, 8.507059e+37
    %v2113 = vand.u32 %v2101, 2147483648
    %v2114 = vor.u32 1.1754944e-38, %v2113
    %v2115 = vsel %vm2112, %v2114, %v2110
    %v2116 = vmul.f32 %v2100, %v2115
    %v2117 = vmul.f32 %v2116, %v2116
    %v2118 = vmul.f32 0.002785687, %v2117
    %v2119 = vadd.f32 %v2118, -0.015866
    %v2120 = vmul.f32 %v2119, %v2117
    %v2121 = vadd.f32 %v2120, 0.04247222
    %v2122 = vmul.f32 %v2121, %v2117
    %v2123 = vadd.f32 %v2122, -0.074975304
    %v2124 = vmul.f32 %v2123, %v2117
    %v2125 = vadd.f32 %v2124, 0.1064488
    %v2126 = vmul.f32 %v2125, %v2117
    %v2127 = vadd.f32 %v2126, -0.14207031
    %v2128 = vmul.f32 %v2127, %v2117
    %v2129 = vadd.f32 %v2128, 0.19993454
    %v2130 = vmul.f32 %v2129, %v2117
    %v2131 = vadd.f32 %v2130, -0.33333147
    %v2132 = vmul.f32 %v2131, %v2117
    %v2133 = vmul.f32 %v2132, %v2116
    %v2134 = vadd.f32 %v2133, %v2116
    %vm2135 = vcmp.gt.f32.partialorder %v2099, %v2098
    %v2136 = vsub.f32 1.5707964, %v2134
    %v2137 = vsel %vm2135, %v2136, %v2134
    %vm2138 = vcmp.lt.f32.partialorder %v1212, 0.0
    %v2139 = vsub.f32 3.1415927, %v2137
    %v2140 = vsel %vm2138, %v2139, %v2137
    %vm2141 = vcmp.lt.s32.totalorder %v1212, 0
    %v2142 = vsel %vm2141, 3.1415927, 0.0
    %vm2143 = vcmp.eq.f32.partialorder %v1651, 0.0
    %v2144 = vsel %vm2143, %v2142, %v2140
    %vm2145 = vcmp.ne.f32.partialorder %v1212, %v1212
    %vm2146 = vcmp.ne.f32.partialorder %v1651, %v1651
    %vm2147 = vmor %vm2145, %vm2146
    %v2148 = vsel %vm2147, nan, %v2144
    %vm2149 = vcmp.lt.f32.partialorder %v1212, 0.0
    %v2150 = vsel %vm2149, 2.3561945, 0.7853982
    %vm2151 = vcmp.eq.s32.totalorder %v2098, inf
    %vm2152 = vcmp.eq.s32.totalorder %v2099, inf
    %vm2153 = vmand %vm2151, %vm2152
    %v2154 = vsel %vm2153, %v2150, %v2148
    %v2155 = vand.u32 2147483647, %v2154
    %v2156 = vand.u32 %v1651, 2147483648
    %v2157 = vor.u32 %v2155, %v2156
    %v2158 = vand.u32 2147483647, %v1213
    %v2159 = vand.u32 2147483647, %v1654
    %v2160 = vmin.f32 %v2158, %v2159
    %v2161 = vmax.f32 %v2158, %v2159
    %v2162 = vrcp.pop %v2161
    %v2163 = vmul.f32 %v2161, %v2162
    %v2164 = vsub.f32 1.0, %v2163
    %v2165 = vmul.f32 %v2162, %v2164
    %v2166 = vadd.f32 %v2162, %v2165
    %vm2167 = vweird.f32 %v2161
    %vm2168 = vweird.f32 %v2162
    %vm2169 = vmor %vm2167, %vm2168
    %v2170 = vsel %vm2169, %v2162, %v2166
    %v2171 = vand.u32 2147483647, %v2161
    %vm2172 = vcmp.eq.f32.partialorder %v2171, 8.507059e+37
    %v2173 = vand.u32 %v2161, 2147483648
    %v2174 = vor.u32 1.1754944e-38, %v2173
    %v2175 = vsel %vm2172, %v2174, %v2170
    %v2176 = vmul.f32 %v2160, %v2175
    %v2177 = vmul.f32 %v2176, %v2176
    %v2178 = vmul.f32 0.002785687, %v2177
    %v2179 = vadd.f32 %v2178, -0.015866
    %v2180 = vmul.f32 %v2179, %v2177
    %v2181 = vadd.f32 %v2180, 0.04247222
    %v2182 = vmul.f32 %v2181, %v2177
    %v2183 = vadd.f32 %v2182, -0.074975304
    %v2184 = vmul.f32 %v2183, %v2177
    %v2185 = vadd.f32 %v2184, 0.1064488
    %v2186 = vmul.f32 %v2185, %v2177
    %v2187 = vadd.f32 %v2186, -0.14207031
    %v2188 = vmul.f32 %v2187, %v2177
    %v2189 = vadd.f32 %v2188, 0.19993454
    %v2190 = vmul.f32 %v2189, %v2177
    %v2191 = vadd.f32 %v2190, -0.33333147
    %v2192 = vmul.f32 %v2191, %v2177
    %v2193 = vmul.f32 %v2192, %v2176
    %v2194 = vadd.f32 %v2193, %v2176
    %vm2195 = vcmp.gt.f32.partialorder %v2159, %v2158
    %v2196 = vsub.f32 1.5707964, %v2194
    %v2197 = vsel %vm2195, %v2196, %v2194
    %vm2198 = vcmp.lt.f32.partialorder %v1213, 0.0
    %v2199 = vsub.f32 3.1415927, %v2197
    %v2200 = vsel %vm2198, %v2199, %v2197
    %vm2201 = vcmp.lt.s32.totalorder %v1213, 0
    %v2202 = vsel %vm2201, 3.1415927, 0.0
    %vm2203 = vcmp.eq.f32.partialorder %v1654, 0.0
    %v2204 = vsel %vm2203, %v2202, %v2200
    %vm2205 = vcmp.ne.f32.partialorder %v1213, %v1213
    %vm2206 = vcmp.ne.f32.partialorder %v1654, %v1654
    %vm2207 = vmor %vm2205, %vm2206
    %v2208 = vsel %vm2207, nan, %v2204
    %vm2209 = vcmp.lt.f32.partialorder %v1213, 0.0
    %v2210 = vsel %vm2209, 2.3561945, 0.7853982
    %vm2211 = vcmp.eq.s32.totalorder %v2158, inf
    %vm2212 = vcmp.eq.s32.totalorder %v2159, inf
    %vm2213 = vmand %vm2211, %vm2212
    %v2214 = vsel %vm2213, %v2210, %v2208
    %v2215 = vand.u32 2147483647, %v2214
    %v2216 = vand.u32 %v1654, 2147483648
    %v2217 = vor.u32 %v2215, %v2216
    %v2218 = vand.u32 2147483647, %v1214
    %v2219 = vand.u32 2147483647, %v1674
    %v2220 = vmin.f32 %v2218, %v2219
    %v2221 = vmax.f32 %v2218, %v2219
    %v2222 = vrcp.pop %v2221
    %v2223 = vmul.f32 %v2221, %v2222
    %v2224 = vsub.f32 1.0, %v2223
    %v2225 = vmul.f32 %v2222, %v2224
    %v2226 = vadd.f32 %v2222, %v2225
    %vm2227 = vweird.f32 %v2221
    %vm2228 = vweird.f32 %v2222
    %vm2229 = vmor %vm2227, %vm2228
    %v2230 = vsel %vm2229, %v2222, %v2226
    %v2231 = vand.u32 2147483647, %v2221
    %vm2232 = vcmp.eq.f32.partialorder %v2231, 8.507059e+37
    %v2233 = vand.u32 %v2221, 2147483648
    %v2234 = vor.u32 1.1754944e-38, %v2233
    %v2235 = vsel %vm2232, %v2234, %v2230
    %v2236 = vmul.f32 %v2220, %v2235
    %v2237 = vmul.f32 %v2236, %v2236
    %v2238 = vmul.f32 0.002785687, %v2237
    %v2239 = vadd.f32 %v2238, -0.015866
    %v2240 = vmul.f32 %v2239, %v2237
    %v2241 = vadd.f32 %v2240, 0.04247222
    %v2242 = vmul.f32 %v2241, %v2237
    %v2243 = vadd.f32 %v2242, -0.074975304
    %v2244 = vmul.f32 %v2243, %v2237
    %v2245 = vadd.f32 %v2244, 0.1064488
    %v2246 = vmul.f32 %v2245, %v2237
    %v2247 = vadd.f32 %v2246, -0.14207031
    %v2248 = vmul.f32 %v2247, %v2237
    %v2249 = vadd.f32 %v2248, 0.19993454
    %v2250 = vmul.f32 %v2249, %v2237
    %v2251 = vadd.f32 %v2250, -0.33333147
    %v2252 = vmul.f32 %v2251, %v2237
    %v2253 = vmul.f32 %v2252, %v2236
    %v2254 = vadd.f32 %v2253, %v2236
    %vm2255 = vcmp.gt.f32.partialorder %v2219, %v2218
    %v2256 = vsub.f32 1.5707964, %v2254
    %v2257 = vsel %vm2255, %v2256, %v2254
    %vm2258 = vcmp.lt.f32.partialorder %v1214, 0.0
    %v2259 = vsub.f32 3.1415927, %v2257
    %v2260 = vsel %vm2258, %v2259, %v2257
    %vm2261 = vcmp.lt.s32.totalorder %v1214, 0
    %v2262 = vsel %vm2261, 3.1415927, 0.0
    %vm2263 = vcmp.eq.f32.partialorder %v1674, 0.0
    %v2264 = vsel %vm2263, %v2262, %v2260
    %vm2265 = vcmp.ne.f32.partialorder %v1214, %v1214
    %vm2266 = vcmp.ne.f32.partialorder %v1674, %v1674
    %vm2267 = vmor %vm2265, %vm2266
    %v2268 = vsel %vm2267, nan, %v2264
    %vm2269 = vcmp.lt.f32.partialorder %v1214, 0.0
    %v2270 = vsel %vm2269, 2.3561945, 0.7853982
    %vm2271 = vcmp.eq.s32.totalorder %v2218, inf
    %vm2272 = vcmp.eq.s32.totalorder %v2219, inf
    %vm2273 = vmand %vm2271, %vm2272
    %v2274 = vsel %vm2273, %v2270, %v2268
    %v2275 = vand.u32 2147483647, %v2274
    %v2276 = vand.u32 %v1674, 2147483648
    %v2277 = vor.u32 %v2275, %v2276
    %v2278 = vand.u32 2147483647, %v1215
    %v2279 = vand.u32 2147483647, %v1677
    %v2280 = vmin.f32 %v2278, %v2279
    %v2281 = vmax.f32 %v2278, %v2279
    %v2282 = vrcp.pop %v2281
    %v2283 = vmul.f32 %v2281, %v2282
    %v2284 = vsub.f32 1.0, %v2283
    %v2285 = vmul.f32 %v2282, %v2284
    %v2286 = vadd.f32 %v2282, %v2285
    %vm2287 = vweird.f32 %v2281
    %vm2288 = vweird.f32 %v2282
    %vm2289 = vmor %vm2287, %vm2288
    %v2290 = vsel %vm2289, %v2282, %v2286
    %v2291 = vand.u32 2147483647, %v2281
    %vm2292 = vcmp.eq.f32.partialorder %v2291, 8.507059e+37
    %v2293 = vand.u32 %v2281, 2147483648
    %v2294 = vor.u32 1.1754944e-38, %v2293
    %v2295 = vsel %vm2292, %v2294, %v2290
    %v2296 = vmul.f32 %v2280, %v2295
    %v2297 = vmul.f32 %v2296, %v2296
    %v2298 = vmul.f32 0.002785687, %v2297
    %v2299 = vadd.f32 %v2298, -0.015866
    %v2300 = vmul.f32 %v2299, %v2297
    %v2301 = vadd.f32 %v2300, 0.04247222
    %v2302 = vmul.f32 %v2301, %v2297
    %v2303 = vadd.f32 %v2302, -0.074975304
    %v2304 = vmul.f32 %v2303, %v2297
    %v2305 = vadd.f32 %v2304, 0.1064488
    %v2306 = vmul.f32 %v2305, %v2297
    %v2307 = vadd.f32 %v2306, -0.14207031
    %v2308 = vmul.f32 %v2307, %v2297
    %v2309 = vadd.f32 %v2308, 0.19993454
    %v2310 = vmul.f32 %v2309, %v2297
    %v2311 = vadd.f32 %v2310, -0.33333147
    %v2312 = vmul.f32 %v2311, %v2297
    %v2313 = vmul.f32 %v2312, %v2296
    %v2314 = vadd.f32 %v2313, %v2296
    %vm2315 = vcmp.gt.f32.partialorder %v2279, %v2278
    %v2316 = vsub.f32 1.5707964, %v2314
    %v2317 = vsel %vm2315, %v2316, %v2314
    %vm2318 = vcmp.lt.f32.partialorder %v1215, 0.0
    %v2319 = vsub.f32 3.1415927, %v2317
    %v2320 = vsel %vm2318, %v2319, %v2317
    %vm2321 = vcmp.lt.s32.totalorder %v1215, 0
    %v2322 = vsel %vm2321, 3.1415927, 0.0
    %vm2323 = vcmp.eq.f32.partialorder %v1677, 0.0
    %v2324 = vsel %vm2323, %v2322, %v2320
    %vm2325 = vcmp.ne.f32.partialorder %v1215, %v1215
    %vm2326 = vcmp.ne.f32.partialorder %v1677, %v1677
    %vm2327 = vmor %vm2325, %vm2326
    %v2328 = vsel %vm2327, nan, %v2324
    %vm2329 = vcmp.lt.f32.partialorder %v1215, 0.0
    %v2330 = vsel %vm2329, 2.3561945, 0.7853982
    %vm2331 = vcmp.eq.s32.totalorder %v2278, inf
    %vm2332 = vcmp.eq.s32.totalorder %v2279, inf
    %vm2333 = vmand %vm2331, %vm2332
    %v2334 = vsel %vm2333, %v2330, %v2328
    %v2335 = vand.u32 2147483647, %v2334
    %v2336 = vand.u32 %v1677, 2147483648
    %v2337 = vor.u32 %v2335, %v2336
    %v2338 = vand.u32 2147483647, %v1216
    %v2339 = vand.u32 2147483647, %v1697
    %v2340 = vmin.f32 %v2338, %v2339
    %v2341 = vmax.f32 %v2338, %v2339
    %v2342 = vrcp.pop %v2341
    %v2343 = vmul.f32 %v2341, %v2342
    %v2344 = vsub.f32 1.0, %v2343
    %v2345 = vmul.f32 %v2342, %v2344
    %v2346 = vadd.f32 %v2342, %v2345
    %vm2347 = vweird.f32 %v2341
    %vm2348 = vweird.f32 %v2342
    %vm2349 = vmor %vm2347, %vm2348
    %v2350 = vsel %vm2349, %v2342, %v2346
    %v2351 = vand.u32 2147483647, %v2341
    %vm2352 = vcmp.eq.f32.partialorder %v2351, 8.507059e+37
    %v2353 = vand.u32 %v2341, 2147483648
    %v2354 = vor.u32 1.1754944e-38, %v2353
    %v2355 = vsel %vm2352, %v2354, %v2350
    %v2356 = vmul.f32 %v2340, %v2355
    %v2357 = vmul.f32 %v2356, %v2356
    %v2358 = vmul.f32 0.002785687, %v2357
    %v2359 = vadd.f32 %v2358, -0.015866
    %v2360 = vmul.f32 %v2359, %v2357
    %v2361 = vadd.f32 %v2360, 0.04247222
    %v2362 = vmul.f32 %v2361, %v2357
    %v2363 = vadd.f32 %v2362, -0.074975304
    %v2364 = vmul.f32 %v2363, %v2357
    %v2365 = vadd.f32 %v2364, 0.1064488
    %v2366 = vmul.f32 %v2365, %v2357
    %v2367 = vadd.f32 %v2366, -0.14207031
    %v2368 = vmul.f32 %v2367, %v2357
    %v2369 = vadd.f32 %v2368, 0.19993454
    %v2370 = vmul.f32 %v2369, %v2357
    %v2371 = vadd.f32 %v2370, -0.33333147
    %v2372 = vmul.f32 %v2371, %v2357
    %v2373 = vmul.f32 %v2372, %v2356
    %v2374 = vadd.f32 %v2373, %v2356
    %vm2375 = vcmp.gt.f32.partialorder %v2339, %v2338
    %v2376 = vsub.f32 1.5707964, %v2374
    %v2377 = vsel %vm2375, %v2376, %v2374
    %vm2378 = vcmp.lt.f32.partialorder %v1216, 0.0
    %v2379 = vsub.f32 3.1415927, %v2377
    %v2380 = vsel %vm2378, %v2379, %v2377
    %vm2381 = vcmp.lt.s32.totalorder %v1216, 0
    %v2382 = vsel %vm2381, 3.1415927, 0.0
    %vm2383 = vcmp.eq.f32.partialorder %v1697, 0.0
    %v2384 = vsel %vm2383, %v2382, %v2380
    %vm2385 = vcmp.ne.f32.partialorder %v1216, %v1216
    %vm2386 = vcmp.ne.f32.partialorder %v1697, %v1697
    %vm2387 = vmor %vm2385, %vm2386
    %v2388 = vsel %vm2387, nan, %v2384
    %vm2389 = vcmp.lt.f32.partialorder %v1216, 0.0
    %v2390 = vsel %vm2389, 2.3561945, 0.7853982
    %vm2391 = vcmp.eq.s32.totalorder %v2338, inf
    %vm2392 = vcmp.eq.s32.totalorder %v2339, inf
    %vm2393 = vmand %vm2391, %vm2392
    %v2394 = vsel %vm2393, %v2390, %v2388
    %v2395 = vand.u32 2147483647, %v2394
    %v2396 = vand.u32 %v1697, 2147483648
    %v2397 = vor.u32 %v2395, %v2396
    %v2398 = vand.u32 2147483647, %v1217
    %v2399 = vand.u32 2147483647, %v1700
    %v2400 = vmin.f32 %v2398, %v2399
    %v2401 = vmax.f32 %v2398, %v2399
    %v2402 = vrcp.pop %v2401
    %v2403 = vmul.f32 %v2401, %v2402
    %v2404 = vsub.f32 1.0, %v2403
    %v2405 = vmul.f32 %v2402, %v2404
    %v2406 = vadd.f32 %v2402, %v2405
    %vm2407 = vweird.f32 %v2401
    %vm2408 = vweird.f32 %v2402
    %vm2409 = vmor %vm2407, %vm2408
    %v2410 = vsel %vm2409, %v2402, %v2406
    %v2411 = vand.u32 2147483647, %v2401
    %vm2412 = vcmp.eq.f32.partialorder %v2411, 8.507059e+37
    %v2413 = vand.u32 %v2401, 2147483648
    %v2414 = vor.u32 1.1754944e-38, %v2413
    %v2415 = vsel %vm2412, %v2414, %v2410
    %v2416 = vmul.f32 %v2400, %v2415
    %v2417 = vmul.f32 %v2416, %v2416
    %v2418 = vmul.f32 0.002785687, %v2417
    %v2419 = vadd.f32 %v2418, -0.015866
    %v2420 = vmul.f32 %v2419, %v2417
    %v2421 = vadd.f32 %v2420, 0.04247222
    %v2422 = vmul.f32 %v2421, %v2417
    %v2423 = vadd.f32 %v2422, -0.074975304
    %v2424 = vmul.f32 %v2423, %v2417
    %v2425 = vadd.f32 %v2424, 0.1064488
    %v2426 = vmul.f32 %v2425, %v2417
    %v2427 = vadd.f32 %v2426, -0.14207031
    %v2428 = vmul.f32 %v2427, %v2417
    %v2429 = vadd.f32 %v2428, 0.19993454
    %v2430 = vmul.f32 %v2429, %v2417
    %v2431 = vadd.f32 %v2430, -0.33333147
    %v2432 = vmul.f32 %v2431, %v2417
    %v2433 = vmul.f32 %v2432, %v2416
    %v2434 = vadd.f32 %v2433, %v2416
    %vm2435 = vcmp.gt.f32.partialorder %v2399, %v2398
    %v2436 = vsub.f32 1.5707964, %v2434
    %v2437 = vsel %vm2435, %v2436, %v2434
    %vm2438 = vcmp.lt.f32.partialorder %v1217, 0.0
    %v2439 = vsub.f32 3.1415927, %v2437
    %v2440 = vsel %vm2438, %v2439, %v2437
    %vm2441 = vcmp.lt.s32.totalorder %v1217, 0
    %v2442 = vsel %vm2441, 3.1415927, 0.0
    %vm2443 = vcmp.eq.f32.partialorder %v1700, 0.0
    %v2444 = vsel %vm2443, %v2442, %v2440
    %vm2445 = vcmp.ne.f32.partialorder %v1217, %v1217
    %vm2446 = vcmp.ne.f32.partialorder %v1700, %v1700
    %vm2447 = vmor %vm2445, %vm2446
    %v2448 = vsel %vm2447, nan, %v2444
    %vm2449 = vcmp.lt.f32.partialorder %v1217, 0.0
    %v2450 = vsel %vm2449, 2.3561945, 0.7853982
    %vm2451 = vcmp.eq.s32.totalorder %v2398, inf
    %vm2452 = vcmp.eq.s32.totalorder %v2399, inf
    %vm2453 = vmand %vm2451, %vm2452
    %v2454 = vsel %vm2453, %v2450, %v2448
    %v2455 = vand.u32 2147483647, %v2454
    %v2456 = vand.u32 %v1700, 2147483648
    %v2457 = vor.u32 %v2455, %v2456
    %v2458 = vand.u32 2147483647, %v1218
    %v2459 = vand.u32 2147483647, %v1720
    %v2460 = vmin.f32 %v2458, %v2459
    %v2461 = vmax.f32 %v2458, %v2459
    %v2462 = vrcp.pop %v2461
    %v2463 = vmul.f32 %v2461, %v2462
    %v2464 = vsub.f32 1.0, %v2463
    %v2465 = vmul.f32 %v2462, %v2464
    %v2466 = vadd.f32 %v2462, %v2465
    %vm2467 = vweird.f32 %v2461
    %vm2468 = vweird.f32 %v2462
    %vm2469 = vmor %vm2467, %vm2468
    %v2470 = vsel %vm2469, %v2462, %v2466
    %v2471 = vand.u32 2147483647, %v2461
    %vm2472 = vcmp.eq.f32.partialorder %v2471, 8.507059e+37
    %v2473 = vand.u32 %v2461, 2147483648
    %v2474 = vor.u32 1.1754944e-38, %v2473
    %v2475 = vsel %vm2472, %v2474, %v2470
    %v2476 = vmul.f32 %v2460, %v2475
    %v2477 = vmul.f32 %v2476, %v2476
    %v2478 = vmul.f32 0.002785687, %v2477
    %v2479 = vadd.f32 %v2478, -0.015866
    %v2480 = vmul.f32 %v2479, %v2477
    %v2481 = vadd.f32 %v2480, 0.04247222
    %v2482 = vmul.f32 %v2481, %v2477
    %v2483 = vadd.f32 %v2482, -0.074975304
    %v2484 = vmul.f32 %v2483, %v2477
    %v2485 = vadd.f32 %v2484, 0.1064488
    %v2486 = vmul.f32 %v2485, %v2477
    %v2487 = vadd.f32 %v2486, -0.14207031
    %v2488 = vmul.f32 %v2487, %v2477
    %v2489 = vadd.f32 %v2488, 0.19993454
    %v2490 = vmul.f32 %v2489, %v2477
    %v2491 = vadd.f32 %v2490, -0.33333147
    %v2492 = vmul.f32 %v2491, %v2477
    %v2493 = vmul.f32 %v2492, %v2476
    %v2494 = vadd.f32 %v2493, %v2476
    %vm2495 = vcmp.gt.f32.partialorder %v2459, %v2458
    %v2496 = vsub.f32 1.5707964, %v2494
    %v2497 = vsel %vm2495, %v2496, %v2494
    %vm2498 = vcmp.lt.f32.partialorder %v1218, 0.0
    %v2499 = vsub.f32 3.1415927, %v2497
    %v2500 = vsel %vm2498, %v2499, %v2497
    %vm2501 = vcmp.lt.s32.totalorder %v1218, 0
    %v2502 = vsel %vm2501, 3.1415927, 0.0
    %vm2503 = vcmp.eq.f32.partialorder %v1720, 0.0
    %v2504 = vsel %vm2503, %v2502, %v2500
    %vm2505 = vcmp.ne.f32.partialorder %v1218, %v1218
    %vm2506 = vcmp.ne.f32.partialorder %v1720, %v1720
    %vm2507 = vmor %vm2505, %vm2506
    %v2508 = vsel %vm2507, nan, %v2504
    %vm2509 = vcmp.lt.f32.partialorder %v1218, 0.0
    %v2510 = vsel %vm2509, 2.3561945, 0.7853982
    %vm2511 = vcmp.eq.s32.totalorder %v2458, inf
    %vm2512 = vcmp.eq.s32.totalorder %v2459, inf
    %vm2513 = vmand %vm2511, %vm2512
    %v2514 = vsel %vm2513, %v2510, %v2508
    %v2515 = vand.u32 2147483647, %v2514
    %v2516 = vand.u32 %v1720, 2147483648
    %v2517 = vor.u32 %v2515, %v2516
    %v2518 = vand.u32 2147483647, %v1219
    %v2519 = vand.u32 2147483647, %v1723
    %v2520 = vmin.f32 %v2518, %v2519
    %v2521 = vmax.f32 %v2518, %v2519
    %v2522 = vrcp.pop %v2521
    %v2523 = vmul.f32 %v2521, %v2522
    %v2524 = vsub.f32 1.0, %v2523
    %v2525 = vmul.f32 %v2522, %v2524
    %v2526 = vadd.f32 %v2522, %v2525
    %vm2527 = vweird.f32 %v2521
    %vm2528 = vweird.f32 %v2522
    %vm2529 = vmor %vm2527, %vm2528
    %v2530 = vsel %vm2529, %v2522, %v2526
    %v2531 = vand.u32 2147483647, %v2521
    %vm2532 = vcmp.eq.f32.partialorder %v2531, 8.507059e+37
    %v2533 = vand.u32 %v2521, 2147483648
    %v2534 = vor.u32 1.1754944e-38, %v2533
    %v2535 = vsel %vm2532, %v2534, %v2530
    %v2536 = vmul.f32 %v2520, %v2535
    %v2537 = vmul.f32 %v2536, %v2536
    %v2538 = vmul.f32 0.002785687, %v2537
    %v2539 = vadd.f32 %v2538, -0.015866
    %v2540 = vmul.f32 %v2539, %v2537
    %v2541 = vadd.f32 %v2540, 0.04247222
    %v2542 = vmul.f32 %v2541, %v2537
    %v2543 = vadd.f32 %v2542, -0.074975304
    %v2544 = vmul.f32 %v2543, %v2537
    %v2545 = vadd.f32 %v2544, 0.1064488
    %v2546 = vmul.f32 %v2545, %v2537
    %v2547 = vadd.f32 %v2546, -0.14207031
    %v2548 = vmul.f32 %v2547, %v2537
    %v2549 = vadd.f32 %v2548, 0.19993454
    %v2550 = vmul.f32 %v2549, %v2537
    %v2551 = vadd.f32 %v2550, -0.33333147
    %v2552 = vmul.f32 %v2551, %v2537
    %v2553 = vmul.f32 %v2552, %v2536
    %v2554 = vadd.f32 %v2553, %v2536
    %vm2555 = vcmp.gt.f32.partialorder %v2519, %v2518
    %v2556 = vsub.f32 1.5707964, %v2554
    %v2557 = vsel %vm2555, %v2556, %v2554
    %vm2558 = vcmp.lt.f32.partialorder %v1219, 0.0
    %v2559 = vsub.f32 3.1415927, %v2557
    %v2560 = vsel %vm2558, %v2559, %v2557
    %vm2561 = vcmp.lt.s32.totalorder %v1219, 0
    %v2562 = vsel %vm2561, 3.1415927, 0.0
    %vm2563 = vcmp.eq.f32.partialorder %v1723, 0.0
    %v2564 = vsel %vm2563, %v2562, %v2560
    %vm2565 = vcmp.ne.f32.partialorder %v1219, %v1219
    %vm2566 = vcmp.ne.f32.partialorder %v1723, %v1723
    %vm2567 = vmor %vm2565, %vm2566
    %v2568 = vsel %vm2567, nan, %v2564
    %vm2569 = vcmp.lt.f32.partialorder %v1219, 0.0
    %v2570 = vsel %vm2569, 2.3561945, 0.7853982
    %vm2571 = vcmp.eq.s32.totalorder %v2518, inf
    %vm2572 = vcmp.eq.s32.totalorder %v2519, inf
    %vm2573 = vmand %vm2571, %vm2572
    %v2574 = vsel %vm2573, %v2570, %v2568
    %v2575 = vand.u32 2147483647, %v2574
    %v2576 = vand.u32 %v1723, 2147483648
    %v2577 = vor.u32 %v2575, %v2576
    %v2578 = vand.u32 2147483647, %v1220
    %v2579 = vand.u32 2147483647, %v1743
    %v2580 = vmin.f32 %v2578, %v2579
    %v2581 = vmax.f32 %v2578, %v2579
    %v2582 = vrcp.pop %v2581
    %v2583 = vmul.f32 %v2581, %v2582
    %v2584 = vsub.f32 1.0, %v2583
    %v2585 = vmul.f32 %v2582, %v2584
    %v2586 = vadd.f32 %v2582, %v2585
    %vm2587 = vweird.f32 %v2581
    %vm2588 = vweird.f32 %v2582
    %vm2589 = vmor %vm2587, %vm2588
    %v2590 = vsel %vm2589, %v2582, %v2586
    %v2591 = vand.u32 2147483647, %v2581
    %vm2592 = vcmp.eq.f32.partialorder %v2591, 8.507059e+37
    %v2593 = vand.u32 %v2581, 2147483648
    %v2594 = vor.u32 1.1754944e-38, %v2593
    %v2595 = vsel %vm2592, %v2594, %v2590
    %v2596 = vmul.f32 %v2580, %v2595
    %v2597 = vmul.f32 %v2596, %v2596
    %v2598 = vmul.f32 0.002785687, %v2597
    %v2599 = vadd.f32 %v2598, -0.015866
    %v2600 = vmul.f32 %v2599, %v2597
    %v2601 = vadd.f32 %v2600, 0.04247222
    %v2602 = vmul.f32 %v2601, %v2597
    %v2603 = vadd.f32 %v2602, -0.074975304
    %v2604 = vmul.f32 %v2603, %v2597
    %v2605 = vadd.f32 %v2604, 0.1064488
    %v2606 = vmul.f32 %v2605, %v2597
    %v2607 = vadd.f32 %v2606, -0.14207031
    %v2608 = vmul.f32 %v2607, %v2597
    %v2609 = vadd.f32 %v2608, 0.19993454
    %v2610 = vmul.f32 %v2609, %v2597
    %v2611 = vadd.f32 %v2610, -0.33333147
    %v2612 = vmul.f32 %v2611, %v2597
    %v2613 = vmul.f32 %v2612, %v2596
    %v2614 = vadd.f32 %v2613, %v2596
    %vm2615 = vcmp.gt.f32.partialorder %v2579, %v2578
    %v2616 = vsub.f32 1.5707964, %v2614
    %v2617 = vsel %vm2615, %v2616, %v2614
    %vm2618 = vcmp.lt.f32.partialorder %v1220, 0.0
    %v2619 = vsub.f32 3.1415927, %v2617
    %v2620 = vsel %vm2618, %v2619, %v2617
    %vm2621 = vcmp.lt.s32.totalorder %v1220, 0
    %v2622 = vsel %vm2621, 3.1415927, 0.0
    %vm2623 = vcmp.eq.f32.partialorder %v1743, 0.0
    %v2624 = vsel %vm2623, %v2622, %v2620
    %vm2625 = vcmp.ne.f32.partialorder %v1220, %v1220
    %vm2626 = vcmp.ne.f32.partialorder %v1743, %v1743
    %vm2627 = vmor %vm2625, %vm2626
    %v2628 = vsel %vm2627, nan, %v2624
    %vm2629 = vcmp.lt.f32.partialorder %v1220, 0.0
    %v2630 = vsel %vm2629, 2.3561945, 0.7853982
    %vm2631 = vcmp.eq.s32.totalorder %v2578, inf
    %vm2632 = vcmp.eq.s32.totalorder %v2579, inf
    %vm2633 = vmand %vm2631, %vm2632
    %v2634 = vsel %vm2633, %v2630, %v2628
    %v2635 = vand.u32 2147483647, %v2634
    %v2636 = vand.u32 %v1743, 2147483648
    %v2637 = vor.u32 %v2635, %v2636
    %v2638 = vand.u32 2147483647, %v1221
    %v2639 = vand.u32 2147483647, %v1746
    %v2640 = vmin.f32 %v2638, %v2639
    %v2641 = vmax.f32 %v2638, %v2639
    %v2642 = vrcp.pop %v2641
    %v2643 = vmul.f32 %v2641, %v2642
    %v2644 = vsub.f32 1.0, %v2643
    %v2645 = vmul.f32 %v2642, %v2644
    %v2646 = vadd.f32 %v2642, %v2645
    %vm2647 = vweird.f32 %v2641
    %vm2648 = vweird.f32 %v2642
    %vm2649 = vmor %vm2647, %vm2648
    %v2650 = vsel %vm2649, %v2642, %v2646
    %v2651 = vand.u32 2147483647, %v2641
    %vm2652 = vcmp.eq.f32.partialorder %v2651, 8.507059e+37
    %v2653 = vand.u32 %v2641, 2147483648
    %v2654 = vor.u32 1.1754944e-38, %v2653
    %v2655 = vsel %vm2652, %v2654, %v2650
    %v2656 = vmul.f32 %v2640, %v2655
    %v2657 = vmul.f32 %v2656, %v2656
    %v2658 = vmul.f32 0.002785687, %v2657
    %v2659 = vadd.f32 %v2658, -0.015866
    %v2660 = vmul.f32 %v2659, %v2657
    %v2661 = vadd.f32 %v2660, 0.04247222
    %v2662 = vmul.f32 %v2661, %v2657
    %v2663 = vadd.f32 %v2662, -0.074975304
    %v2664 = vmul.f32 %v2663, %v2657
    %v2665 = vadd.f32 %v2664, 0.1064488
    %v2666 = vmul.f32 %v2665, %v2657
    %v2667 = vadd.f32 %v2666, -0.14207031
    %v2668 = vmul.f32 %v2667, %v2657
    %v2669 = vadd.f32 %v2668, 0.19993454
    %v2670 = vmul.f32 %v2669, %v2657
    %v2671 = vadd.f32 %v2670, -0.33333147
    %v2672 = vmul.f32 %v2671, %v2657
    %v2673 = vmul.f32 %v2672, %v2656
    %v2674 = vadd.f32 %v2673, %v2656
    %vm2675 = vcmp.gt.f32.partialorder %v2639, %v2638
    %v2676 = vsub.f32 1.5707964, %v2674
    %v2677 = vsel %vm2675, %v2676, %v2674
    %vm2678 = vcmp.lt.f32.partialorder %v1221, 0.0
    %v2679 = vsub.f32 3.1415927, %v2677
    %v2680 = vsel %vm2678, %v2679, %v2677
    %vm2681 = vcmp.lt.s32.totalorder %v1221, 0
    %v2682 = vsel %vm2681, 3.1415927, 0.0
    %vm2683 = vcmp.eq.f32.partialorder %v1746, 0.0
    %v2684 = vsel %vm2683, %v2682, %v2680
    %vm2685 = vcmp.ne.f32.partialorder %v1221, %v1221
    %vm2686 = vcmp.ne.f32.partialorder %v1746, %v1746
    %vm2687 = vmor %vm2685, %vm2686
    %v2688 = vsel %vm2687, nan, %v2684
    %vm2689 = vcmp.lt.f32.partialorder %v1221, 0.0
    %v2690 = vsel %vm2689, 2.3561945, 0.7853982
    %vm2691 = vcmp.eq.s32.totalorder %v2638, inf
    %vm2692 = vcmp.eq.s32.totalorder %v2639, inf
    %vm2693 = vmand %vm2691, %vm2692
    %v2694 = vsel %vm2693, %v2690, %v2688
    %v2695 = vand.u32 2147483647, %v2694
    %v2696 = vand.u32 %v1746, 2147483648
    %v2697 = vor.u32 %v2695, %v2696
    %v2698 = vand.u32 2147483647, %v1222
    %v2699 = vand.u32 2147483647, %v1766
    %v2700 = vmin.f32 %v2698, %v2699
    %v2701 = vmax.f32 %v2698, %v2699
    %v2702 = vrcp.pop %v2701
    %v2703 = vmul.f32 %v2701, %v2702
    %v2704 = vsub.f32 1.0, %v2703
    %v2705 = vmul.f32 %v2702, %v2704
    %v2706 = vadd.f32 %v2702, %v2705
    %vm2707 = vweird.f32 %v2701
    %vm2708 = vweird.f32 %v2702
    %vm2709 = vmor %vm2707, %vm2708
    %v2710 = vsel %vm2709, %v2702, %v2706
    %v2711 = vand.u32 2147483647, %v2701
    %vm2712 = vcmp.eq.f32.partialorder %v2711, 8.507059e+37
    %v2713 = vand.u32 %v2701, 2147483648
    %v2714 = vor.u32 1.1754944e-38, %v2713
    %v2715 = vsel %vm2712, %v2714, %v2710
    %v2716 = vmul.f32 %v2700, %v2715
    %v2717 = vmul.f32 %v2716, %v2716
    %v2718 = vmul.f32 0.002785687, %v2717
    %v2719 = vadd.f32 %v2718, -0.015866
    %v2720 = vmul.f32 %v2719, %v2717
    %v2721 = vadd.f32 %v2720, 0.04247222
    %v2722 = vmul.f32 %v2721, %v2717
    %v2723 = vadd.f32 %v2722, -0.074975304
    %v2724 = vmul.f32 %v2723, %v2717
    %v2725 = vadd.f32 %v2724, 0.1064488
    %v2726 = vmul.f32 %v2725, %v2717
    %v2727 = vadd.f32 %v2726, -0.14207031
    %v2728 = vmul.f32 %v2727, %v2717
    %v2729 = vadd.f32 %v2728, 0.19993454
    %v2730 = vmul.f32 %v2729, %v2717
    %v2731 = vadd.f32 %v2730, -0.33333147
    %v2732 = vmul.f32 %v2731, %v2717
    %v2733 = vmul.f32 %v2732, %v2716
    %v2734 = vadd.f32 %v2733, %v2716
    %vm2735 = vcmp.gt.f32.partialorder %v2699, %v2698
    %v2736 = vsub.f32 1.5707964, %v2734
    %v2737 = vsel %vm2735, %v2736, %v2734
    %vm2738 = vcmp.lt.f32.partialorder %v1222, 0.0
    %v2739 = vsub.f32 3.1415927, %v2737
    %v2740 = vsel %vm2738, %v2739, %v2737
    %vm2741 = vcmp.lt.s32.totalorder %v1222, 0
    %v2742 = vsel %vm2741, 3.1415927, 0.0
    %vm2743 = vcmp.eq.f32.partialorder %v1766, 0.0
    %v2744 = vsel %vm2743, %v2742, %v2740
    %vm2745 = vcmp.ne.f32.partialorder %v1222, %v1222
    %vm2746 = vcmp.ne.f32.partialorder %v1766, %v1766
    %vm2747 = vmor %vm2745, %vm2746
    %v2748 = vsel %vm2747, nan, %v2744
    %vm2749 = vcmp.lt.f32.partialorder %v1222, 0.0
    %v2750 = vsel %vm2749, 2.3561945, 0.7853982
    %vm2751 = vcmp.eq.s32.totalorder %v2698, inf
    %vm2752 = vcmp.eq.s32.totalorder %v2699, inf
    %vm2753 = vmand %vm2751, %vm2752
    %v2754 = vsel %vm2753, %v2750, %v2748
    %v2755 = vand.u32 2147483647, %v2754
    %v2756 = vand.u32 %v1766, 2147483648
    %v2757 = vor.u32 %v2755, %v2756
    %v2758 = vand.u32 2147483647, %v1223
    %v2759 = vand.u32 2147483647, %v1769
    %v2760 = vmin.f32 %v2758, %v2759
    %v2761 = vmax.f32 %v2758, %v2759
    %v2762 = vrcp.pop %v2761
    %v2763 = vmul.f32 %v2761, %v2762
    %v2764 = vsub.f32 1.0, %v2763
    %v2765 = vmul.f32 %v2762, %v2764
    %v2766 = vadd.f32 %v2762, %v2765
    %vm2767 = vweird.f32 %v2761
    %vm2768 = vweird.f32 %v2762
    %vm2769 = vmor %vm2767, %vm2768
    %v2770 = vsel %vm2769, %v2762, %v2766
    %v2771 = vand.u32 2147483647, %v2761
    %vm2772 = vcmp.eq.f32.partialorder %v2771, 8.507059e+37
    %v2773 = vand.u32 %v2761, 2147483648
    %v2774 = vor.u32 1.1754944e-38, %v2773
    %v2775 = vsel %vm2772, %v2774, %v2770
    %v2776 = vmul.f32 %v2760, %v2775
    %v2777 = vmul.f32 %v2776, %v2776
    %v2778 = vmul.f32 0.002785687, %v2777
    %v2779 = vadd.f32 %v2778, -0.015866
    %v2780 = vmul.f32 %v2779, %v2777
    %v2781 = vadd.f32 %v2780, 0.04247222
    %v2782 = vmul.f32 %v2781, %v2777
    %v2783 = vadd.f32 %v2782, -0.074975304
    %v2784 = vmul.f32 %v2783, %v2777
    %v2785 = vadd.f32 %v2784, 0.1064488
    %v2786 = vmul.f32 %v2785, %v2777
    %v2787 = vadd.f32 %v2786, -0.14207031
    %v2788 = vmul.f32 %v2787, %v2777
    %v2789 = vadd.f32 %v2788, 0.19993454
    %v2790 = vmul.f32 %v2789, %v2777
    %v2791 = vadd.f32 %v2790, -0.33333147
    %v2792 = vmul.f32 %v2791, %v2777
    %v2793 = vmul.f32 %v2792, %v2776
    %v2794 = vadd.f32 %v2793, %v2776
    %vm2795 = vcmp.gt.f32.partialorder %v2759, %v2758
    %v2796 = vsub.f32 1.5707964, %v2794
    %v2797 = vsel %vm2795, %v2796, %v2794
    %vm2798 = vcmp.lt.f32.partialorder %v1223, 0.0
    %v2799 = vsub.f32 3.1415927, %v2797
    %v2800 = vsel %vm2798, %v2799, %v2797
    %vm2801 = vcmp.lt.s32.totalorder %v1223, 0
    %v2802 = vsel %vm2801, 3.1415927, 0.0
    %vm2803 = vcmp.eq.f32.partialorder %v1769, 0.0
    %v2804 = vsel %vm2803, %v2802, %v2800
    %vm2805 = vcmp.ne.f32.partialorder %v1223, %v1223
    %vm2806 = vcmp.ne.f32.partialorder %v1769, %v1769
    %vm2807 = vmor %vm2805, %vm2806
    %v2808 = vsel %vm2807, nan, %v2804
    %vm2809 = vcmp.lt.f32.partialorder %v1223, 0.0
    %v2810 = vsel %vm2809, 2.3561945, 0.7853982
    %vm2811 = vcmp.eq.s32.totalorder %v2758, inf
    %vm2812 = vcmp.eq.s32.totalorder %v2759, inf
    %vm2813 = vmand %vm2811, %vm2812
    %v2814 = vsel %vm2813, %v2810, %v2808
    %v2815 = vand.u32 2147483647, %v2814
    %v2816 = vand.u32 %v1769, 2147483648
    %v2817 = vor.u32 %v2815, %v2816
    %v2818 = vand.u32 2147483647, %v1224
    %v2819 = vand.u32 2147483647, %v1789
    %v2820 = vmin.f32 %v2818, %v2819
    %v2821 = vmax.f32 %v2818, %v2819
    %v2822 = vrcp.pop %v2821
    %v2823 = vmul.f32 %v2821, %v2822
    %v2824 = vsub.f32 1.0, %v2823
    %v2825 = vmul.f32 %v2822, %v2824
    %v2826 = vadd.f32 %v2822, %v2825
    %vm2827 = vweird.f32 %v2821
    %vm2828 = vweird.f32 %v2822
    %vm2829 = vmor %vm2827, %vm2828
    %v2830 = vsel %vm2829, %v2822, %v2826
    %v2831 = vand.u32 2147483647, %v2821
    %vm2832 = vcmp.eq.f32.partialorder %v2831, 8.507059e+37
    %v2833 = vand.u32 %v2821, 2147483648
    %v2834 = vor.u32 1.1754944e-38, %v2833
    %v2835 = vsel %vm2832, %v2834, %v2830
    %v2836 = vmul.f32 %v2820, %v2835
    %v2837 = vmul.f32 %v2836, %v2836
    %v2838 = vmul.f32 0.002785687, %v2837
    %v2839 = vadd.f32 %v2838, -0.015866
    %v2840 = vmul.f32 %v2839, %v2837
    %v2841 = vadd.f32 %v2840, 0.04247222
    %v2842 = vmul.f32 %v2841, %v2837
    %v2843 = vadd.f32 %v2842, -0.074975304
    %v2844 = vmul.f32 %v2843, %v2837
    %v2845 = vadd.f32 %v2844, 0.1064488
    %v2846 = vmul.f32 %v2845, %v2837
    %v2847 = vadd.f32 %v2846, -0.14207031
    %v2848 = vmul.f32 %v2847, %v2837
    %v2849 = vadd.f32 %v2848, 0.19993454
    %v2850 = vmul.f32 %v2849, %v2837
    %v2851 = vadd.f32 %v2850, -0.33333147
    %v2852 = vmul.f32 %v2851, %v2837
    %v2853 = vmul.f32 %v2852, %v2836
    %v2854 = vadd.f32 %v2853, %v2836
    %vm2855 = vcmp.gt.f32.partialorder %v2819, %v2818
    %v2856 = vsub.f32 1.5707964, %v2854
    %v2857 = vsel %vm2855, %v2856, %v2854
    %vm2858 = vcmp.lt.f32.partialorder %v1224, 0.0
    %v2859 = vsub.f32 3.1415927, %v2857
    %v2860 = vsel %vm2858, %v2859, %v2857
    %vm2861 = vcmp.lt.s32.totalorder %v1224, 0
    %v2862 = vsel %vm2861, 3.1415927, 0.0
    %vm2863 = vcmp.eq.f32.partialorder %v1789, 0.0
    %v2864 = vsel %vm2863, %v2862, %v2860
    %vm2865 = vcmp.ne.f32.partialorder %v1224, %v1224
    %vm2866 = vcmp.ne.f32.partialorder %v1789, %v1789
    %vm2867 = vmor %vm2865, %vm2866
    %v2868 = vsel %vm2867, nan, %v2864
    %vm2869 = vcmp.lt.f32.partialorder %v1224, 0.0
    %v2870 = vsel %vm2869, 2.3561945, 0.7853982
    %vm2871 = vcmp.eq.s32.totalorder %v2818, inf
    %vm2872 = vcmp.eq.s32.totalorder %v2819, inf
    %vm2873 = vmand %vm2871, %vm2872
    %v2874 = vsel %vm2873, %v2870, %v2868
    %v2875 = vand.u32 2147483647, %v2874
    %v2876 = vand.u32 %v1789, 2147483648
    %v2877 = vor.u32 %v2875, %v2876
    %v2878 = vand.u32 2147483647, %v1225
    %v2879 = vand.u32 2147483647, %v1792
    %v2880 = vmin.f32 %v2878, %v2879
    %v2881 = vmax.f32 %v2878, %v2879
    %v2882 = vrcp.pop %v2881
    %v2883 = vmul.f32 %v2881, %v2882
    %v2884 = vsub.f32 1.0, %v2883
    %v2885 = vmul.f32 %v2882, %v2884
    %v2886 = vadd.f32 %v2882, %v2885
    %vm2887 = vweird.f32 %v2881
    %vm2888 = vweird.f32 %v2882
    %vm2889 = vmor %vm2887, %vm2888
    %v2890 = vsel %vm2889, %v2882, %v2886
    %v2891 = vand.u32 2147483647, %v2881
    %vm2892 = vcmp.eq.f32.partialorder %v2891, 8.507059e+37
    %v2893 = vand.u32 %v2881, 2147483648
    %v2894 = vor.u32 1.1754944e-38, %v2893
    %v2895 = vsel %vm2892, %v2894, %v2890
    %v2896 = vmul.f32 %v2880, %v2895
    %v2897 = vmul.f32 %v2896, %v2896
    %v2898 = vmul.f32 0.002785687, %v2897
    %v2899 = vadd.f32 %v2898, -0.015866
    %v2900 = vmul.f32 %v2899, %v2897
    %v2901 = vadd.f32 %v2900, 0.04247222
    %v2902 = vmul.f32 %v2901, %v2897
    %v2903 = vadd.f32 %v2902, -0.074975304
    %v2904 = vmul.f32 %v2903, %v2897
    %v2905 = vadd.f32 %v2904, 0.1064488
    %v2906 = vmul.f32 %v2905, %v2897
    %v2907 = vadd.f32 %v2906, -0.14207031
    %v2908 = vmul.f32 %v2907, %v2897
    %v2909 = vadd.f32 %v2908, 0.19993454
    %v2910 = vmul.f32 %v2909, %v2897
    %v2911 = vadd.f32 %v2910, -0.33333147
    %v2912 = vmul.f32 %v2911, %v2897
    %v2913 = vmul.f32 %v2912, %v2896
    %v2914 = vadd.f32 %v2913, %v2896
    %vm2915 = vcmp.gt.f32.partialorder %v2879, %v2878
    %v2916 = vsub.f32 1.5707964, %v2914
    %v2917 = vsel %vm2915, %v2916, %v2914
    %vm2918 = vcmp.lt.f32.partialorder %v1225, 0.0
    %v2919 = vsub.f32 3.1415927, %v2917
    %v2920 = vsel %vm2918, %v2919, %v2917
    %vm2921 = vcmp.lt.s32.totalorder %v1225, 0
    %v2922 = vsel %vm2921, 3.1415927, 0.0
    %vm2923 = vcmp.eq.f32.partialorder %v1792, 0.0
    %v2924 = vsel %vm2923, %v2922, %v2920
    %vm2925 = vcmp.ne.f32.partialorder %v1225, %v1225
    %vm2926 = vcmp.ne.f32.partialorder %v1792, %v1792
    %vm2927 = vmor %vm2925, %vm2926
    %v2928 = vsel %vm2927, nan, %v2924
    %vm2929 = vcmp.lt.f32.partialorder %v1225, 0.0
    %v2930 = vsel %vm2929, 2.3561945, 0.7853982
    %vm2931 = vcmp.eq.s32.totalorder %v2878, inf
    %vm2932 = vcmp.eq.s32.totalorder %v2879, inf
    %vm2933 = vmand %vm2931, %vm2932
    %v2934 = vsel %vm2933, %v2930, %v2928
    %v2935 = vand.u32 2147483647, %v2934
    %v2936 = vand.u32 %v1792, 2147483648
    %v2937 = vor.u32 %v2935, %v2936
    %v2938 = vand.u32 2147483647, %v1226
    %v2939 = vand.u32 2147483647, %v1812
    %v2940 = vmin.f32 %v2938, %v2939
    %v2941 = vmax.f32 %v2938, %v2939
    %v2942 = vrcp.pop %v2941
    %v2943 = vmul.f32 %v2941, %v2942
    %v2944 = vsub.f32 1.0, %v2943
    %v2945 = vmul.f32 %v2942, %v2944
    %v2946 = vadd.f32 %v2942, %v2945
    %vm2947 = vweird.f32 %v2941
    %vm2948 = vweird.f32 %v2942
    %vm2949 = vmor %vm2947, %vm2948
    %v2950 = vsel %vm2949, %v2942, %v2946
    %v2951 = vand.u32 2147483647, %v2941
    %vm2952 = vcmp.eq.f32.partialorder %v2951, 8.507059e+37
    %v2953 = vand.u32 %v2941, 2147483648
    %v2954 = vor.u32 1.1754944e-38, %v2953
    %v2955 = vsel %vm2952, %v2954, %v2950
    %v2956 = vmul.f32 %v2940, %v2955
    %v2957 = vmul.f32 %v2956, %v2956
    %v2958 = vmul.f32 0.002785687, %v2957
    %v2959 = vadd.f32 %v2958, -0.015866
    %v2960 = vmul.f32 %v2959, %v2957
    %v2961 = vadd.f32 %v2960, 0.04247222
    %v2962 = vmul.f32 %v2961, %v2957
    %v2963 = vadd.f32 %v2962, -0.074975304
    %v2964 = vmul.f32 %v2963, %v2957
    %v2965 = vadd.f32 %v2964, 0.1064488
    %v2966 = vmul.f32 %v2965, %v2957
    %v2967 = vadd.f32 %v2966, -0.14207031
    %v2968 = vmul.f32 %v2967, %v2957
    %v2969 = vadd.f32 %v2968, 0.19993454
    %v2970 = vmul.f32 %v2969, %v2957
    %v2971 = vadd.f32 %v2970, -0.33333147
    %v2972 = vmul.f32 %v2971, %v2957
    %v2973 = vmul.f32 %v2972, %v2956
    %v2974 = vadd.f32 %v2973, %v2956
    %vm2975 = vcmp.gt.f32.partialorder %v2939, %v2938
    %v2976 = vsub.f32 1.5707964, %v2974
    %v2977 = vsel %vm2975, %v2976, %v2974
    %vm2978 = vcmp.lt.f32.partialorder %v1226, 0.0
    %v2979 = vsub.f32 3.1415927, %v2977
    %v2980 = vsel %vm2978, %v2979, %v2977
    %vm2981 = vcmp.lt.s32.totalorder %v1226, 0
    %v2982 = vsel %vm2981, 3.1415927, 0.0
    %vm2983 = vcmp.eq.f32.partialorder %v1812, 0.0
    %v2984 = vsel %vm2983, %v2982, %v2980
    %vm2985 = vcmp.ne.f32.partialorder %v1226, %v1226
    %vm2986 = vcmp.ne.f32.partialorder %v1812, %v1812
    %vm2987 = vmor %vm2985, %vm2986
    %v2988 = vsel %vm2987, nan, %v2984
    %vm2989 = vcmp.lt.f32.partialorder %v1226, 0.0
    %v2990 = vsel %vm2989, 2.3561945, 0.7853982
    %vm2991 = vcmp.eq.s32.totalorder %v2938, inf
    %vm2992 = vcmp.eq.s32.totalorder %v2939, inf
    %vm2993 = vmand %vm2991, %vm2992
    %v2994 = vsel %vm2993, %v2990, %v2988
    %v2995 = vand.u32 2147483647, %v2994
    %v2996 = vand.u32 %v1812, 2147483648
    %v2997 = vor.u32 %v2995, %v2996
    %v2998 = vand.u32 2147483647, %v1227
    %v2999 = vand.u32 2147483647, %v1815
    %v3000 = vmin.f32 %v2998, %v2999
    %v3001 = vmax.f32 %v2998, %v2999
    %v3002 = vrcp.pop %v3001
    %v3003 = vmul.f32 %v3001, %v3002
    %v3004 = vsub.f32 1.0, %v3003
    %v3005 = vmul.f32 %v3002, %v3004
    %v3006 = vadd.f32 %v3002, %v3005
    %vm3007 = vweird.f32 %v3001
    %vm3008 = vweird.f32 %v3002
    %vm3009 = vmor %vm3007, %vm3008
    %v3010 = vsel %vm3009, %v3002, %v3006
    %v3011 = vand.u32 2147483647, %v3001
    %vm3012 = vcmp.eq.f32.partialorder %v3011, 8.507059e+37
    %v3013 = vand.u32 %v3001, 2147483648
    %v3014 = vor.u32 1.1754944e-38, %v3013
    %v3015 = vsel %vm3012, %v3014, %v3010
    %v3016 = vmul.f32 %v3000, %v3015
    %v3017 = vmul.f32 %v3016, %v3016
    %v3018 = vmul.f32 0.002785687, %v3017
    %v3019 = vadd.f32 %v3018, -0.015866
    %v3020 = vmul.f32 %v3019, %v3017
    %v3021 = vadd.f32 %v3020, 0.04247222
    %v3022 = vmul.f32 %v3021, %v3017
    %v3023 = vadd.f32 %v3022, -0.074975304
    %v3024 = vmul.f32 %v3023, %v3017
    %v3025 = vadd.f32 %v3024, 0.1064488
    %v3026 = vmul.f32 %v3025, %v3017
    %v3027 = vadd.f32 %v3026, -0.14207031
    %v3028 = vmul.f32 %v3027, %v3017
    %v3029 = vadd.f32 %v3028, 0.19993454
    %v3030 = vmul.f32 %v3029, %v3017
    %v3031 = vadd.f32 %v3030, -0.33333147
    %v3032 = vmul.f32 %v3031, %v3017
    %v3033 = vmul.f32 %v3032, %v3016
    %v3034 = vadd.f32 %v3033, %v3016
    %vm3035 = vcmp.gt.f32.partialorder %v2999, %v2998
    %v3036 = vsub.f32 1.5707964, %v3034
    %v3037 = vsel %vm3035, %v3036, %v3034
    %vm3038 = vcmp.lt.f32.partialorder %v1227, 0.0
    %v3039 = vsub.f32 3.1415927, %v3037
    %v3040 = vsel %vm3038, %v3039, %v3037
    %vm3041 = vcmp.lt.s32.totalorder %v1227, 0
    %v3042 = vsel %vm3041, 3.1415927, 0.0
    %vm3043 = vcmp.eq.f32.partialorder %v1815, 0.0
    %v3044 = vsel %vm3043, %v3042, %v3040
    %vm3045 = vcmp.ne.f32.partialorder %v1227, %v1227
    %vm3046 = vcmp.ne.f32.partialorder %v1815, %v1815
    %vm3047 = vmor %vm3045, %vm3046
    %v3048 = vsel %vm3047, nan, %v3044
    %vm3049 = vcmp.lt.f32.partialorder %v1227, 0.0
    %v3050 = vsel %vm3049, 2.3561945, 0.7853982
    %vm3051 = vcmp.eq.s32.totalorder %v2998, inf
    %vm3052 = vcmp.eq.s32.totalorder %v2999, inf
    %vm3053 = vmand %vm3051, %vm3052
    %v3054 = vsel %vm3053, %v3050, %v3048
    %v3055 = vand.u32 2147483647, %v3054
    %v3056 = vand.u32 %v1815, 2147483648
    %v3057 = vor.u32 %v3055, %v3056
    %v3058 = vand.u32 2147483647, %v1228
    %v3059 = vand.u32 2147483647, %v1835
    %v3060 = vmin.f32 %v3058, %v3059
    %v3061 = vmax.f32 %v3058, %v3059
    %v3062 = vrcp.pop %v3061
    %v3063 = vmul.f32 %v3061, %v3062
    %v3064 = vsub.f32 1.0, %v3063
    %v3065 = vmul.f32 %v3062, %v3064
    %v3066 = vadd.f32 %v3062, %v3065
    %vm3067 = vweird.f32 %v3061
    %vm3068 = vweird.f32 %v3062
    %vm3069 = vmor %vm3067, %vm3068
    %v3070 = vsel %vm3069, %v3062, %v3066
    %v3071 = vand.u32 2147483647, %v3061
    %vm3072 = vcmp.eq.f32.partialorder %v3071, 8.507059e+37
    %v3073 = vand.u32 %v3061, 2147483648
    %v3074 = vor.u32 1.1754944e-38, %v3073
    %v3075 = vsel %vm3072, %v3074, %v3070
    %v3076 = vmul.f32 %v3060, %v3075
    %v3077 = vmul.f32 %v3076, %v3076
    %v3078 = vmul.f32 0.002785687, %v3077
    %v3079 = vadd.f32 %v3078, -0.015866
    %v3080 = vmul.f32 %v3079, %v3077
    %v3081 = vadd.f32 %v3080, 0.04247222
    %v3082 = vmul.f32 %v3081, %v3077
    %v3083 = vadd.f32 %v3082, -0.074975304
    %v3084 = vmul.f32 %v3083, %v3077
    %v3085 = vadd.f32 %v3084, 0.1064488
    %v3086 = vmul.f32 %v3085, %v3077
    %v3087 = vadd.f32 %v3086, -0.14207031
    %v3088 = vmul.f32 %v3087, %v3077
    %v3089 = vadd.f32 %v3088, 0.19993454
    %v3090 = vmul.f32 %v3089, %v3077
    %v3091 = vadd.f32 %v3090, -0.33333147
    %v3092 = vmul.f32 %v3091, %v3077
    %v3093 = vmul.f32 %v3092, %v3076
    %v3094 = vadd.f32 %v3093, %v3076
    %vm3095 = vcmp.gt.f32.partialorder %v3059, %v3058
    %v3096 = vsub.f32 1.5707964, %v3094
    %v3097 = vsel %vm3095, %v3096, %v3094
    %vm3098 = vcmp.lt.f32.partialorder %v1228, 0.0
    %v3099 = vsub.f32 3.1415927, %v3097
    %v3100 = vsel %vm3098, %v3099, %v3097
    %vm3101 = vcmp.lt.s32.totalorder %v1228, 0
    %v3102 = vsel %vm3101, 3.1415927, 0.0
    %vm3103 = vcmp.eq.f32.partialorder %v1835, 0.0
    %v3104 = vsel %vm3103, %v3102, %v3100
    %vm3105 = vcmp.ne.f32.partialorder %v1228, %v1228
    %vm3106 = vcmp.ne.f32.partialorder %v1835, %v1835
    %vm3107 = vmor %vm3105, %vm3106
    %v3108 = vsel %vm3107, nan, %v3104
    %vm3109 = vcmp.lt.f32.partialorder %v1228, 0.0
    %v3110 = vsel %vm3109, 2.3561945, 0.7853982
    %vm3111 = vcmp.eq.s32.totalorder %v3058, inf
    %vm3112 = vcmp.eq.s32.totalorder %v3059, inf
    %vm3113 = vmand %vm3111, %vm3112
    %v3114 = vsel %vm3113, %v3110, %v3108
    %v3115 = vand.u32 2147483647, %v3114
    %v3116 = vand.u32 %v1835, 2147483648
    %v3117 = vor.u32 %v3115, %v3116
    %v3118 = vand.u32 2147483647, %v1229
    %v3119 = vand.u32 2147483647, %v1838
    %v3120 = vmin.f32 %v3118, %v3119
    %v3121 = vmax.f32 %v3118, %v3119
    %v3122 = vrcp.pop %v3121
    %v3123 = vmul.f32 %v3121, %v3122
    %v3124 = vsub.f32 1.0, %v3123
    %v3125 = vmul.f32 %v3122, %v3124
    %v3126 = vadd.f32 %v3122, %v3125
    %vm3127 = vweird.f32 %v3121
    %vm3128 = vweird.f32 %v3122
    %vm3129 = vmor %vm3127, %vm3128
    %v3130 = vsel %vm3129, %v3122, %v3126
    %v3131 = vand.u32 2147483647, %v3121
    %vm3132 = vcmp.eq.f32.partialorder %v3131, 8.507059e+37
    %v3133 = vand.u32 %v3121, 2147483648
    %v3134 = vor.u32 1.1754944e-38, %v3133
    %v3135 = vsel %vm3132, %v3134, %v3130
    %v3136 = vmul.f32 %v3120, %v3135
    %v3137 = vmul.f32 %v3136, %v3136
    %v3138 = vmul.f32 0.002785687, %v3137
    %v3139 = vadd.f32 %v3138, -0.015866
    %v3140 = vmul.f32 %v3139, %v3137
    %v3141 = vadd.f32 %v3140, 0.04247222
    %v3142 = vmul.f32 %v3141, %v3137
    %v3143 = vadd.f32 %v3142, -0.074975304
    %v3144 = vmul.f32 %v3143, %v3137
    %v3145 = vadd.f32 %v3144, 0.1064488
    %v3146 = vmul.f32 %v3145, %v3137
    %v3147 = vadd.f32 %v3146, -0.14207031
    %v3148 = vmul.f32 %v3147, %v3137
    %v3149 = vadd.f32 %v3148, 0.19993454
    %v3150 = vmul.f32 %v3149, %v3137
    %v3151 = vadd.f32 %v3150, -0.33333147
    %v3152 = vmul.f32 %v3151, %v3137
    %v3153 = vmul.f32 %v3152, %v3136
    %v3154 = vadd.f32 %v3153, %v3136
    %vm3155 = vcmp.gt.f32.partialorder %v3119, %v3118
    %v3156 = vsub.f32 1.5707964, %v3154
    %v3157 = vsel %vm3155, %v3156, %v3154
    %vm3158 = vcmp.lt.f32.partialorder %v1229, 0.0
    %v3159 = vsub.f32 3.1415927, %v3157
    %v3160 = vsel %vm3158, %v3159, %v3157
    %vm3161 = vcmp.lt.s32.totalorder %v1229, 0
    %v3162 = vsel %vm3161, 3.1415927, 0.0
    %vm3163 = vcmp.eq.f32.partialorder %v1838, 0.0
    %v3164 = vsel %vm3163, %v3162, %v3160
    %vm3165 = vcmp.ne.f32.partialorder %v1229, %v1229
    %vm3166 = vcmp.ne.f32.partialorder %v1838, %v1838
    %vm3167 = vmor %vm3165, %vm3166
    %v3168 = vsel %vm3167, nan, %v3164
    %vm3169 = vcmp.lt.f32.partialorder %v1229, 0.0
    %v3170 = vsel %vm3169, 2.3561945, 0.7853982
    %vm3171 = vcmp.eq.s32.totalorder %v3118, inf
    %vm3172 = vcmp.eq.s32.totalorder %v3119, inf
    %vm3173 = vmand %vm3171, %vm3172
    %v3174 = vsel %vm3173, %v3170, %v3168
    %v3175 = vand.u32 2147483647, %v3174
    %v3176 = vand.u32 %v1838, 2147483648
    %v3177 = vor.u32 %v3175, %v3176
    %v3178 = vand.u32 2147483647, %v1230
    %v3179 = vand.u32 2147483647, %v1858
    %v3180 = vmin.f32 %v3178, %v3179
    %v3181 = vmax.f32 %v3178, %v3179
    %v3182 = vrcp.pop %v3181
    %v3183 = vmul.f32 %v3181, %v3182
    %v3184 = vsub.f32 1.0, %v3183
    %v3185 = vmul.f32 %v3182, %v3184
    %v3186 = vadd.f32 %v3182, %v3185
    %vm3187 = vweird.f32 %v3181
    %vm3188 = vweird.f32 %v3182
    %vm3189 = vmor %vm3187, %vm3188
    %v3190 = vsel %vm3189, %v3182, %v3186
    %v3191 = vand.u32 2147483647, %v3181
    %vm3192 = vcmp.eq.f32.partialorder %v3191, 8.507059e+37
    %v3193 = vand.u32 %v3181, 2147483648
    %v3194 = vor.u32 1.1754944e-38, %v3193
    %v3195 = vsel %vm3192, %v3194, %v3190
    %v3196 = vmul.f32 %v3180, %v3195
    %v3197 = vmul.f32 %v3196, %v3196
    %v3198 = vmul.f32 0.002785687, %v3197
    %v3199 = vadd.f32 %v3198, -0.015866
    %v3200 = vmul.f32 %v3199, %v3197
    %v3201 = vadd.f32 %v3200, 0.04247222
    %v3202 = vmul.f32 %v3201, %v3197
    %v3203 = vadd.f32 %v3202, -0.074975304
    %v3204 = vmul.f32 %v3203, %v3197
    %v3205 = vadd.f32 %v3204, 0.1064488
    %v3206 = vmul.f32 %v3205, %v3197
    %v3207 = vadd.f32 %v3206, -0.14207031
    %v3208 = vmul.f32 %v3207, %v3197
    %v3209 = vadd.f32 %v3208, 0.19993454
    %v3210 = vmul.f32 %v3209, %v3197
    %v3211 = vadd.f32 %v3210, -0.33333147
    %v3212 = vmul.f32 %v3211, %v3197
    %v3213 = vmul.f32 %v3212, %v3196
    %v3214 = vadd.f32 %v3213, %v3196
    %vm3215 = vcmp.gt.f32.partialorder %v3179, %v3178
    %v3216 = vsub.f32 1.5707964, %v3214
    %v3217 = vsel %vm3215, %v3216, %v3214
    %vm3218 = vcmp.lt.f32.partialorder %v1230, 0.0
    %v3219 = vsub.f32 3.1415927, %v3217
    %v3220 = vsel %vm3218, %v3219, %v3217
    %vm3221 = vcmp.lt.s32.totalorder %v1230, 0
    %v3222 = vsel %vm3221, 3.1415927, 0.0
    %vm3223 = vcmp.eq.f32.partialorder %v1858, 0.0
    %v3224 = vsel %vm3223, %v3222, %v3220
    %vm3225 = vcmp.ne.f32.partialorder %v1230, %v1230
    %vm3226 = vcmp.ne.f32.partialorder %v1858, %v1858
    %vm3227 = vmor %vm3225, %vm3226
    %v3228 = vsel %vm3227, nan, %v3224
    %vm3229 = vcmp.lt.f32.partialorder %v1230, 0.0
    %v3230 = vsel %vm3229, 2.3561945, 0.7853982
    %vm3231 = vcmp.eq.s32.totalorder %v3178, inf
    %vm3232 = vcmp.eq.s32.totalorder %v3179, inf
    %vm3233 = vmand %vm3231, %vm3232
    %v3234 = vsel %vm3233, %v3230, %v3228
    %v3235 = vand.u32 2147483647, %v3234
    %v3236 = vand.u32 %v1858, 2147483648
    %v3237 = vor.u32 %v3235, %v3236
    %v3238 = vand.u32 2147483647, %v1231
    %v3239 = vand.u32 2147483647, %v1861
    %v3240 = vmin.f32 %v3238, %v3239
    %v3241 = vmax.f32 %v3238, %v3239
    %v3242 = vrcp.pop %v3241
    %v3243 = vmul.f32 %v3241, %v3242
    %v3244 = vsub.f32 1.0, %v3243
    %v3245 = vmul.f32 %v3242, %v3244
    %v3246 = vadd.f32 %v3242, %v3245
    %vm3247 = vweird.f32 %v3241
    %vm3248 = vweird.f32 %v3242
    %vm3249 = vmor %vm3247, %vm3248
    %v3250 = vsel %vm3249, %v3242, %v3246
    %v3251 = vand.u32 2147483647, %v3241
    %vm3252 = vcmp.eq.f32.partialorder %v3251, 8.507059e+37
    %v3253 = vand.u32 %v3241, 2147483648
    %v3254 = vor.u32 1.1754944e-38, %v3253
    %v3255 = vsel %vm3252, %v3254, %v3250
    %v3256 = vmul.f32 %v3240, %v3255
    %v3257 = vmul.f32 %v3256, %v3256
    %v3258 = vmul.f32 0.002785687, %v3257
    %v3259 = vadd.f32 %v3258, -0.015866
    %v3260 = vmul.f32 %v3259, %v3257
    %v3261 = vadd.f32 %v3260, 0.04247222
    %v3262 = vmul.f32 %v3261, %v3257
    %v3263 = vadd.f32 %v3262, -0.074975304
    %v3264 = vmul.f32 %v3263, %v3257
    %v3265 = vadd.f32 %v3264, 0.1064488
    %v3266 = vmul.f32 %v3265, %v3257
    %v3267 = vadd.f32 %v3266, -0.14207031
    %v3268 = vmul.f32 %v3267, %v3257
    %v3269 = vadd.f32 %v3268, 0.19993454
    %v3270 = vmul.f32 %v3269, %v3257
    %v3271 = vadd.f32 %v3270, -0.33333147
    %v3272 = vmul.f32 %v3271, %v3257
    %v3273 = vmul.f32 %v3272, %v3256
    %v3274 = vadd.f32 %v3273, %v3256
    %vm3275 = vcmp.gt.f32.partialorder %v3239, %v3238
    %v3276 = vsub.f32 1.5707964, %v3274
    %v3277 = vsel %vm3275, %v3276, %v3274
    %vm3278 = vcmp.lt.f32.partialorder %v1231, 0.0
    %v3279 = vsub.f32 3.1415927, %v3277
    %v3280 = vsel %vm3278, %v3279, %v3277
    %vm3281 = vcmp.lt.s32.totalorder %v1231, 0
    %v3282 = vsel %vm3281, 3.1415927, 0.0
    %vm3283 = vcmp.eq.f32.partialorder %v1861, 0.0
    %v3284 = vsel %vm3283, %v3282, %v3280
    %vm3285 = vcmp.ne.f32.partialorder %v1231, %v1231
    %vm3286 = vcmp.ne.f32.partialorder %v1861, %v1861
    %vm3287 = vmor %vm3285, %vm3286
    %v3288 = vsel %vm3287, nan, %v3284
    %vm3289 = vcmp.lt.f32.partialorder %v1231, 0.0
    %v3290 = vsel %vm3289, 2.3561945, 0.7853982
    %vm3291 = vcmp.eq.s32.totalorder %v3238, inf
    %vm3292 = vcmp.eq.s32.totalorder %v3239, inf
    %vm3293 = vmand %vm3291, %vm3292
    %v3294 = vsel %vm3293, %v3290, %v3288
    %v3295 = vand.u32 2147483647, %v3294
    %v3296 = vand.u32 %v1861, 2147483648
    %v3297 = vor.u32 %v3295, %v3296
    %v3298 = vand.u32 2147483647, %v1232
    %v3299 = vand.u32 2147483647, %v1881
    %v3300 = vmin.f32 %v3298, %v3299
    %v3301 = vmax.f32 %v3298, %v3299
    %v3302 = vrcp.pop %v3301
    %v3303 = vmul.f32 %v3301, %v3302
    %v3304 = vsub.f32 1.0, %v3303
    %v3305 = vmul.f32 %v3302, %v3304
    %v3306 = vadd.f32 %v3302, %v3305
    %vm3307 = vweird.f32 %v3301
    %vm3308 = vweird.f32 %v3302
    %vm3309 = vmor %vm3307, %vm3308
    %v3310 = vsel %vm3309, %v3302, %v3306
    %v3311 = vand.u32 2147483647, %v3301
    %vm3312 = vcmp.eq.f32.partialorder %v3311, 8.507059e+37
    %v3313 = vand.u32 %v3301, 2147483648
    %v3314 = vor.u32 1.1754944e-38, %v3313
    %v3315 = vsel %vm3312, %v3314, %v3310
    %v3316 = vmul.f32 %v3300, %v3315
    %v3317 = vmul.f32 %v3316, %v3316
    %v3318 = vmul.f32 0.002785687, %v3317
    %v3319 = vadd.f32 %v3318, -0.015866
    %v3320 = vmul.f32 %v3319, %v3317
    %v3321 = vadd.f32 %v3320, 0.04247222
    %v3322 = vmul.f32 %v3321, %v3317
    %v3323 = vadd.f32 %v3322, -0.074975304
    %v3324 = vmul.f32 %v3323, %v3317
    %v3325 = vadd.f32 %v3324, 0.1064488
    %v3326 = vmul.f32 %v3325, %v3317
    %v3327 = vadd.f32 %v3326, -0.14207031
    %v3328 = vmul.f32 %v3327, %v3317
    %v3329 = vadd.f32 %v3328, 0.19993454
    %v3330 = vmul.f32 %v3329, %v3317
    %v3331 = vadd.f32 %v3330, -0.33333147
    %v3332 = vmul.f32 %v3331, %v3317
    %v3333 = vmul.f32 %v3332, %v3316
    %v3334 = vadd.f32 %v3333, %v3316
    %vm3335 = vcmp.gt.f32.partialorder %v3299, %v3298
    %v3336 = vsub.f32 1.5707964, %v3334
    %v3337 = vsel %vm3335, %v3336, %v3334
    %vm3338 = vcmp.lt.f32.partialorder %v1232, 0.0
    %v3339 = vsub.f32 3.1415927, %v3337
    %v3340 = vsel %vm3338, %v3339, %v3337
    %vm3341 = vcmp.lt.s32.totalorder %v1232, 0
    %v3342 = vsel %vm3341, 3.1415927, 0.0
    %vm3343 = vcmp.eq.f32.partialorder %v1881, 0.0
    %v3344 = vsel %vm3343, %v3342, %v3340
    %vm3345 = vcmp.ne.f32.partialorder %v1232, %v1232
    %vm3346 = vcmp.ne.f32.partialorder %v1881, %v1881
    %vm3347 = vmor %vm3345, %vm3346
    %v3348 = vsel %vm3347, nan, %v3344
    %vm3349 = vcmp.lt.f32.partialorder %v1232, 0.0
    %v3350 = vsel %vm3349, 2.3561945, 0.7853982
    %vm3351 = vcmp.eq.s32.totalorder %v3298, inf
    %vm3352 = vcmp.eq.s32.totalorder %v3299, inf
    %vm3353 = vmand %vm3351, %vm3352
    %v3354 = vsel %vm3353, %v3350, %v3348
    %v3355 = vand.u32 2147483647, %v3354
    %v3356 = vand.u32 %v1881, 2147483648
    %v3357 = vor.u32 %v3355, %v3356
    %v3358 = vand.u32 2147483647, %v1233
    %v3359 = vand.u32 2147483647, %v1884
    %v3360 = vmin.f32 %v3358, %v3359
    %v3361 = vmax.f32 %v3358, %v3359
    %v3362 = vrcp.pop %v3361
    %v3363 = vmul.f32 %v3361, %v3362
    %v3364 = vsub.f32 1.0, %v3363
    %v3365 = vmul.f32 %v3362, %v3364
    %v3366 = vadd.f32 %v3362, %v3365
    %vm3367 = vweird.f32 %v3361
    %vm3368 = vweird.f32 %v3362
    %vm3369 = vmor %vm3367, %vm3368
    %v3370 = vsel %vm3369, %v3362, %v3366
    %v3371 = vand.u32 2147483647, %v3361
    %vm3372 = vcmp.eq.f32.partialorder %v3371, 8.507059e+37
    %v3373 = vand.u32 %v3361, 2147483648
    %v3374 = vor.u32 1.1754944e-38, %v3373
    %v3375 = vsel %vm3372, %v3374, %v3370
    %v3376 = vmul.f32 %v3360, %v3375
    %v3377 = vmul.f32 %v3376, %v3376
    %v3378 = vmul.f32 0.002785687, %v3377
    %v3379 = vadd.f32 %v3378, -0.015866
    %v3380 = vmul.f32 %v3379, %v3377
    %v3381 = vadd.f32 %v3380, 0.04247222
    %v3382 = vmul.f32 %v3381, %v3377
    %v3383 = vadd.f32 %v3382, -0.074975304
    %v3384 = vmul.f32 %v3383, %v3377
    %v3385 = vadd.f32 %v3384, 0.1064488
    %v3386 = vmul.f32 %v3385, %v3377
    %v3387 = vadd.f32 %v3386, -0.14207031
    %v3388 = vmul.f32 %v3387, %v3377
    %v3389 = vadd.f32 %v3388, 0.19993454
    %v3390 = vmul.f32 %v3389, %v3377
    %v3391 = vadd.f32 %v3390, -0.33333147
    %v3392 = vmul.f32 %v3391, %v3377
    %v3393 = vmul.f32 %v3392, %v3376
    %v3394 = vadd.f32 %v3393, %v3376
    %vm3395 = vcmp.gt.f32.partialorder %v3359, %v3358
    %v3396 = vsub.f32 1.5707964, %v3394
    %v3397 = vsel %vm3395, %v3396, %v3394
    %vm3398 = vcmp.lt.f32.partialorder %v1233, 0.0
    %v3399 = vsub.f32 3.1415927, %v3397
    %v3400 = vsel %vm3398, %v3399, %v3397
    %vm3401 = vcmp.lt.s32.totalorder %v1233, 0
    %v3402 = vsel %vm3401, 3.1415927, 0.0
    %vm3403 = vcmp.eq.f32.partialorder %v1884, 0.0
    %v3404 = vsel %vm3403, %v3402, %v3400
    %vm3405 = vcmp.ne.f32.partialorder %v1233, %v1233
    %vm3406 = vcmp.ne.f32.partialorder %v1884, %v1884
    %vm3407 = vmor %vm3405, %vm3406
    %v3408 = vsel %vm3407, nan, %v3404
    %vm3409 = vcmp.lt.f32.partialorder %v1233, 0.0
    %v3410 = vsel %vm3409, 2.3561945, 0.7853982
    %vm3411 = vcmp.eq.s32.totalorder %v3358, inf
    %vm3412 = vcmp.eq.s32.totalorder %v3359, inf
    %vm3413 = vmand %vm3411, %vm3412
    %v3414 = vsel %vm3413, %v3410, %v3408
    %v3415 = vand.u32 2147483647, %v3414
    %v3416 = vand.u32 %v1884, 2147483648
    %v3417 = vor.u32 %v3415, %v3416
    %v3418 = vand.u32 2147483647, %v1234
    %v3419 = vand.u32 2147483647, %v1904
    %v3420 = vmin.f32 %v3418, %v3419
    %v3421 = vmax.f32 %v3418, %v3419
    %v3422 = vrcp.pop %v3421
    %v3423 = vmul.f32 %v3421, %v3422
    %v3424 = vsub.f32 1.0, %v3423
    %v3425 = vmul.f32 %v3422, %v3424
    %v3426 = vadd.f32 %v3422, %v3425
    %vm3427 = vweird.f32 %v3421
    %vm3428 = vweird.f32 %v3422
    %vm3429 = vmor %vm3427, %vm3428
    %v3430 = vsel %vm3429, %v3422, %v3426
    %v3431 = vand.u32 2147483647, %v3421
    %vm3432 = vcmp.eq.f32.partialorder %v3431, 8.507059e+37
    %v3433 = vand.u32 %v3421, 2147483648
    %v3434 = vor.u32 1.1754944e-38, %v3433
    %v3435 = vsel %vm3432, %v3434, %v3430
    %v3436 = vmul.f32 %v3420, %v3435
    %v3437 = vmul.f32 %v3436, %v3436
    %v3438 = vmul.f32 0.002785687, %v3437
    %v3439 = vadd.f32 %v3438, -0.015866
    %v3440 = vmul.f32 %v3439, %v3437
    %v3441 = vadd.f32 %v3440, 0.04247222
    %v3442 = vmul.f32 %v3441, %v3437
    %v3443 = vadd.f32 %v3442, -0.074975304
    %v3444 = vmul.f32 %v3443, %v3437
    %v3445 = vadd.f32 %v3444, 0.1064488
    %v3446 = vmul.f32 %v3445, %v3437
    %v3447 = vadd.f32 %v3446, -0.14207031
    %v3448 = vmul.f32 %v3447, %v3437
    %v3449 = vadd.f32 %v3448, 0.19993454
    %v3450 = vmul.f32 %v3449, %v3437
    %v3451 = vadd.f32 %v3450, -0.33333147
    %v3452 = vmul.f32 %v3451, %v3437
    %v3453 = vmul.f32 %v3452, %v3436
    %v3454 = vadd.f32 %v3453, %v3436
    %vm3455 = vcmp.gt.f32.partialorder %v3419, %v3418
    %v3456 = vsub.f32 1.5707964, %v3454
    %v3457 = vsel %vm3455, %v3456, %v3454
    %vm3458 = vcmp.lt.f32.partialorder %v1234, 0.0
    %v3459 = vsub.f32 3.1415927, %v3457
    %v3460 = vsel %vm3458, %v3459, %v3457
    %vm3461 = vcmp.lt.s32.totalorder %v1234, 0
    %v3462 = vsel %vm3461, 3.1415927, 0.0
    %vm3463 = vcmp.eq.f32.partialorder %v1904, 0.0
    %v3464 = vsel %vm3463, %v3462, %v3460
    %vm3465 = vcmp.ne.f32.partialorder %v1234, %v1234
    %vm3466 = vcmp.ne.f32.partialorder %v1904, %v1904
    %vm3467 = vmor %vm3465, %vm3466
    %v3468 = vsel %vm3467, nan, %v3464
    %vm3469 = vcmp.lt.f32.partialorder %v1234, 0.0
    %v3470 = vsel %vm3469, 2.3561945, 0.7853982
    %vm3471 = vcmp.eq.s32.totalorder %v3418, inf
    %vm3472 = vcmp.eq.s32.totalorder %v3419, inf
    %vm3473 = vmand %vm3471, %vm3472
    %v3474 = vsel %vm3473, %v3470, %v3468
    %v3475 = vand.u32 2147483647, %v3474
    %v3476 = vand.u32 %v1904, 2147483648
    %v3477 = vor.u32 %v3475, %v3476
    %v3478 = vand.u32 2147483647, %v1235
    %v3479 = vand.u32 2147483647, %v1907
    %v3480 = vmin.f32 %v3478, %v3479
    %v3481 = vmax.f32 %v3478, %v3479
    %v3482 = vrcp.pop %v3481
    %v3483 = vmul.f32 %v3481, %v3482
    %v3484 = vsub.f32 1.0, %v3483
    %v3485 = vmul.f32 %v3482, %v3484
    %v3486 = vadd.f32 %v3482, %v3485
    %vm3487 = vweird.f32 %v3481
    %vm3488 = vweird.f32 %v3482
    %vm3489 = vmor %vm3487, %vm3488
    %v3490 = vsel %vm3489, %v3482, %v3486
    %v3491 = vand.u32 2147483647, %v3481
    %vm3492 = vcmp.eq.f32.partialorder %v3491, 8.507059e+37
    %v3493 = vand.u32 %v3481, 2147483648
    %v3494 = vor.u32 1.1754944e-38, %v3493
    %v3495 = vsel %vm3492, %v3494, %v3490
    %v3496 = vmul.f32 %v3480, %v3495
    %v3497 = vmul.f32 %v3496, %v3496
    %v3498 = vmul.f32 0.002785687, %v3497
    %v3499 = vadd.f32 %v3498, -0.015866
    %v3500 = vmul.f32 %v3499, %v3497
    %v3501 = vadd.f32 %v3500, 0.04247222
    %v3502 = vmul.f32 %v3501, %v3497
    %v3503 = vadd.f32 %v3502, -0.074975304
    %v3504 = vmul.f32 %v3503, %v3497
    %v3505 = vadd.f32 %v3504, 0.1064488
    %v3506 = vmul.f32 %v3505, %v3497
    %v3507 = vadd.f32 %v3506, -0.14207031
    %v3508 = vmul.f32 %v3507, %v3497
    %v3509 = vadd.f32 %v3508, 0.19993454
    %v3510 = vmul.f32 %v3509, %v3497
    %v3511 = vadd.f32 %v3510, -0.33333147
    %v3512 = vmul.f32 %v3511, %v3497
    %v3513 = vmul.f32 %v3512, %v3496
    %v3514 = vadd.f32 %v3513, %v3496
    %vm3515 = vcmp.gt.f32.partialorder %v3479, %v3478
    %v3516 = vsub.f32 1.5707964, %v3514
    %v3517 = vsel %vm3515, %v3516, %v3514
    %vm3518 = vcmp.lt.f32.partialorder %v1235, 0.0
    %v3519 = vsub.f32 3.1415927, %v3517
    %v3520 = vsel %vm3518, %v3519, %v3517
    %vm3521 = vcmp.lt.s32.totalorder %v1235, 0
    %v3522 = vsel %vm3521, 3.1415927, 0.0
    %vm3523 = vcmp.eq.f32.partialorder %v1907, 0.0
    %v3524 = vsel %vm3523, %v3522, %v3520
    %vm3525 = vcmp.ne.f32.partialorder %v1235, %v1235
    %vm3526 = vcmp.ne.f32.partialorder %v1907, %v1907
    %vm3527 = vmor %vm3525, %vm3526
    %v3528 = vsel %vm3527, nan, %v3524
    %vm3529 = vcmp.lt.f32.partialorder %v1235, 0.0
    %v3530 = vsel %vm3529, 2.3561945, 0.7853982
    %vm3531 = vcmp.eq.s32.totalorder %v3478, inf
    %vm3532 = vcmp.eq.s32.totalorder %v3479, inf
    %vm3533 = vmand %vm3531, %vm3532
    %v3534 = vsel %vm3533, %v3530, %v3528
    %v3535 = vand.u32 2147483647, %v3534
    %v3536 = vand.u32 %v1907, 2147483648
    %v3537 = vor.u32 %v3535, %v3536
    %v3538 = vand.u32 2147483647, %v1236
    %v3539 = vand.u32 2147483647, %v1927
    %v3540 = vmin.f32 %v3538, %v3539
    %v3541 = vmax.f32 %v3538, %v3539
    %v3542 = vrcp.pop %v3541
    %v3543 = vmul.f32 %v3541, %v3542
    %v3544 = vsub.f32 1.0, %v3543
    %v3545 = vmul.f32 %v3542, %v3544
    %v3546 = vadd.f32 %v3542, %v3545
    %vm3547 = vweird.f32 %v3541
    %vm3548 = vweird.f32 %v3542
    %vm3549 = vmor %vm3547, %vm3548
    %v3550 = vsel %vm3549, %v3542, %v3546
    %v3551 = vand.u32 2147483647, %v3541
    %vm3552 = vcmp.eq.f32.partialorder %v3551, 8.507059e+37
    %v3553 = vand.u32 %v3541, 2147483648
    %v3554 = vor.u32 1.1754944e-38, %v3553
    %v3555 = vsel %vm3552, %v3554, %v3550
    %v3556 = vmul.f32 %v3540, %v3555
    %v3557 = vmul.f32 %v3556, %v3556
    %v3558 = vmul.f32 0.002785687, %v3557
    %v3559 = vadd.f32 %v3558, -0.015866
    %v3560 = vmul.f32 %v3559, %v3557
    %v3561 = vadd.f32 %v3560, 0.04247222
    %v3562 = vmul.f32 %v3561, %v3557
    %v3563 = vadd.f32 %v3562, -0.074975304
    %v3564 = vmul.f32 %v3563, %v3557
    %v3565 = vadd.f32 %v3564, 0.1064488
    %v3566 = vmul.f32 %v3565, %v3557
    %v3567 = vadd.f32 %v3566, -0.14207031
    %v3568 = vmul.f32 %v3567, %v3557
    %v3569 = vadd.f32 %v3568, 0.19993454
    %v3570 = vmul.f32 %v3569, %v3557
    %v3571 = vadd.f32 %v3570, -0.33333147
    %v3572 = vmul.f32 %v3571, %v3557
    %v3573 = vmul.f32 %v3572, %v3556
    %v3574 = vadd.f32 %v3573, %v3556
    %vm3575 = vcmp.gt.f32.partialorder %v3539, %v3538
    %v3576 = vsub.f32 1.5707964, %v3574
    %v3577 = vsel %vm3575, %v3576, %v3574
    %vm3578 = vcmp.lt.f32.partialorder %v1236, 0.0
    %v3579 = vsub.f32 3.1415927, %v3577
    %v3580 = vsel %vm3578, %v3579, %v3577
    %vm3581 = vcmp.lt.s32.totalorder %v1236, 0
    %v3582 = vsel %vm3581, 3.1415927, 0.0
    %vm3583 = vcmp.eq.f32.partialorder %v1927, 0.0
    %v3584 = vsel %vm3583, %v3582, %v3580
    %vm3585 = vcmp.ne.f32.partialorder %v1236, %v1236
    %vm3586 = vcmp.ne.f32.partialorder %v1927, %v1927
    %vm3587 = vmor %vm3585, %vm3586
    %v3588 = vsel %vm3587, nan, %v3584
    %vm3589 = vcmp.lt.f32.partialorder %v1236, 0.0
    %v3590 = vsel %vm3589, 2.3561945, 0.7853982
    %vm3591 = vcmp.eq.s32.totalorder %v3538, inf
    %vm3592 = vcmp.eq.s32.totalorder %v3539, inf
    %vm3593 = vmand %vm3591, %vm3592
    %v3594 = vsel %vm3593, %v3590, %v3588
    %v3595 = vand.u32 2147483647, %v3594
    %v3596 = vand.u32 %v1927, 2147483648
    %v3597 = vor.u32 %v3595, %v3596
    %v3598 = vand.u32 2147483647, %v1237
    %v3599 = vand.u32 2147483647, %v1930
    %v3600 = vmin.f32 %v3598, %v3599
    %v3601 = vmax.f32 %v3598, %v3599
    %v3602 = vrcp.pop %v3601
    %v3603 = vmul.f32 %v3601, %v3602
    %v3604 = vsub.f32 1.0, %v3603
    %v3605 = vmul.f32 %v3602, %v3604
    %v3606 = vadd.f32 %v3602, %v3605
    %vm3607 = vweird.f32 %v3601
    %vm3608 = vweird.f32 %v3602
    %vm3609 = vmor %vm3607, %vm3608
    %v3610 = vsel %vm3609, %v3602, %v3606
    %v3611 = vand.u32 2147483647, %v3601
    %vm3612 = vcmp.eq.f32.partialorder %v3611, 8.507059e+37
    %v3613 = vand.u32 %v3601, 2147483648
    %v3614 = vor.u32 1.1754944e-38, %v3613
    %v3615 = vsel %vm3612, %v3614, %v3610
    %v3616 = vmul.f32 %v3600, %v3615
    %v3617 = vmul.f32 %v3616, %v3616
    %v3618 = vmul.f32 0.002785687, %v3617
    %v3619 = vadd.f32 %v3618, -0.015866
    %v3620 = vmul.f32 %v3619, %v3617
    %v3621 = vadd.f32 %v3620, 0.04247222
    %v3622 = vmul.f32 %v3621, %v3617
    %v3623 = vadd.f32 %v3622, -0.074975304
    %v3624 = vmul.f32 %v3623, %v3617
    %v3625 = vadd.f32 %v3624, 0.1064488
    %v3626 = vmul.f32 %v3625, %v3617
    %v3627 = vadd.f32 %v3626, -0.14207031
    %v3628 = vmul.f32 %v3627, %v3617
    %v3629 = vadd.f32 %v3628, 0.19993454
    %v3630 = vmul.f32 %v3629, %v3617
    %v3631 = vadd.f32 %v3630, -0.33333147
    %v3632 = vmul.f32 %v3631, %v3617
    %v3633 = vmul.f32 %v3632, %v3616
    %v3634 = vadd.f32 %v3633, %v3616
    %vm3635 = vcmp.gt.f32.partialorder %v3599, %v3598
    %v3636 = vsub.f32 1.5707964, %v3634
    %v3637 = vsel %vm3635, %v3636, %v3634
    %vm3638 = vcmp.lt.f32.partialorder %v1237, 0.0
    %v3639 = vsub.f32 3.1415927, %v3637
    %v3640 = vsel %vm3638, %v3639, %v3637
    %vm3641 = vcmp.lt.s32.totalorder %v1237, 0
    %v3642 = vsel %vm3641, 3.1415927, 0.0
    %vm3643 = vcmp.eq.f32.partialorder %v1930, 0.0
    %v3644 = vsel %vm3643, %v3642, %v3640
    %vm3645 = vcmp.ne.f32.partialorder %v1237, %v1237
    %vm3646 = vcmp.ne.f32.partialorder %v1930, %v1930
    %vm3647 = vmor %vm3645, %vm3646
    %v3648 = vsel %vm3647, nan, %v3644
    %vm3649 = vcmp.lt.f32.partialorder %v1237, 0.0
    %v3650 = vsel %vm3649, 2.3561945, 0.7853982
    %vm3651 = vcmp.eq.s32.totalorder %v3598, inf
    %vm3652 = vcmp.eq.s32.totalorder %v3599, inf
    %vm3653 = vmand %vm3651, %vm3652
    %v3654 = vsel %vm3653, %v3650, %v3648
    %v3655 = vand.u32 2147483647, %v3654
    %v3656 = vand.u32 %v1930, 2147483648
    %v3657 = vor.u32 %v3655, %v3656
    %v3658 = vand.u32 2147483647, %v1238
    %v3659 = vand.u32 2147483647, %v1950
    %v3660 = vmin.f32 %v3658, %v3659
    %v3661 = vmax.f32 %v3658, %v3659
    %v3662 = vrcp.pop %v3661
    %v3663 = vmul.f32 %v3661, %v3662
    %v3664 = vsub.f32 1.0, %v3663
    %v3665 = vmul.f32 %v3662, %v3664
    %v3666 = vadd.f32 %v3662, %v3665
    %vm3667 = vweird.f32 %v3661
    %vm3668 = vweird.f32 %v3662
    %vm3669 = vmor %vm3667, %vm3668
    %v3670 = vsel %vm3669, %v3662, %v3666
    %v3671 = vand.u32 2147483647, %v3661
    %vm3672 = vcmp.eq.f32.partialorder %v3671, 8.507059e+37
    %v3673 = vand.u32 %v3661, 2147483648
    %v3674 = vor.u32 1.1754944e-38, %v3673
    %v3675 = vsel %vm3672, %v3674, %v3670
    %v3676 = vmul.f32 %v3660, %v3675
    %v3677 = vmul.f32 %v3676, %v3676
    %v3678 = vmul.f32 0.002785687, %v3677
    %v3679 = vadd.f32 %v3678, -0.015866
    %v3680 = vmul.f32 %v3679, %v3677
    %v3681 = vadd.f32 %v3680, 0.04247222
    %v3682 = vmul.f32 %v3681, %v3677
    %v3683 = vadd.f32 %v3682, -0.074975304
    %v3684 = vmul.f32 %v3683, %v3677
    %v3685 = vadd.f32 %v3684, 0.1064488
    %v3686 = vmul.f32 %v3685, %v3677
    %v3687 = vadd.f32 %v3686, -0.14207031
    %v3688 = vmul.f32 %v3687, %v3677
    %v3689 = vadd.f32 %v3688, 0.19993454
    %v3690 = vmul.f32 %v3689, %v3677
    %v3691 = vadd.f32 %v3690, -0.33333147
    %v3692 = vmul.f32 %v3691, %v3677
    %v3693 = vmul.f32 %v3692, %v3676
    %v3694 = vadd.f32 %v3693, %v3676
    %vm3695 = vcmp.gt.f32.partialorder %v3659, %v3658
    %v3696 = vsub.f32 1.5707964, %v3694
    %v3697 = vsel %vm3695, %v3696, %v3694
    %vm3698 = vcmp.lt.f32.partialorder %v1238, 0.0
    %v3699 = vsub.f32 3.1415927, %v3697
    %v3700 = vsel %vm3698, %v3699, %v3697
    %vm3701 = vcmp.lt.s32.totalorder %v1238, 0
    %v3702 = vsel %vm3701, 3.1415927, 0.0
    %vm3703 = vcmp.eq.f32.partialorder %v1950, 0.0
    %v3704 = vsel %vm3703, %v3702, %v3700
    %vm3705 = vcmp.ne.f32.partialorder %v1238, %v1238
    %vm3706 = vcmp.ne.f32.partialorder %v1950, %v1950
    %vm3707 = vmor %vm3705, %vm3706
    %v3708 = vsel %vm3707, nan, %v3704
    %vm3709 = vcmp.lt.f32.partialorder %v1238, 0.0
    %v3710 = vsel %vm3709, 2.3561945, 0.7853982
    %vm3711 = vcmp.eq.s32.totalorder %v3658, inf
    %vm3712 = vcmp.eq.s32.totalorder %v3659, inf
    %vm3713 = vmand %vm3711, %vm3712
    %v3714 = vsel %vm3713, %v3710, %v3708
    %v3715 = vand.u32 2147483647, %v3714
    %v3716 = vand.u32 %v1950, 2147483648
    %v3717 = vor.u32 %v3715, %v3716
    %v3718 = vand.u32 2147483647, %v1239
    %v3719 = vand.u32 2147483647, %v1953
    %v3720 = vmin.f32 %v3718, %v3719
    %v3721 = vmax.f32 %v3718, %v3719
    %v3722 = vrcp.pop %v3721
    %v3723 = vmul.f32 %v3721, %v3722
    %v3724 = vsub.f32 1.0, %v3723
    %v3725 = vmul.f32 %v3722, %v3724
    %v3726 = vadd.f32 %v3722, %v3725
    %vm3727 = vweird.f32 %v3721
    %vm3728 = vweird.f32 %v3722
    %vm3729 = vmor %vm3727, %vm3728
    %v3730 = vsel %vm3729, %v3722, %v3726
    %v3731 = vand.u32 2147483647, %v3721
    %vm3732 = vcmp.eq.f32.partialorder %v3731, 8.507059e+37
    %v3733 = vand.u32 %v3721, 2147483648
    %v3734 = vor.u32 1.1754944e-38, %v3733
    %v3735 = vsel %vm3732, %v3734, %v3730
    %v3736 = vmul.f32 %v3720, %v3735
    %v3737 = vmul.f32 %v3736, %v3736
    %v3738 = vmul.f32 0.002785687, %v3737
    %v3739 = vadd.f32 %v3738, -0.015866
    %v3740 = vmul.f32 %v3739, %v3737
    %v3741 = vadd.f32 %v3740, 0.04247222
    %v3742 = vmul.f32 %v3741, %v3737
    %v3743 = vadd.f32 %v3742, -0.074975304
    %v3744 = vmul.f32 %v3743, %v3737
    %v3745 = vadd.f32 %v3744, 0.1064488
    %v3746 = vmul.f32 %v3745, %v3737
    %v3747 = vadd.f32 %v3746, -0.14207031
    %v3748 = vmul.f32 %v3747, %v3737
    %v3749 = vadd.f32 %v3748, 0.19993454
    %v3750 = vmul.f32 %v3749, %v3737
    %v3751 = vadd.f32 %v3750, -0.33333147
    %v3752 = vmul.f32 %v3751, %v3737
    %v3753 = vmul.f32 %v3752, %v3736
    %v3754 = vadd.f32 %v3753, %v3736
    %vm3755 = vcmp.gt.f32.partialorder %v3719, %v3718
    %v3756 = vsub.f32 1.5707964, %v3754
    %v3757 = vsel %vm3755, %v3756, %v3754
    %vm3758 = vcmp.lt.f32.partialorder %v1239, 0.0
    %v3759 = vsub.f32 3.1415927, %v3757
    %v3760 = vsel %vm3758, %v3759, %v3757
    %vm3761 = vcmp.lt.s32.totalorder %v1239, 0
    %v3762 = vsel %vm3761, 3.1415927, 0.0
    %vm3763 = vcmp.eq.f32.partialorder %v1953, 0.0
    %v3764 = vsel %vm3763, %v3762, %v3760
    %vm3765 = vcmp.ne.f32.partialorder %v1239, %v1239
    %vm3766 = vcmp.ne.f32.partialorder %v1953, %v1953
    %vm3767 = vmor %vm3765, %vm3766
    %v3768 = vsel %vm3767, nan, %v3764
    %vm3769 = vcmp.lt.f32.partialorder %v1239, 0.0
    %v3770 = vsel %vm3769, 2.3561945, 0.7853982
    %vm3771 = vcmp.eq.s32.totalorder %v3718, inf
    %vm3772 = vcmp.eq.s32.totalorder %v3719, inf
    %vm3773 = vmand %vm3771, %vm3772
    %v3774 = vsel %vm3773, %v3770, %v3768
    %v3775 = vand.u32 2147483647, %v3774
    %v3776 = vand.u32 %v1953, 2147483648
    %v3777 = vor.u32 %v3775, %v3776
    %v3778 = vand.u32 2147483647, %v1240
    %v3779 = vand.u32 2147483647, %v1973
    %v3780 = vmin.f32 %v3778, %v3779
    %v3781 = vmax.f32 %v3778, %v3779
    %v3782 = vrcp.pop %v3781
    %v3783 = vmul.f32 %v3781, %v3782
    %v3784 = vsub.f32 1.0, %v3783
    %v3785 = vmul.f32 %v3782, %v3784
    %v3786 = vadd.f32 %v3782, %v3785
    %vm3787 = vweird.f32 %v3781
    %vm3788 = vweird.f32 %v3782
    %vm3789 = vmor %vm3787, %vm3788
    %v3790 = vsel %vm3789, %v3782, %v3786
    %v3791 = vand.u32 2147483647, %v3781
    %vm3792 = vcmp.eq.f32.partialorder %v3791, 8.507059e+37
    %v3793 = vand.u32 %v3781, 2147483648
    %v3794 = vor.u32 1.1754944e-38, %v3793
    %v3795 = vsel %vm3792, %v3794, %v3790
    %v3796 = vmul.f32 %v3780, %v3795
    %v3797 = vmul.f32 %v3796, %v3796
    %v3798 = vmul.f32 0.002785687, %v3797
    %v3799 = vadd.f32 %v3798, -0.015866
    %v3800 = vmul.f32 %v3799, %v3797
    %v3801 = vadd.f32 %v3800, 0.04247222
    %v3802 = vmul.f32 %v3801, %v3797
    %v3803 = vadd.f32 %v3802, -0.074975304
    %v3804 = vmul.f32 %v3803, %v3797
    %v3805 = vadd.f32 %v3804, 0.1064488
    %v3806 = vmul.f32 %v3805, %v3797
    %v3807 = vadd.f32 %v3806, -0.14207031
    %v3808 = vmul.f32 %v3807, %v3797
    %v3809 = vadd.f32 %v3808, 0.19993454
    %v3810 = vmul.f32 %v3809, %v3797
    %v3811 = vadd.f32 %v3810, -0.33333147
    %v3812 = vmul.f32 %v3811, %v3797
    %v3813 = vmul.f32 %v3812, %v3796
    %v3814 = vadd.f32 %v3813, %v3796
    %vm3815 = vcmp.gt.f32.partialorder %v3779, %v3778
    %v3816 = vsub.f32 1.5707964, %v3814
    %v3817 = vsel %vm3815, %v3816, %v3814
    %vm3818 = vcmp.lt.f32.partialorder %v1240, 0.0
    %v3819 = vsub.f32 3.1415927, %v3817
    %v3820 = vsel %vm3818, %v3819, %v3817
    %vm3821 = vcmp.lt.s32.totalorder %v1240, 0
    %v3822 = vsel %vm3821, 3.1415927, 0.0
    %vm3823 = vcmp.eq.f32.partialorder %v1973, 0.0
    %v3824 = vsel %vm3823, %v3822, %v3820
    %vm3825 = vcmp.ne.f32.partialorder %v1240, %v1240
    %vm3826 = vcmp.ne.f32.partialorder %v1973, %v1973
    %vm3827 = vmor %vm3825, %vm3826
    %v3828 = vsel %vm3827, nan, %v3824
    %vm3829 = vcmp.lt.f32.partialorder %v1240, 0.0
    %v3830 = vsel %vm3829, 2.3561945, 0.7853982
    %vm3831 = vcmp.eq.s32.totalorder %v3778, inf
    %vm3832 = vcmp.eq.s32.totalorder %v3779, inf
    %vm3833 = vmand %vm3831, %vm3832
    %v3834 = vsel %vm3833, %v3830, %v3828
    %v3835 = vand.u32 2147483647, %v3834
    %v3836 = vand.u32 %v1973, 2147483648
    %v3837 = vor.u32 %v3835, %v3836
    %v3838 = vand.u32 2147483647, %v1241
    %v3839 = vand.u32 2147483647, %v1976
    %v3840 = vmin.f32 %v3838, %v3839
    %v3841 = vmax.f32 %v3838, %v3839
    %v3842 = vrcp.pop %v3841
    %v3843 = vmul.f32 %v3841, %v3842
    %v3844 = vsub.f32 1.0, %v3843
    %v3845 = vmul.f32 %v3842, %v3844
    %v3846 = vadd.f32 %v3842, %v3845
    %vm3847 = vweird.f32 %v3841
    %vm3848 = vweird.f32 %v3842
    %vm3849 = vmor %vm3847, %vm3848
    %v3850 = vsel %vm3849, %v3842, %v3846
    %v3851 = vand.u32 2147483647, %v3841
    %vm3852 = vcmp.eq.f32.partialorder %v3851, 8.507059e+37
    %v3853 = vand.u32 %v3841, 2147483648
    %v3854 = vor.u32 1.1754944e-38, %v3853
    %v3855 = vsel %vm3852, %v3854, %v3850
    %v3856 = vmul.f32 %v3840, %v3855
    %v3857 = vmul.f32 %v3856, %v3856
    %v3858 = vmul.f32 0.002785687, %v3857
    %v3859 = vadd.f32 %v3858, -0.015866
    %v3860 = vmul.f32 %v3859, %v3857
    %v3861 = vadd.f32 %v3860, 0.04247222
    %v3862 = vmul.f32 %v3861, %v3857
    %v3863 = vadd.f32 %v3862, -0.074975304
    %v3864 = vmul.f32 %v3863, %v3857
    %v3865 = vadd.f32 %v3864, 0.1064488
    %v3866 = vmul.f32 %v3865, %v3857
    %v3867 = vadd.f32 %v3866, -0.14207031
    %v3868 = vmul.f32 %v3867, %v3857
    %v3869 = vadd.f32 %v3868, 0.19993454
    %v3870 = vmul.f32 %v3869, %v3857
    %v3871 = vadd.f32 %v3870, -0.33333147
    %v3872 = vmul.f32 %v3871, %v3857
    %v3873 = vmul.f32 %v3872, %v3856
    %v3874 = vadd.f32 %v3873, %v3856
    %vm3875 = vcmp.gt.f32.partialorder %v3839, %v3838
    %v3876 = vsub.f32 1.5707964, %v3874
    %v3877 = vsel %vm3875, %v3876, %v3874
    %vm3878 = vcmp.lt.f32.partialorder %v1241, 0.0
    %v3879 = vsub.f32 3.1415927, %v3877
    %v3880 = vsel %vm3878, %v3879, %v3877
    %vm3881 = vcmp.lt.s32.totalorder %v1241, 0
    %v3882 = vsel %vm3881, 3.1415927, 0.0
    %vm3883 = vcmp.eq.f32.partialorder %v1976, 0.0
    %v3884 = vsel %vm3883, %v3882, %v3880
    %vm3885 = vcmp.ne.f32.partialorder %v1241, %v1241
    %vm3886 = vcmp.ne.f32.partialorder %v1976, %v1976
    %vm3887 = vmor %vm3885, %vm3886
    %v3888 = vsel %vm3887, nan, %v3884
    %vm3889 = vcmp.lt.f32.partialorder %v1241, 0.0
    %v3890 = vsel %vm3889, 2.3561945, 0.7853982
    %vm3891 = vcmp.eq.s32.totalorder %v3838, inf
    %vm3892 = vcmp.eq.s32.totalorder %v3839, inf
    %vm3893 = vmand %vm3891, %vm3892
    %v3894 = vsel %vm3893, %v3890, %v3888
    %v3895 = vand.u32 2147483647, %v3894
    %v3896 = vand.u32 %v1976, 2147483648
    %v3897 = vor.u32 %v3895, %v3896
    %v3898 = vsub.f32 %v2037, %v2997
    %v3899 = vsub.f32 %v2097, %v3057
    %v3900 = vsub.f32 %v2157, %v3117
    %v3901 = vsub.f32 %v2217, %v3177
    %v3902 = vsub.f32 %v2277, %v3237
    %v3903 = vsub.f32 %v2337, %v3297
    %v3904 = vsub.f32 %v2397, %v3357
    %v3905 = vsub.f32 %v2457, %v3417
    %v3906 = vsub.f32 %v2517, %v3477
    %v3907 = vsub.f32 %v2577, %v3537
    %v3908 = vsub.f32 %v2637, %v3597
    %v3909 = vsub.f32 %v2697, %v3657
    %v3910 = vsub.f32 %v2757, %v3717
    %v3911 = vsub.f32 %v2817, %v3777
    %v3912 = vsub.f32 %v2877, %v3837
    %v3913 = vsub.f32 %v2937, %v3897
    %v3914 = vand.u32 2147483647, %v3898
    %v3915 = vand.u32 2147483647, %v3899
    %v3916 = vand.u32 2147483647, %v3900
    %v3917 = vand.u32 2147483647, %v3901
    %v3918 = vand.u32 2147483647, %v3902
    %v3919 = vand.u32 2147483647, %v3903
    %v3920 = vand.u32 2147483647, %v3904
    %v3921 = vand.u32 2147483647, %v3905
    %v3922 = vand.u32 2147483647, %v3906
    %v3923 = vand.u32 2147483647, %v3907
    %v3924 = vand.u32 2147483647, %v3908
    %v3925 = vand.u32 2147483647, %v3909
    %v3926 = vand.u32 2147483647, %v3910
    %v3927 = vand.u32 2147483647, %v3911
    %v3928 = vand.u32 2147483647, %v3912
    %v3929 = vand.u32 2147483647, %v3913
    %vm3930 = vcmask 72704
    %v3931 = vsel %vm3930, %v3914, 0.0
    %v3932 = vsel %vm3930, %v3915, 0.0
    %v3933 = vadd.f32 %v3931, %v3932
    %v3934 = vsel %vm3930, %v3916, 0.0
    %v3935 = vadd.f32 %v3933, %v3934
    %v3936 = vsel %vm3930, %v3917, 0.0
    %v3937 = vadd.f32 %v3935, %v3936
    %v3938 = vsel %vm3930, %v3918, 0.0
    %v3939 = vadd.f32 %v3937, %v3938
    %v3940 = vsel %vm3930, %v3919, 0.0
    %v3941 = vadd.f32 %v3939, %v3940
    %v3942 = vsel %vm3930, %v3920, 0.0
    %v3943 = vadd.f32 %v3941, %v3942
    %v3944 = vsel %vm3930, %v3921, 0.0
    %v3945 = vadd.f32 %v3943, %v3944
    %v3946 = vsel %vm3930, %v3922, 0.0
    %v3947 = vadd.f32 %v3945, %v3946
    %v3948 = vsel %vm3930, %v3923, 0.0
    %v3949 = vadd.f32 %v3947, %v3948
    %v3950 = vsel %vm3930, %v3924, 0.0
    %v3951 = vadd.f32 %v3949, %v3950
    %v3952 = vsel %vm3930, %v3925, 0.0
    %v3953 = vadd.f32 %v3951, %v3952
    %v3954 = vsel %vm3930, %v3926, 0.0
    %v3955 = vadd.f32 %v3953, %v3954
    %v3956 = vsel %vm3930, %v3927, 0.0
    %v3957 = vadd.f32 %v3955, %v3956
    %v3958 = vsel %vm3930, %v3928, 0.0
    %v3959 = vadd.f32 %v3957, %v3958
    %v3960 = vsel %vm3930, %v3929, 0.0
    %v3961 = vadd.f32 %v3959, %v3960
    %3962 = vadd.xlane.f32.xlu0 %v3961
    %v3963 = vpop.xlane.xlu0 %3962
    %v3964 = vrot.slane %v3963, 4
    %v3965 = vadd.f32 %v3963, %v3964
    %v3966 = vrot.slane %v3965, 2
    %v3967 = vadd.f32 %v3965, %v3966
    %v3968 = vrot.slane %v3967, 1
    %v3969 = vadd.f32 %v3967, %v3968
    %s3970 = vtos %v3969
    %v3971 = vlaneseq
    %v3972 = vshrl.u32 %v3971, 7
    %v3973 = vlaneseq
    %v3974 = vand.u32 %v3973, 127
    %vm3975 = vcmp.eq.s32.totalorder %v3972, 0
    %vm3976 = vcmp.eq.s32.totalorder %v3974, 0
    %vm3977 = vmand %vm3975, %vm3976
    %v3978 = vstv %s3970
    %v3979 = vsel %vm3977, %v3978, 0.0
    %3980 = vst [vmem:[#allocation11] sm:$0xff] %v3979
    // Predicated region
    $region42: #{tpu_custom_call.1} parent=1 // pred_check
      _
    $region43: #{tpu_custom_call.1} parent=1 // pred_check_branch
      %3982 = sbr.rel (0) target = $region45
    $region44: #{tpu_custom_call.1} parent=1 // pred_region
      %3984 = vsyncadd [#allocation4], 0
      %s3986 = sshll.u32 [#allocation11], 4
      %s3987 = int_to_ptr.vmem [resolvable:$true] %s3986
      %s3988 = sshll.u32 %s5, 4
      %s3989 = int_to_ptr.hbm [resolvable:$true] %s3988
      %3991 = dma.vmem_to_hbm [thread:$0]  %s3987, 128, %s3989, [#allocation4]
    $region45: #{tpu_custom_call.1} parent=1 // pred_fallthru
      _
    // Predicated region
    $region46: #{tpu_custom_call.1} parent=1 // pred_check
      _
    $region47: #{tpu_custom_call.1} parent=1 // pred_check_branch
      %3993 = sbr.rel (0) target = $region49
    $region48: #{tpu_custom_call.1} parent=1 // pred_region
      %3995 = dma.done [#allocation4], 128
    $region49: #{tpu_custom_call.1} parent=1 // pred_fallthru
      _
    %3996 = vsyncpa [#allocation3], 1
    %3997 = vsyncpa [#allocation6], 1
    %3998 = vsyncpa [#allocation9], 1
    %3999 = vsyncpa [#allocation4], 1

</llo_original>
